<compile_context>
chip_gen: v7x
topology: tpu7x:2x2x1
jax: 0.10.0
libtpu: 0.0.40
codegen_flags: <defaults>
</compile_context>

<pallas_src>
import functools
import math

import jax
import jax.numpy as jnp
from jax import lax
from jax.experimental import pallas as pl
from jax.experimental.pallas import tpu as pltpu

EPS = 1e-5  # PyTorch nn.LayerNorm default


def _layernorm(x, g, b):
    mu = jnp.mean(x, axis=-1, keepdims=True)
    var = jnp.mean((x - mu) ** 2, axis=-1, keepdims=True)
    return (x - mu) * lax.rsqrt(var + EPS) * g + b


def _silu(x):
    return x * jax.nn.sigmoid(x)


# ---------------------------------------------------------------------------
# Fully fused kernel: all transformer blocks + final LN + pool + classifier.
# One grid step = (one batch block, one layer).  The activation lives in a
# VMEM scratch accumulator across the (inner, "arbitrary") layer axis.
# ---------------------------------------------------------------------------
def _fused_transformer_kernel(
        x_ref,
        ln1g, ln1b, wq, bq, wk, bk, wv, bv, wo, bo,
        ln2g, ln2b, w1, b1, w2, b2,
        flng, flnb, cw1, cb1, cw2, cb2,
        o_ref, x_acc,
        *, n_heads, d_key, b_block, seq, d_model):
    l = pl.program_id(1)
    N = b_block * seq
    D = d_model

    # Load embedded tokens into the resident accumulator at layer 0.
    @pl.when(l == 0)
    def _():
        x_acc[...] = x_ref[...].reshape(N, D).astype(jnp.float32)

    x = x_acc[...]                                           # (N, D) f32

    # ---- multi-head self-attention (pre-norm) ----
    h = _layernorm(x, ln1g[0], ln1b[0])                      # f32 elementwise
    h_b = h.astype(jnp.bfloat16)                             # matmul LHS (bf16 MXU)

    scale = 1.0 / math.sqrt(d_key)
    ctx = jnp.zeros((N, D), jnp.float32)
    for hd in range(n_heads):                                # small static unroll
        # Per-head weights indexed on a LEADING axis -> no lane-axis slicing.
        q = (jnp.dot(h_b, wq[0, hd], preferred_element_type=jnp.float32)
             + bq[0, hd]) * scale                            # (N, dk), scale folded
        k = jnp.dot(h_b, wk[0, hd],
                    preferred_element_type=jnp.float32) + bk[0, hd]
        v = jnp.dot(h_b, wv[0, hd],
                    preferred_element_type=jnp.float32) + bv[0, hd]   # (N, D)

        qb = q.reshape(b_block, seq, d_key).astype(jnp.bfloat16)
        kb = k.reshape(b_block, seq, d_key).astype(jnp.bfloat16)
        vb = v.reshape(b_block, seq, D)

        # TODO(synk): at realistic sequence lengths, tile this over KV blocks
        # with an online softmax instead of materializing the (b, T, T) scores.
        s = jnp.einsum('bqd,bkd->bqk', qb, kb,
                       preferred_element_type=jnp.float32)   # (b, T, T) f32
        s = s - jnp.max(s, axis=-1, keepdims=True)
        p = jnp.exp(s)
        p = p * pl.reciprocal(jnp.sum(p, axis=-1, keepdims=True), approx=True)

        o = jnp.einsum('bqk,bkd->bqd', p.astype(jnp.bfloat16),
                       vb.astype(jnp.bfloat16),
                       preferred_element_type=jnp.float32).reshape(N, D)
        # sum_h o_h @ Wo_h  ==  concat(heads) @ Wo   (no lane-axis concat)
        ctx = ctx + jnp.dot(o.astype(jnp.bfloat16), wo[0, hd],
                            preferred_element_type=jnp.float32)
    x = x + ctx + bo[0]

    # ---- MLP (pre-norm) ----
    h2 = _layernorm(x, ln2g[0], ln2b[0])
    m = jnp.dot(h2.astype(jnp.bfloat16), w1[0],
                preferred_element_type=jnp.float32) + b1[0]
    m = _silu(m)                                             # f32 VPU/EUP
    x = x + jnp.dot(m.astype(jnp.bfloat16), w2[0],
                    preferred_element_type=jnp.float32) + b2[0]
    x_acc[...] = x

    # ---- epilogue: final LN + mean pool over tokens + classifier head ----
    @pl.when(l == pl.num_programs(1) - 1)
    def _():
        hf = _layernorm(x, flng[...], flnb[...])
        pooled = jnp.mean(hf.reshape(b_block, seq, D), axis=1)     # (b_block, D)
        z = jnp.dot(pooled, cw1[...], preferred_element_type=jnp.float32) + cb1[...]
        z = _silu(z)
        logits = jnp.dot(z, cw2[...], preferred_element_type=jnp.float32) + cb2[...]
        o_ref[0] = logits.astype(o_ref.dtype)                      # (b_block, CPAD)


# ---------------------------------------------------------------------------
# Parameters (deterministic, synthetic) — per-layer weights stacked over layers,
# per-head weights with the head on a leading axis, matmul weights in bf16.
# ---------------------------------------------------------------------------
def init_params(key, n_embeds, n_classes, d_model, d_key, n_heads,
                mlp_factor, n_layers):
    keys = jax.random.split(key, 10)

    def nrm(k, shape, scale=0.02, dtype=jnp.float32):
        return (scale * jax.random.normal(k, shape)).astype(dtype)

    D, DK, H, L = d_model, d_key, n_heads, n_layers
    F = mlp_factor * d_model
    CPAD = ((n_classes + 127) // 128) * 128      # lane-dense logits slab
    bf16 = jnp.bfloat16

    p = {"emb": nrm(keys[0], (n_embeds, D), 1.0)}
    p["ln1_g"] = jnp.ones((L, 1, D), jnp.float32)
    p["ln1_b"] = jnp.zeros((L, 1, D), jnp.float32)
    p["wq"] = nrm(keys[1], (L, H, D, DK), dtype=bf16)
    p["bq"] = jnp.zeros((L, H, 1, DK), jnp.float32)
    p["wk"] = nrm(keys[2], (L, H, D, DK), dtype=bf16)
    p["bk"] = jnp.zeros((L, H, 1, DK), jnp.float32)
    p["wv"] = nrm(keys[3], (L, H, D, D), dtype=bf16)   # per-head value width = D
    p["bv"] = jnp.zeros((L, H, 1, D), jnp.float32)
    p["wo"] = nrm(keys[4], (L, H, D, D), dtype=bf16)   # Wo split per head
    p["bo"] = jnp.zeros((L, 1, D), jnp.float32)
    p["ln2_g"] = jnp.ones((L, 1, D), jnp.float32)
    p["ln2_b"] = jnp.zeros((L, 1, D), jnp.float32)
    p["w1"] = nrm(keys[5], (L, D, F), dtype=bf16)
    p["b1"] = jnp.zeros((L, 1, F), jnp.float32)
    p["w2"] = nrm(keys[6], (L, F, D), dtype=bf16)
    p["b2"] = jnp.zeros((L, 1, D), jnp.float32)
    # final layer norm + classifier head (logit columns zero-padded to CPAD)
    p["fln_g"] = jnp.ones((1, D), jnp.float32)
    p["fln_b"] = jnp.zeros((1, D), jnp.float32)
    p["cw1"] = nrm(keys[7], (D, D))
    p["cb1"] = jnp.zeros((1, D), jnp.float32)
    cw2 = nrm(keys[8], (D, n_classes))
    p["cw2"] = jnp.zeros((D, CPAD), jnp.float32).at[:, :n_classes].set(cw2)
    p["cb2"] = jnp.zeros((1, CPAD), jnp.float32)
    return p


# ---------------------------------------------------------------------------
# Wrapper: embedding gather in plain JAX, then one fused pallas_call.
# ---------------------------------------------------------------------------
def transformer_classifier(token_ids, params, n_classes, *, b_block=None):
    B, T = token_ids.shape
    D = params["emb"].shape[1]
    L, H, _, DK = params["wq"].shape
    F = params["w1"].shape[-1]
    CPAD = params["cw2"].shape[1]

    # --- batch-block sizing -------------------------------------------------
    # N = b_block*T is the MXU M-dim of every projection matmul; aim for
    # N >= 256 so the MXU is filled and per-grid-step overhead / per-block
    # weight re-streaming are amortized.  With a small batch (as here) this
    # collapses to b_block = B, i.e. nb = 1 (each weight crosses HBM once).
    if b_block is None:
        want = max(1, pl.cdiv(256, T))
        b_block = B
        for cand in range(want, B):
            if B % cand == 0:
                b_block = cand
                break
    assert B % b_block == 0, "batch must divide evenly into batch blocks"
    nb = B // b_block

    # TODO(synk): the nn.Embedding row-gather stays in plain JAX (jnp.take);
    # a manual-DMA gather kernel is not worthwhile at these sizes.
    x = jnp.take(params["emb"], token_ids, axis=0)          # (B, T, D) f32

    layer_ws = [params[k] for k in
                ("ln1_g", "ln1_b", "wq", "bq", "wk", "bk", "wv", "bv",
                 "wo", "bo", "ln2_g", "ln2_b", "w1", "b1", "w2", "b2")]
    head_ws = [params[k] for k in
               ("fln_g", "fln_b", "cw1", "cb1", "cw2", "cb2")]

    in_specs = [pl.BlockSpec((b_block, T, D), lambda b, l: (b, 0, 0))]
    for w in layer_ws:   # stacked per-layer weights: stream layer block l
        in_specs.append(pl.BlockSpec(
            (1,) + w.shape[1:],
            lambda b, l, nd=w.ndim: (l,) + (0,) * (nd - 1)))
    for w in head_ws:    # final LN / classifier: constant block (fetched once)
        in_specs.append(pl.BlockSpec(
            w.shape, lambda b, l, nd=w.ndim: (0,) * nd))

    kernel = functools.partial(
        _fused_transformer_kernel,
        n_heads=H, d_key=DK, b_block=b_block, seq=T, d_model=D)

    # Unlock most of physical VMEM for the double-buffered weight stream
    # (~108 MiB on v5e/v6e's 128 MiB, ~54 MiB on v7x's 64 MiB).
    try:
        vmem_limit = int(pltpu.get_tpu_info().vmem_capacity_bytes * 0.85)
    except Exception:  # fall back to a safe value on any backend quirk
        vmem_limit = 64 * 1024 * 1024

    # Advisory cost estimate so XLA schedules the embedding gather around the
    # long fused call instead of serializing on it.
    n_rows = B * T
    per_row = (H * (4 * D * DK)                 # Q, K projections
               + 2 * H * (2 * D * D)            # V projection + output projection
               + H * (2 * T * DK + 2 * T * D)   # scores + PV
               + 4 * D * F)                     # MLP
    flops = L * n_rows * per_row + B * (2 * D * D + 2 * D * CPAD)
    transc = L * (B * H * T * T + n_rows * F) + B * D
    w_bytes = sum(int(w.size) * w.dtype.itemsize for w in layer_ws) * nb
    w_bytes += sum(int(w.size) * w.dtype.itemsize for w in head_ws)
    cost = pl.CostEstimate(
        flops=int(flops), transcendentals=int(transc),
        bytes_accessed=int(w_bytes + x.size * 4 + B * CPAD * 4))

    out = pl.pallas_call(
        kernel,
        out_shape=jax.ShapeDtypeStruct((nb, b_block, CPAD), jnp.float32),
        grid=(nb, L),
        in_specs=in_specs,
        out_specs=pl.BlockSpec((1, b_block, CPAD), lambda b, l: (b, 0, 0)),
        scratch_shapes=[pltpu.VMEM((b_block * T, D), jnp.float32)],
        compiler_params=pltpu.CompilerParams(
            dimension_semantics=("parallel", "arbitrary"),
            vmem_limit_bytes=vmem_limit),
        cost_estimate=cost,
    )(x, *layer_ws, *head_ws)

    return out.reshape(B, CPAD)[:, :n_classes]


if __name__ == "__main__":
    # Small, module-consistent shapes.
    n_embeds, n_classes = 50, 5
    d_model, d_key, n_heads, mlp_factor, n_layers = 32, 8, 2, 4, 2
    B, T = 2, 8

    key = jax.random.PRNGKey(0)
    k_param, k_ids = jax.random.split(key)
    params = init_params(k_param, n_embeds, n_classes, d_model, d_key,
                         n_heads, mlp_factor, n_layers)
    token_ids = jax.random.randint(k_ids, (B, T), 0, n_embeds, dtype=jnp.int32)

    logits = transformer_classifier(token_ids, params, n_classes)
    jax.block_until_ready(logits)
    assert logits.shape == (B, n_classes)
    print("KERNEL_OK")
</pallas_src>

<mosaic_0001>
module attributes {stable_mosaic.version = 11 : i64} {
  func.func @_fused_transformer_kernel(%arg0: i32, %arg1: i32, %arg2: memref<2x8x32xf32, #tpu.memory_space<vmem>>, %arg3: memref<1x1x32xf32, #tpu.memory_space<vmem>>, %arg4: memref<1x1x32xf32, #tpu.memory_space<vmem>>, %arg5: memref<1x2x32x8xbf16, #tpu.memory_space<vmem>>, %arg6: memref<1x2x1x8xf32, #tpu.memory_space<vmem>>, %arg7: memref<1x2x32x8xbf16, #tpu.memory_space<vmem>>, %arg8: memref<1x2x1x8xf32, #tpu.memory_space<vmem>>, %arg9: memref<1x2x32x32xbf16, #tpu.memory_space<vmem>>, %arg10: memref<1x2x1x32xf32, #tpu.memory_space<vmem>>, %arg11: memref<1x2x32x32xbf16, #tpu.memory_space<vmem>>, %arg12: memref<1x1x32xf32, #tpu.memory_space<vmem>>, %arg13: memref<1x1x32xf32, #tpu.memory_space<vmem>>, %arg14: memref<1x1x32xf32, #tpu.memory_space<vmem>>, %arg15: memref<1x32x128xbf16, #tpu.memory_space<vmem>>, %arg16: memref<1x1x128xf32, #tpu.memory_space<vmem>>, %arg17: memref<1x128x32xbf16, #tpu.memory_space<vmem>>, %arg18: memref<1x1x32xf32, #tpu.memory_space<vmem>>, %arg19: memref<1x32xf32, #tpu.memory_space<vmem>>, %arg20: memref<1x32xf32, #tpu.memory_space<vmem>>, %arg21: memref<32x32xf32, #tpu.memory_space<vmem>>, %arg22: memref<1x32xf32, #tpu.memory_space<vmem>>, %arg23: memref<32x128xf32, #tpu.memory_space<vmem>>, %arg24: memref<1x128xf32, #tpu.memory_space<vmem>>, %arg25: memref<1x2x128xf32, #tpu.memory_space<vmem>>, %arg26: memref<16x32xf32, #tpu.memory_space<vmem>>) attributes {dimension_semantics = [#tpu.dimension_semantics<parallel>, #tpu.dimension_semantics<arbitrary>], iteration_bounds = array<i64: 1, 2>, scalar_prefetch = 0 : i64, scratch_operands = 1 : i64, tpu.core_type = #tpu.core_type<tc>, window_params = [{transform_indices = @transform_0, window_bounds = array<i64: 2, 8, 32>}, {transform_indices = @transform_1, window_bounds = array<i64: 1, 1, 32>}, {transform_indices = @transform_2, window_bounds = array<i64: 1, 1, 32>}, {transform_indices = @transform_3, window_bounds = array<i64: 1, 2, 32, 8>}, {transform_indices = @transform_4, window_bounds = array<i64: 1, 2, 1, 8>}, {transform_indices = @transform_5, window_bounds = array<i64: 1, 2, 32, 8>}, {transform_indices = @transform_6, window_bounds = array<i64: 1, 2, 1, 8>}, {transform_indices = @transform_7, window_bounds = array<i64: 1, 2, 32, 32>}, {transform_indices = @transform_8, window_bounds = array<i64: 1, 2, 1, 32>}, {transform_indices = @transform_9, window_bounds = array<i64: 1, 2, 32, 32>}, {transform_indices = @transform_10, window_bounds = array<i64: 1, 1, 32>}, {transform_indices = @transform_11, window_bounds = array<i64: 1, 1, 32>}, {transform_indices = @transform_12, window_bounds = array<i64: 1, 1, 32>}, {transform_indices = @transform_13, window_bounds = array<i64: 1, 32, 128>}, {transform_indices = @transform_14, window_bounds = array<i64: 1, 1, 128>}, {transform_indices = @transform_15, window_bounds = array<i64: 1, 128, 32>}, {transform_indices = @transform_16, window_bounds = array<i64: 1, 1, 32>}, {pipeline_mode = #tpu.pipeline_mode<synchronous>, transform_indices = @transform_17, window_bounds = array<i64: 1, 32>}, {pipeline_mode = #tpu.pipeline_mode<synchronous>, transform_indices = @transform_18, window_bounds = array<i64: 1, 32>}, {pipeline_mode = #tpu.pipeline_mode<synchronous>, transform_indices = @transform_19, window_bounds = array<i64: 32, 32>}, {pipeline_mode = #tpu.pipeline_mode<synchronous>, transform_indices = @transform_20, window_bounds = array<i64: 1, 32>}, {pipeline_mode = #tpu.pipeline_mode<synchronous>, transform_indices = @transform_21, window_bounds = array<i64: 32, 128>}, {pipeline_mode = #tpu.pipeline_mode<synchronous>, transform_indices = @transform_22, window_bounds = array<i64: 1, 128>}, {transform_indices = @transform_23, window_bounds = array<i64: 1, 2, 128>}]} {
    %c0_i32 = arith.constant 0 : i32
    %0 = arith.cmpi eq, %arg1, %c0_i32 : i32
    %1 = arith.extui %0 : i1 to i32
    %c0_i32_0 = arith.constant 0 : i32
    %2 = arith.cmpi ne, %1, %c0_i32_0 : i32
    scf.if %2 {
      %c0_118 = arith.constant 0 : index
      %c0_119 = arith.constant 0 : index
      %c0_120 = arith.constant 0 : index
      %186 = vector.load %arg2[%c0_118, %c0_119, %c0_120] : memref<2x8x32xf32, #tpu.memory_space<vmem>>, vector<2x8x32xf32>
      %187 = vector.shape_cast %186 : vector<2x8x32xf32> to vector<16x32xf32>
      %c0_121 = arith.constant 0 : index
      %c0_122 = arith.constant 0 : index
      %188 = vector.load %arg26[%c0_121, %c0_122] : memref<16x32xf32, #tpu.memory_space<vmem>>, vector<16x32xf32>
      tpu.vector_store %arg26[%c0_121, %c0_122], %187 {strides = array<i32>} : memref<16x32xf32, #tpu.memory_space<vmem>>, vector<16x32xf32>,
    } else {
    }
    %c0 = arith.constant 0 : index
    %c0_1 = arith.constant 0 : index
    %3 = vector.load %arg26[%c0, %c0_1] : memref<16x32xf32, #tpu.memory_space<vmem>>, vector<16x32xf32>
    %c0_2 = arith.constant 0 : index
    %c0_3 = arith.constant 0 : index
    %c0_4 = arith.constant 0 : index
    %4 = vector.load %arg3[%c0_2, %c0_3, %c0_4] : memref<1x1x32xf32, #tpu.memory_space<vmem>>, vector<1x1x32xf32>
    %5 = vector.shape_cast %4 : vector<1x1x32xf32> to vector<1x32xf32>
    %c0_5 = arith.constant 0 : index
    %c0_6 = arith.constant 0 : index
    %c0_7 = arith.constant 0 : index
    %6 = vector.load %arg4[%c0_5, %c0_6, %c0_7] : memref<1x1x32xf32, #tpu.memory_space<vmem>>, vector<1x1x32xf32>
    %7 = vector.shape_cast %6 : vector<1x1x32xf32> to vector<1x32xf32>
    %cst = arith.constant dense<0.000000e+00> : vector<16xf32>
    %8 = vector.multi_reduction <add>, %3, %cst [1] : vector<16x32xf32> to vector<16xf32>
    %9 = vector.shape_cast %8 : vector<16xf32> to vector<16x1xf32>
    %cst_8 = arith.constant 3.200000e+01 : f32
    %10 = vector.broadcast %cst_8 : f32 to vector<16x1xf32>
    %11 = arith.divf %9, %10 : vector<16x1xf32>
    %12 = vector.broadcast %11 : vector<16x1xf32> to vector<16x32xf32>
    %13 = arith.subf %3, %12 : vector<16x32xf32>
    %14 = arith.mulf %13, %13 : vector<16x32xf32>
    %cst_9 = arith.constant dense<0.000000e+00> : vector<16xf32>
    %15 = vector.multi_reduction <add>, %14, %cst_9 [1] : vector<16x32xf32> to vector<16xf32>
    %16 = vector.shape_cast %15 : vector<16xf32> to vector<16x1xf32>
    %cst_10 = arith.constant 3.200000e+01 : f32
    %17 = vector.broadcast %cst_10 : f32 to vector<16x1xf32>
    %18 = arith.divf %16, %17 : vector<16x1xf32>
    %19 = vector.broadcast %11 : vector<16x1xf32> to vector<16x32xf32>
    %20 = arith.subf %3, %19 : vector<16x32xf32>
    %cst_11 = arith.constant 9.99999974E-6 : f32
    %21 = vector.broadcast %cst_11 : f32 to vector<16x1xf32>
    %22 = arith.addf %18, %21 : vector<16x1xf32>
    %23 = math.rsqrt %22 : vector<16x1xf32>
    %24 = vector.broadcast %23 : vector<16x1xf32> to vector<16x32xf32>
    %25 = arith.mulf %20, %24 : vector<16x32xf32>
    %26 = vector.broadcast %5 : vector<1x32xf32> to vector<16x32xf32>
    %27 = arith.mulf %25, %26 : vector<16x32xf32>
    %28 = vector.broadcast %7 : vector<1x32xf32> to vector<16x32xf32>
    %29 = arith.addf %27, %28 : vector<16x32xf32>
    %30 = arith.truncf %29 : vector<16x32xf32> to vector<16x32xbf16>
    %cst_12 = arith.constant 0.000000e+00 : f32
    %31 = vector.broadcast %cst_12 : f32 to vector<16x32xf32>
    %c0_13 = arith.constant 0 : index
    %c0_14 = arith.constant 0 : index
    %c0_15 = arith.constant 0 : index
    %c0_16 = arith.constant 0 : index
    %32 = vector.load %arg5[%c0_13, %c0_14, %c0_15, %c0_16] : memref<1x2x32x8xbf16, #tpu.memory_space<vmem>>, vector<1x1x32x8xbf16>
    %33 = vector.shape_cast %32 : vector<1x1x32x8xbf16> to vector<32x8xbf16>
    %cst_17 = arith.constant dense<0.000000e+00> : vector<16x8xf32>
    %34 = tpu.matmul %30, %33, %cst_17 {dimension_numbers = #tpu.dot_dimension_numbers<[1], [0], [0], [1], [0, 0, 1, 1], [], []>} : vector<16x32xbf16>, vector<32x8xbf16>, vector<16x8xf32> -> vector<16x8xf32>
    %c0_18 = arith.constant 0 : index
    %c0_19 = arith.constant 0 : index
    %c0_20 = arith.constant 0 : index
    %c0_21 = arith.constant 0 : index
    %35 = vector.load %arg6[%c0_18, %c0_19, %c0_20, %c0_21] : memref<1x2x1x8xf32, #tpu.memory_space<vmem>>, vector<1x1x1x8xf32>
    %36 = vector.shape_cast %35 : vector<1x1x1x8xf32> to vector<1x8xf32>
    %37 = vector.broadcast %36 : vector<1x8xf32> to vector<16x8xf32>
    %38 = arith.addf %34, %37 : vector<16x8xf32>
    %cst_22 = arith.constant 0.353553385 : f32
    %39 = vector.broadcast %cst_22 : f32 to vector<16x8xf32>
    %40 = arith.mulf %38, %39 : vector<16x8xf32>
    %c0_23 = arith.constant 0 : index
    %c0_24 = arith.constant 0 : index
    %c0_25 = arith.constant 0 : index
    %c0_26 = arith.constant 0 : index
    %41 = vector.load %arg7[%c0_23, %c0_24, %c0_25, %c0_26] : memref<1x2x32x8xbf16, #tpu.memory_space<vmem>>, vector<1x1x32x8xbf16>
    %42 = vector.shape_cast %41 : vector<1x1x32x8xbf16> to vector<32x8xbf16>
    %cst_27 = arith.constant dense<0.000000e+00> : vector<16x8xf32>
    %43 = tpu.matmul %30, %42, %cst_27 {dimension_numbers = #tpu.dot_dimension_numbers<[1], [0], [0], [1], [0, 0, 1, 1], [], []>} : vector<16x32xbf16>, vector<32x8xbf16>, vector<16x8xf32> -> vector<16x8xf32>
    %c0_28 = arith.constant 0 : index
    %c0_29 = arith.constant 0 : index
    %c0_30 = arith.constant 0 : index
    %c0_31 = arith.constant 0 : index
    %44 = vector.load %arg8[%c0_28, %c0_29, %c0_30, %c0_31] : memref<1x2x1x8xf32, #tpu.memory_space<vmem>>, vector<1x1x1x8xf32>
    %45 = vector.shape_cast %44 : vector<1x1x1x8xf32> to vector<1x8xf32>
    %46 = vector.broadcast %45 : vector<1x8xf32> to vector<16x8xf32>
    %47 = arith.addf %43, %46 : vector<16x8xf32>
    %c0_32 = arith.constant 0 : index
    %c0_33 = arith.constant 0 : index
    %c0_34 = arith.constant 0 : index
    %c0_35 = arith.constant 0 : index
    %48 = vector.load %arg9[%c0_32, %c0_33, %c0_34, %c0_35] : memref<1x2x32x32xbf16, #tpu.memory_space<vmem>>, vector<1x1x32x32xbf16>
    %49 = vector.shape_cast %48 : vector<1x1x32x32xbf16> to vector<32x32xbf16>
    %cst_36 = arith.constant dense<0.000000e+00> : vector<16x32xf32>
    %50 = tpu.matmul %30, %49, %cst_36 {dimension_numbers = #tpu.dot_dimension_numbers<[1], [0], [0], [1], [0, 0, 1, 1], [], []>} : vector<16x32xbf16>, vector<32x32xbf16>, vector<16x32xf32> -> vector<16x32xf32>
    %c0_37 = arith.constant 0 : index
    %c0_38 = arith.constant 0 : index
    %c0_39 = arith.constant 0 : index
    %c0_40 = arith.constant 0 : index
    %51 = vector.load %arg10[%c0_37, %c0_38, %c0_39, %c0_40] : memref<1x2x1x32xf32, #tpu.memory_space<vmem>>, vector<1x1x1x32xf32>
    %52 = vector.shape_cast %51 : vector<1x1x1x32xf32> to vector<1x32xf32>
    %53 = vector.broadcast %52 : vector<1x32xf32> to vector<16x32xf32>
    %54 = arith.addf %50, %53 : vector<16x32xf32>
    %55 = vector.shape_cast %40 : vector<16x8xf32> to vector<2x8x8xf32>
    %56 = arith.truncf %55 : vector<2x8x8xf32> to vector<2x8x8xbf16>
    %57 = vector.shape_cast %47 : vector<16x8xf32> to vector<2x8x8xf32>
    %58 = arith.truncf %57 : vector<2x8x8xf32> to vector<2x8x8xbf16>
    %59 = vector.shape_cast %54 : vector<16x32xf32> to vector<2x8x32xf32>
    "tpu.trace_start"() <{level = 10 : i32, message = "bqd,bkd->bqk"}> : () -> ()
    %cst_41 = arith.constant dense<0.000000e+00> : vector<2x8x8xf32>
    %60 = tpu.matmul %56, %58, %cst_41 {dimension_numbers = #tpu.dot_dimension_numbers<[2], [2], [1], [1], [0, 0, 0, 1, 1, 1], [0], [0]>} : vector<2x8x8xbf16>, vector<2x8x8xbf16>, vector<2x8x8xf32> -> vector<2x8x8xf32>
    "tpu.trace_stop"() : () -> ()
    %cst_42 = arith.constant dense<0xFF800000> : vector<2x8xf32>
    %61 = vector.multi_reduction <maximumf>, %60, %cst_42 [2] : vector<2x8x8xf32> to vector<2x8xf32>
    %62 = vector.shape_cast %61 : vector<2x8xf32> to vector<2x8x1xf32>
    %63 = vector.broadcast %62 : vector<2x8x1xf32> to vector<2x8x8xf32>
    %64 = arith.subf %60, %63 : vector<2x8x8xf32>
    %65 = math.exp %64 : vector<2x8x8xf32>
    %cst_43 = arith.constant dense<0.000000e+00> : vector<2x8xf32>
    %66 = vector.multi_reduction <add>, %65, %cst_43 [2] : vector<2x8x8xf32> to vector<2x8xf32>
    %67 = vector.shape_cast %66 : vector<2x8xf32> to vector<2x8x1xf32>
    %68 = tpu.reciprocal %67 {approx = true} : vector<2x8x1xf32> -> vector<2x8x1xf32>
    %69 = vector.broadcast %68 : vector<2x8x1xf32> to vector<2x8x8xf32>
    %70 = arith.mulf %65, %69 : vector<2x8x8xf32>
    %71 = arith.truncf %70 : vector<2x8x8xf32> to vector<2x8x8xbf16>
    %72 = arith.truncf %59 : vector<2x8x32xf32> to vector<2x8x32xbf16>
    "tpu.trace_start"() <{level = 10 : i32, message = "bqk,bkd->bqd"}> : () -> ()
    %cst_44 = arith.constant dense<0.000000e+00> : vector<2x8x32xf32>
    %73 = tpu.matmul %71, %72, %cst_44 {dimension_numbers = #tpu.dot_dimension_numbers<[2], [1], [1], [2], [0, 0, 0, 1, 1, 2], [0], [0]>} : vector<2x8x8xbf16>, vector<2x8x32xbf16>, vector<2x8x32xf32> -> vector<2x8x32xf32>
    "tpu.trace_stop"() : () -> ()
    %74 = vector.shape_cast %73 : vector<2x8x32xf32> to vector<16x32xf32>
    %75 = arith.truncf %74 : vector<16x32xf32> to vector<16x32xbf16>
    %c0_45 = arith.constant 0 : index
    %c0_46 = arith.constant 0 : index
    %c0_47 = arith.constant 0 : index
    %c0_48 = arith.constant 0 : index
    %76 = vector.load %arg11[%c0_45, %c0_46, %c0_47, %c0_48] : memref<1x2x32x32xbf16, #tpu.memory_space<vmem>>, vector<1x1x32x32xbf16>
    %77 = vector.shape_cast %76 : vector<1x1x32x32xbf16> to vector<32x32xbf16>
    %cst_49 = arith.constant dense<0.000000e+00> : vector<16x32xf32>
    %78 = tpu.matmul %75, %77, %cst_49 {dimension_numbers = #tpu.dot_dimension_numbers<[1], [0], [0], [1], [0, 0, 1, 1], [], []>} : vector<16x32xbf16>, vector<32x32xbf16>, vector<16x32xf32> -> vector<16x32xf32>
    %79 = arith.addf %31, %78 : vector<16x32xf32>
    %c0_50 = arith.constant 0 : index
    %c1 = arith.constant 1 : index
    %c0_51 = arith.constant 0 : index
    %c0_52 = arith.constant 0 : index
    %80 = vector.load %arg5[%c0_50, %c1, %c0_51, %c0_52] : memref<1x2x32x8xbf16, #tpu.memory_space<vmem>>, vector<1x1x32x8xbf16>
    %81 = vector.shape_cast %80 : vector<1x1x32x8xbf16> to vector<32x8xbf16>
    %cst_53 = arith.constant dense<0.000000e+00> : vector<16x8xf32>
    %82 = tpu.matmul %30, %81, %cst_53 {dimension_numbers = #tpu.dot_dimension_numbers<[1], [0], [0], [1], [0, 0, 1, 1], [], []>} : vector<16x32xbf16>, vector<32x8xbf16>, vector<16x8xf32> -> vector<16x8xf32>
    %c0_54 = arith.constant 0 : index
    %c1_55 = arith.constant 1 : index
    %c0_56 = arith.constant 0 : index
    %c0_57 = arith.constant 0 : index
    %83 = vector.load %arg6[%c0_54, %c1_55, %c0_56, %c0_57] : memref<1x2x1x8xf32, #tpu.memory_space<vmem>>, vector<1x1x1x8xf32>
    %84 = vector.shape_cast %83 : vector<1x1x1x8xf32> to vector<1x8xf32>
    %85 = vector.broadcast %84 : vector<1x8xf32> to vector<16x8xf32>
    %86 = arith.addf %82, %85 : vector<16x8xf32>
    %cst_58 = arith.constant 0.353553385 : f32
    %87 = vector.broadcast %cst_58 : f32 to vector<16x8xf32>
    %88 = arith.mulf %86, %87 : vector<16x8xf32>
    %c0_59 = arith.constant 0 : index
    %c1_60 = arith.constant 1 : index
    %c0_61 = arith.constant 0 : index
    %c0_62 = arith.constant 0 : index
    %89 = vector.load %arg7[%c0_59, %c1_60, %c0_61, %c0_62] : memref<1x2x32x8xbf16, #tpu.memory_space<vmem>>, vector<1x1x32x8xbf16>
    %90 = vector.shape_cast %89 : vector<1x1x32x8xbf16> to vector<32x8xbf16>
    %cst_63 = arith.constant dense<0.000000e+00> : vector<16x8xf32>
    %91 = tpu.matmul %30, %90, %cst_63 {dimension_numbers = #tpu.dot_dimension_numbers<[1], [0], [0], [1], [0, 0, 1, 1], [], []>} : vector<16x32xbf16>, vector<32x8xbf16>, vector<16x8xf32> -> vector<16x8xf32>
    %c0_64 = arith.constant 0 : index
    %c1_65 = arith.constant 1 : index
    %c0_66 = arith.constant 0 : index
    %c0_67 = arith.constant 0 : index
    %92 = vector.load %arg8[%c0_64, %c1_65, %c0_66, %c0_67] : memref<1x2x1x8xf32, #tpu.memory_space<vmem>>, vector<1x1x1x8xf32>
    %93 = vector.shape_cast %92 : vector<1x1x1x8xf32> to vector<1x8xf32>
    %94 = vector.broadcast %93 : vector<1x8xf32> to vector<16x8xf32>
    %95 = arith.addf %91, %94 : vector<16x8xf32>
    %c0_68 = arith.constant 0 : index
    %c1_69 = arith.constant 1 : index
    %c0_70 = arith.constant 0 : index
    %c0_71 = arith.constant 0 : index
    %96 = vector.load %arg9[%c0_68, %c1_69, %c0_70, %c0_71] : memref<1x2x32x32xbf16, #tpu.memory_space<vmem>>, vector<1x1x32x32xbf16>
    %97 = vector.shape_cast %96 : vector<1x1x32x32xbf16> to vector<32x32xbf16>
    %cst_72 = arith.constant dense<0.000000e+00> : vector<16x32xf32>
    %98 = tpu.matmul %30, %97, %cst_72 {dimension_numbers = #tpu.dot_dimension_numbers<[1], [0], [0], [1], [0, 0, 1, 1], [], []>} : vector<16x32xbf16>, vector<32x32xbf16>, vector<16x32xf32> -> vector<16x32xf32>
    %c0_73 = arith.constant 0 : index
    %c1_74 = arith.constant 1 : index
    %c0_75 = arith.constant 0 : index
    %c0_76 = arith.constant 0 : index
    %99 = vector.load %arg10[%c0_73, %c1_74, %c0_75, %c0_76] : memref<1x2x1x32xf32, #tpu.memory_space<vmem>>, vector<1x1x1x32xf32>
    %100 = vector.shape_cast %99 : vector<1x1x1x32xf32> to vector<1x32xf32>
    %101 = vector.broadcast %100 : vector<1x32xf32> to vector<16x32xf32>
    %102 = arith.addf %98, %101 : vector<16x32xf32>
    %103 = vector.shape_cast %88 : vector<16x8xf32> to vector<2x8x8xf32>
    %104 = arith.truncf %103 : vector<2x8x8xf32> to vector<2x8x8xbf16>
    %105 = vector.shape_cast %95 : vector<16x8xf32> to vector<2x8x8xf32>
    %106 = arith.truncf %105 : vector<2x8x8xf32> to vector<2x8x8xbf16>
    %107 = vector.shape_cast %102 : vector<16x32xf32> to vector<2x8x32xf32>
    "tpu.trace_start"() <{level = 10 : i32, message = "bqd,bkd->bqk"}> : () -> ()
    %cst_77 = arith.constant dense<0.000000e+00> : vector<2x8x8xf32>
    %108 = tpu.matmul %104, %106, %cst_77 {dimension_numbers = #tpu.dot_dimension_numbers<[2], [2], [1], [1], [0, 0, 0, 1, 1, 1], [0], [0]>} : vector<2x8x8xbf16>, vector<2x8x8xbf16>, vector<2x8x8xf32> -> vector<2x8x8xf32>
    "tpu.trace_stop"() : () -> ()
    %cst_78 = arith.constant dense<0xFF800000> : vector<2x8xf32>
    %109 = vector.multi_reduction <maximumf>, %108, %cst_78 [2] : vector<2x8x8xf32> to vector<2x8xf32>
    %110 = vector.shape_cast %109 : vector<2x8xf32> to vector<2x8x1xf32>
    %111 = vector.broadcast %110 : vector<2x8x1xf32> to vector<2x8x8xf32>
    %112 = arith.subf %108, %111 : vector<2x8x8xf32>
    %113 = math.exp %112 : vector<2x8x8xf32>
    %cst_79 = arith.constant dense<0.000000e+00> : vector<2x8xf32>
    %114 = vector.multi_reduction <add>, %113, %cst_79 [2] : vector<2x8x8xf32> to vector<2x8xf32>
    %115 = vector.shape_cast %114 : vector<2x8xf32> to vector<2x8x1xf32>
    %116 = tpu.reciprocal %115 {approx = true} : vector<2x8x1xf32> -> vector<2x8x1xf32>
    %117 = vector.broadcast %116 : vector<2x8x1xf32> to vector<2x8x8xf32>
    %118 = arith.mulf %113, %117 : vector<2x8x8xf32>
    %119 = arith.truncf %118 : vector<2x8x8xf32> to vector<2x8x8xbf16>
    %120 = arith.truncf %107 : vector<2x8x32xf32> to vector<2x8x32xbf16>
    "tpu.trace_start"() <{level = 10 : i32, message = "bqk,bkd->bqd"}> : () -> ()
    %cst_80 = arith.constant dense<0.000000e+00> : vector<2x8x32xf32>
    %121 = tpu.matmul %119, %120, %cst_80 {dimension_numbers = #tpu.dot_dimension_numbers<[2], [1], [1], [2], [0, 0, 0, 1, 1, 2], [0], [0]>} : vector<2x8x8xbf16>, vector<2x8x32xbf16>, vector<2x8x32xf32> -> vector<2x8x32xf32>
    "tpu.trace_stop"() : () -> ()
    %122 = vector.shape_cast %121 : vector<2x8x32xf32> to vector<16x32xf32>
    %123 = arith.truncf %122 : vector<16x32xf32> to vector<16x32xbf16>
    %c0_81 = arith.constant 0 : index
    %c1_82 = arith.constant 1 : index
    %c0_83 = arith.constant 0 : index
    %c0_84 = arith.constant 0 : index
    %124 = vector.load %arg11[%c0_81, %c1_82, %c0_83, %c0_84] : memref<1x2x32x32xbf16, #tpu.memory_space<vmem>>, vector<1x1x32x32xbf16>
    %125 = vector.shape_cast %124 : vector<1x1x32x32xbf16> to vector<32x32xbf16>
    %cst_85 = arith.constant dense<0.000000e+00> : vector<16x32xf32>
    %126 = tpu.matmul %123, %125, %cst_85 {dimension_numbers = #tpu.dot_dimension_numbers<[1], [0], [0], [1], [0, 0, 1, 1], [], []>} : vector<16x32xbf16>, vector<32x32xbf16>, vector<16x32xf32> -> vector<16x32xf32>
    %127 = arith.addf %79, %126 : vector<16x32xf32>
    %128 = arith.addf %3, %127 : vector<16x32xf32>
    %c0_86 = arith.constant 0 : index
    %c0_87 = arith.constant 0 : index
    %c0_88 = arith.constant 0 : index
    %129 = vector.load %arg12[%c0_86, %c0_87, %c0_88] : memref<1x1x32xf32, #tpu.memory_space<vmem>>, vector<1x1x32xf32>
    %130 = vector.shape_cast %129 : vector<1x1x32xf32> to vector<1x32xf32>
    %131 = vector.broadcast %130 : vector<1x32xf32> to vector<16x32xf32>
    %132 = arith.addf %128, %131 : vector<16x32xf32>
    %c0_89 = arith.constant 0 : index
    %c0_90 = arith.constant 0 : index
    %c0_91 = arith.constant 0 : index
    %133 = vector.load %arg13[%c0_89, %c0_90, %c0_91] : memref<1x1x32xf32, #tpu.memory_space<vmem>>, vector<1x1x32xf32>
    %134 = vector.shape_cast %133 : vector<1x1x32xf32> to vector<1x32xf32>
    %c0_92 = arith.constant 0 : index
    %c0_93 = arith.constant 0 : index
    %c0_94 = arith.constant 0 : index
    %135 = vector.load %arg14[%c0_92, %c0_93, %c0_94] : memref<1x1x32xf32, #tpu.memory_space<vmem>>, vector<1x1x32xf32>
    %136 = vector.shape_cast %135 : vector<1x1x32xf32> to vector<1x32xf32>
    %cst_95 = arith.constant dense<0.000000e+00> : vector<16xf32>
    %137 = vector.multi_reduction <add>, %132, %cst_95 [1] : vector<16x32xf32> to vector<16xf32>
    %138 = vector.shape_cast %137 : vector<16xf32> to vector<16x1xf32>
    %cst_96 = arith.constant 3.200000e+01 : f32
    %139 = vector.broadcast %cst_96 : f32 to vector<16x1xf32>
    %140 = arith.divf %138, %139 : vector<16x1xf32>
    %141 = vector.broadcast %140 : vector<16x1xf32> to vector<16x32xf32>
    %142 = arith.subf %132, %141 : vector<16x32xf32>
    %143 = arith.mulf %142, %142 : vector<16x32xf32>
    %cst_97 = arith.constant dense<0.000000e+00> : vector<16xf32>
    %144 = vector.multi_reduction <add>, %143, %cst_97 [1] : vector<16x32xf32> to vector<16xf32>
    %145 = vector.shape_cast %144 : vector<16xf32> to vector<16x1xf32>
    %cst_98 = arith.constant 3.200000e+01 : f32
    %146 = vector.broadcast %cst_98 : f32 to vector<16x1xf32>
    %147 = arith.divf %145, %146 : vector<16x1xf32>
    %148 = vector.broadcast %140 : vector<16x1xf32> to vector<16x32xf32>
    %149 = arith.subf %132, %148 : vector<16x32xf32>
    %cst_99 = arith.constant 9.99999974E-6 : f32
    %150 = vector.broadcast %cst_99 : f32 to vector<16x1xf32>
    %151 = arith.addf %147, %150 : vector<16x1xf32>
    %152 = math.rsqrt %151 : vector<16x1xf32>
    %153 = vector.broadcast %152 : vector<16x1xf32> to vector<16x32xf32>
    %154 = arith.mulf %149, %153 : vector<16x32xf32>
    %155 = vector.broadcast %134 : vector<1x32xf32> to vector<16x32xf32>
    %156 = arith.mulf %154, %155 : vector<16x32xf32>
    %157 = vector.broadcast %136 : vector<1x32xf32> to vector<16x32xf32>
    %158 = arith.addf %156, %157 : vector<16x32xf32>
    %159 = arith.truncf %158 : vector<16x32xf32> to vector<16x32xbf16>
    %c0_100 = arith.constant 0 : index
    %c0_101 = arith.constant 0 : index
    %c0_102 = arith.constant 0 : index
    %160 = vector.load %arg15[%c0_100, %c0_101, %c0_102] : memref<1x32x128xbf16, #tpu.memory_space<vmem>>, vector<1x32x128xbf16>
    %161 = vector.shape_cast %160 : vector<1x32x128xbf16> to vector<32x128xbf16>
    %cst_103 = arith.constant dense<0.000000e+00> : vector<16x128xf32>
    %162 = tpu.matmul %159, %161, %cst_103 {dimension_numbers = #tpu.dot_dimension_numbers<[1], [0], [0], [1], [0, 0, 1, 1], [], []>} : vector<16x32xbf16>, vector<32x128xbf16>, vector<16x128xf32> -> vector<16x128xf32>
    %c0_104 = arith.constant 0 : index
    %c0_105 = arith.constant 0 : index
    %c0_106 = arith.constant 0 : index
    %163 = vector.load %arg16[%c0_104, %c0_105, %c0_106] : memref<1x1x128xf32, #tpu.memory_space<vmem>>, vector<1x1x128xf32>
    %164 = vector.shape_cast %163 : vector<1x1x128xf32> to vector<1x128xf32>
    %165 = vector.broadcast %164 : vector<1x128xf32> to vector<16x128xf32>
    %166 = arith.addf %162, %165 : vector<16x128xf32>
    %167 = arith.negf %166 : vector<16x128xf32>
    %168 = math.exp %167 : vector<16x128xf32>
    %cst_107 = arith.constant 1.000000e+00 : f32
    %169 = vector.broadcast %cst_107 : f32 to vector<16x128xf32>
    %170 = arith.addf %169, %168 : vector<16x128xf32>
    %171 = arith.divf %169, %170 : vector<16x128xf32>
    %172 = arith.mulf %166, %171 : vector<16x128xf32>
    %173 = arith.truncf %172 : vector<16x128xf32> to vector<16x128xbf16>
    %c0_108 = arith.constant 0 : index
    %c0_109 = arith.constant 0 : index
    %c0_110 = arith.constant 0 : index
    %174 = vector.load %arg17[%c0_108, %c0_109, %c0_110] : memref<1x128x32xbf16, #tpu.memory_space<vmem>>, vector<1x128x32xbf16>
    %175 = vector.shape_cast %174 : vector<1x128x32xbf16> to vector<128x32xbf16>
    %cst_111 = arith.constant dense<0.000000e+00> : vector<16x32xf32>
    %176 = tpu.matmul %173, %175, %cst_111 {dimension_numbers = #tpu.dot_dimension_numbers<[1], [0], [0], [1], [0, 0, 1, 1], [], []>} : vector<16x128xbf16>, vector<128x32xbf16>, vector<16x32xf32> -> vector<16x32xf32>
    %177 = arith.addf %132, %176 : vector<16x32xf32>
    %c0_112 = arith.constant 0 : index
    %c0_113 = arith.constant 0 : index
    %c0_114 = arith.constant 0 : index
    %178 = vector.load %arg18[%c0_112, %c0_113, %c0_114] : memref<1x1x32xf32, #tpu.memory_space<vmem>>, vector<1x1x32xf32>
    %179 = vector.shape_cast %178 : vector<1x1x32xf32> to vector<1x32xf32>
    %180 = vector.broadcast %179 : vector<1x32xf32> to vector<16x32xf32>
    %181 = arith.addf %177, %180 : vector<16x32xf32>
    %c0_115 = arith.constant 0 : index
    %c0_116 = arith.constant 0 : index
    %182 = vector.load %arg26[%c0_115, %c0_116] : memref<16x32xf32, #tpu.memory_space<vmem>>, vector<16x32xf32>
    tpu.vector_store %arg26[%c0_115, %c0_116], %181 {strides = array<i32>} : memref<16x32xf32, #tpu.memory_space<vmem>>, vector<16x32xf32>,
    %c1_i32 = arith.constant 1 : i32
    %183 = arith.cmpi eq, %arg1, %c1_i32 : i32
    %184 = arith.extui %183 : i1 to i32
    %c0_i32_117 = arith.constant 0 : i32
    %185 = arith.cmpi ne, %184, %c0_i32_117 : i32
    scf.if %185 {
      %c0_118 = arith.constant 0 : index
      %c0_119 = arith.constant 0 : index
      %186 = vector.load %arg19[%c0_118, %c0_119] : memref<1x32xf32, #tpu.memory_space<vmem>>, vector<1x32xf32>
      %c0_120 = arith.constant 0 : index
      %c0_121 = arith.constant 0 : index
      %187 = vector.load %arg20[%c0_120, %c0_121] : memref<1x32xf32, #tpu.memory_space<vmem>>, vector<1x32xf32>
      %cst_122 = arith.constant dense<0.000000e+00> : vector<16xf32>
      %188 = vector.multi_reduction <add>, %181, %cst_122 [1] : vector<16x32xf32> to vector<16xf32>
      %189 = vector.shape_cast %188 : vector<16xf32> to vector<16x1xf32>
      %cst_123 = arith.constant 3.200000e+01 : f32
      %190 = vector.broadcast %cst_123 : f32 to vector<16x1xf32>
      %191 = arith.divf %189, %190 : vector<16x1xf32>
      %192 = vector.broadcast %191 : vector<16x1xf32> to vector<16x32xf32>
      %193 = arith.subf %181, %192 : vector<16x32xf32>
      %194 = arith.mulf %193, %193 : vector<16x32xf32>
      %cst_124 = arith.constant dense<0.000000e+00> : vector<16xf32>
      %195 = vector.multi_reduction <add>, %194, %cst_124 [1] : vector<16x32xf32> to vector<16xf32>
      %196 = vector.shape_cast %195 : vector<16xf32> to vector<16x1xf32>
      %cst_125 = arith.constant 3.200000e+01 : f32
      %197 = vector.broadcast %cst_125 : f32 to vector<16x1xf32>
      %198 = arith.divf %196, %197 : vector<16x1xf32>
      %199 = vector.broadcast %191 : vector<16x1xf32> to vector<16x32xf32>
      %200 = arith.subf %181, %199 : vector<16x32xf32>
      %cst_126 = arith.constant 9.99999974E-6 : f32
      %201 = vector.broadcast %cst_126 : f32 to vector<16x1xf32>
      %202 = arith.addf %198, %201 : vector<16x1xf32>
      %203 = math.rsqrt %202 : vector<16x1xf32>
      %204 = vector.broadcast %203 : vector<16x1xf32> to vector<16x32xf32>
      %205 = arith.mulf %200, %204 : vector<16x32xf32>
      %206 = vector.broadcast %186 : vector<1x32xf32> to vector<16x32xf32>
      %207 = arith.mulf %205, %206 : vector<16x32xf32>
      %208 = vector.broadcast %187 : vector<1x32xf32> to vector<16x32xf32>
      %209 = arith.addf %207, %208 : vector<16x32xf32>
      %210 = vector.shape_cast %209 : vector<16x32xf32> to vector<2x8x32xf32>
      %cst_127 = arith.constant dense<0.000000e+00> : vector<2x32xf32>
      %211 = vector.multi_reduction <add>, %210, %cst_127 [1] : vector<2x8x32xf32> to vector<2x32xf32>
      %cst_128 = arith.constant 8.000000e+00 : f32
      %212 = vector.broadcast %cst_128 : f32 to vector<2x32xf32>
      %213 = arith.divf %211, %212 : vector<2x32xf32>
      %c0_129 = arith.constant 0 : index
      %c0_130 = arith.constant 0 : index
      %214 = vector.load %arg21[%c0_129, %c0_130] : memref<32x32xf32, #tpu.memory_space<vmem>>, vector<32x32xf32>
      %cst_131 = arith.constant dense<0.000000e+00> : vector<2x32xf32>
      %215 = tpu.matmul %213, %214, %cst_131 {dimension_numbers = #tpu.dot_dimension_numbers<[1], [0], [0], [1], [0, 0, 1, 1], [], []>} : vector<2x32xf32>, vector<32x32xf32>, vector<2x32xf32> -> vector<2x32xf32>
      %c0_132 = arith.constant 0 : index
      %c0_133 = arith.constant 0 : index
      %216 = vector.load %arg22[%c0_132, %c0_133] : memref<1x32xf32, #tpu.memory_space<vmem>>, vector<1x32xf32>
      %217 = vector.broadcast %216 : vector<1x32xf32> to vector<2x32xf32>
      %218 = arith.addf %215, %217 : vector<2x32xf32>
      %219 = arith.negf %218 : vector<2x32xf32>
      %220 = math.exp %219 : vector<2x32xf32>
      %cst_134 = arith.constant 1.000000e+00 : f32
      %221 = vector.broadcast %cst_134 : f32 to vector<2x32xf32>
      %222 = arith.addf %221, %220 : vector<2x32xf32>
      %223 = arith.divf %221, %222 : vector<2x32xf32>
      %224 = arith.mulf %218, %223 : vector<2x32xf32>
      %c0_135 = arith.constant 0 : index
      %c0_136 = arith.constant 0 : index
      %225 = vector.load %arg23[%c0_135, %c0_136] : memref<32x128xf32, #tpu.memory_space<vmem>>, vector<32x128xf32>
      %cst_137 = arith.constant dense<0.000000e+00> : vector<2x128xf32>
      %226 = tpu.matmul %224, %225, %cst_137 {dimension_numbers = #tpu.dot_dimension_numbers<[1], [0], [0], [1], [0, 0, 1, 1], [], []>} : vector<2x32xf32>, vector<32x128xf32>, vector<2x128xf32> -> vector<2x128xf32>
      %c0_138 = arith.constant 0 : index
      %c0_139 = arith.constant 0 : index
      %227 = vector.load %arg24[%c0_138, %c0_139] : memref<1x128xf32, #tpu.memory_space<vmem>>, vector<1x128xf32>
      %228 = vector.broadcast %227 : vector<1x128xf32> to vector<2x128xf32>
      %229 = arith.addf %226, %228 : vector<2x128xf32>
      %c0_140 = arith.constant 0 : index
      %c0_141 = arith.constant 0 : index
      %c0_142 = arith.constant 0 : index
      %230 = vector.load %arg25[%c0_140, %c0_141, %c0_142] : memref<1x2x128xf32, #tpu.memory_space<vmem>>, vector<1x2x128xf32>
      %231 = vector.shape_cast %230 : vector<1x2x128xf32> to vector<2x128xf32>
      %232 = vector.shape_cast %229 : vector<2x128xf32> to vector<1x2x128xf32>
      tpu.vector_store %arg25[%c0_140, %c0_141, %c0_142], %232 {strides = array<i32>} : memref<1x2x128xf32, #tpu.memory_space<vmem>>, vector<1x2x128xf32>,
    } else {
    }
    return
  }
  func.func @transform_0(%arg0: i32, %arg1: i32) -> (i32, i32, i32) {
    %c0_i32 = arith.constant 0 : i32
    %c0_i32_0 = arith.constant 0 : i32
    %c0_i32_1 = arith.constant 0 : i32
    return %arg0, %c0_i32, %c0_i32_0 : i32, i32, i32
  }
  func.func @transform_1(%arg0: i32, %arg1: i32) -> (i32, i32, i32) {
    %c0_i32 = arith.constant 0 : i32
    %c0_i32_0 = arith.constant 0 : i32
    %c0_i32_1 = arith.constant 0 : i32
    return %arg1, %c0_i32, %c0_i32_0 : i32, i32, i32
  }
  func.func @transform_2(%arg0: i32, %arg1: i32) -> (i32, i32, i32) {
    %c0_i32 = arith.constant 0 : i32
    %c0_i32_0 = arith.constant 0 : i32
    %c0_i32_1 = arith.constant 0 : i32
    return %arg1, %c0_i32, %c0_i32_0 : i32, i32, i32
  }
  func.func @transform_3(%arg0: i32, %arg1: i32) -> (i32, i32, i32, i32) {
    %c0_i32 = arith.constant 0 : i32
    %c0_i32_0 = arith.constant 0 : i32
    %c0_i32_1 = arith.constant 0 : i32
    %c0_i32_2 = arith.constant 0 : i32
    return %arg1, %c0_i32, %c0_i32_0, %c0_i32_1 : i32, i32, i32, i32
  }
  func.func @transform_4(%arg0: i32, %arg1: i32) -> (i32, i32, i32, i32) {
    %c0_i32 = arith.constant 0 : i32
    %c0_i32_0 = arith.constant 0 : i32
    %c0_i32_1 = arith.constant 0 : i32
    %c0_i32_2 = arith.constant 0 : i32
    return %arg1, %c0_i32, %c0_i32_0, %c0_i32_1 : i32, i32, i32, i32
  }
  func.func @transform_5(%arg0: i32, %arg1: i32) -> (i32, i32, i32, i32) {
    %c0_i32 = arith.constant 0 : i32
    %c0_i32_0 = arith.constant 0 : i32
    %c0_i32_1 = arith.constant 0 : i32
    %c0_i32_2 = arith.constant 0 : i32
    return %arg1, %c0_i32, %c0_i32_0, %c0_i32_1 : i32, i32, i32, i32
  }
  func.func @transform_6(%arg0: i32, %arg1: i32) -> (i32, i32, i32, i32) {
    %c0_i32 = arith.constant 0 : i32
    %c0_i32_0 = arith.constant 0 : i32
    %c0_i32_1 = arith.constant 0 : i32
    %c0_i32_2 = arith.constant 0 : i32
    return %arg1, %c0_i32, %c0_i32_0, %c0_i32_1 : i32, i32, i32, i32
  }
  func.func @transform_7(%arg0: i32, %arg1: i32) -> (i32, i32, i32, i32) {
    %c0_i32 = arith.constant 0 : i32
    %c0_i32_0 = arith.constant 0 : i32
    %c0_i32_1 = arith.constant 0 : i32
    %c0_i32_2 = arith.constant 0 : i32
    return %arg1, %c0_i32, %c0_i32_0, %c0_i32_1 : i32, i32, i32, i32
  }
  func.func @transform_8(%arg0: i32, %arg1: i32) -> (i32, i32, i32, i32) {
    %c0_i32 = arith.constant 0 : i32
    %c0_i32_0 = arith.constant 0 : i32
    %c0_i32_1 = arith.constant 0 : i32
    %c0_i32_2 = arith.constant 0 : i32
    return %arg1, %c0_i32, %c0_i32_0, %c0_i32_1 : i32, i32, i32, i32
  }
  func.func @transform_9(%arg0: i32, %arg1: i32) -> (i32, i32, i32, i32) {
    %c0_i32 = arith.constant 0 : i32
    %c0_i32_0 = arith.constant 0 : i32
    %c0_i32_1 = arith.constant 0 : i32
    %c0_i32_2 = arith.constant 0 : i32
    return %arg1, %c0_i32, %c0_i32_0, %c0_i32_1 : i32, i32, i32, i32
  }
  func.func @transform_10(%arg0: i32, %arg1: i32) -> (i32, i32, i32) {
    %c0_i32 = arith.constant 0 : i32
    %c0_i32_0 = arith.constant 0 : i32
    %c0_i32_1 = arith.constant 0 : i32
    return %arg1, %c0_i32, %c0_i32_0 : i32, i32, i32
  }
  func.func @transform_11(%arg0: i32, %arg1: i32) -> (i32, i32, i32) {
    %c0_i32 = arith.constant 0 : i32
    %c0_i32_0 = arith.constant 0 : i32
    %c0_i32_1 = arith.constant 0 : i32
    return %arg1, %c0_i32, %c0_i32_0 : i32, i32, i32
  }
  func.func @transform_12(%arg0: i32, %arg1: i32) -> (i32, i32, i32) {
    %c0_i32 = arith.constant 0 : i32
    %c0_i32_0 = arith.constant 0 : i32
    %c0_i32_1 = arith.constant 0 : i32
    return %arg1, %c0_i32, %c0_i32_0 : i32, i32, i32
  }
  func.func @transform_13(%arg0: i32, %arg1: i32) -> (i32, i32, i32) {
    %c0_i32 = arith.constant 0 : i32
    %c0_i32_0 = arith.constant 0 : i32
    %c0_i32_1 = arith.constant 0 : i32
    return %arg1, %c0_i32, %c0_i32_0 : i32, i32, i32
  }
  func.func @transform_14(%arg0: i32, %arg1: i32) -> (i32, i32, i32) {
    %c0_i32 = arith.constant 0 : i32
    %c0_i32_0 = arith.constant 0 : i32
    %c0_i32_1 = arith.constant 0 : i32
    return %arg1, %c0_i32, %c0_i32_0 : i32, i32, i32
  }
  func.func @transform_15(%arg0: i32, %arg1: i32) -> (i32, i32, i32) {
    %c0_i32 = arith.constant 0 : i32
    %c0_i32_0 = arith.constant 0 : i32
    %c0_i32_1 = arith.constant 0 : i32
    return %arg1, %c0_i32, %c0_i32_0 : i32, i32, i32
  }
  func.func @transform_16(%arg0: i32, %arg1: i32) -> (i32, i32, i32) {
    %c0_i32 = arith.constant 0 : i32
    %c0_i32_0 = arith.constant 0 : i32
    %c0_i32_1 = arith.constant 0 : i32
    return %arg1, %c0_i32, %c0_i32_0 : i32, i32, i32
  }
  func.func @transform_17(%arg0: i32, %arg1: i32) -> (i32, i32) {
    %c0_i32 = arith.constant 0 : i32
    %c0_i32_0 = arith.constant 0 : i32
    %c0_i32_1 = arith.constant 0 : i32
    return %c0_i32, %c0_i32_0 : i32, i32
  }
  func.func @transform_18(%arg0: i32, %arg1: i32) -> (i32, i32) {
    %c0_i32 = arith.constant 0 : i32
    %c0_i32_0 = arith.constant 0 : i32
    %c0_i32_1 = arith.constant 0 : i32
    return %c0_i32, %c0_i32_0 : i32, i32
  }
  func.func @transform_19(%arg0: i32, %arg1: i32) -> (i32, i32) {
    %c0_i32 = arith.constant 0 : i32
    %c0_i32_0 = arith.constant 0 : i32
    %c0_i32_1 = arith.constant 0 : i32
    return %c0_i32, %c0_i32_0 : i32, i32
  }
  func.func @transform_20(%arg0: i32, %arg1: i32) -> (i32, i32) {
    %c0_i32 = arith.constant 0 : i32
    %c0_i32_0 = arith.constant 0 : i32
    %c0_i32_1 = arith.constant 0 : i32
    return %c0_i32, %c0_i32_0 : i32, i32
  }
  func.func @transform_21(%arg0: i32, %arg1: i32) -> (i32, i32) {
    %c0_i32 = arith.constant 0 : i32
    %c0_i32_0 = arith.constant 0 : i32
    %c0_i32_1 = arith.constant 0 : i32
    return %c0_i32, %c0_i32_0 : i32, i32
  }
  func.func @transform_22(%arg0: i32, %arg1: i32) -> (i32, i32) {
    %c0_i32 = arith.constant 0 : i32
    %c0_i32_0 = arith.constant 0 : i32
    %c0_i32_1 = arith.constant 0 : i32
    return %c0_i32, %c0_i32_0 : i32, i32
  }
  func.func @transform_23(%arg0: i32, %arg1: i32) -> (i32, i32, i32) {
    %c0_i32 = arith.constant 0 : i32
    %c0_i32_0 = arith.constant 0 : i32
    %c0_i32_1 = arith.constant 0 : i32
    return %arg0, %c0_i32, %c0_i32_0 : i32, i32, i32
  }
}

</mosaic_0001>

<llo_original>
// kernel: tpu_custom_call.1
$region0: #{tpu_custom_call.1}
  #allocation0 [shape = 'u32[]', space=smem, size = 0x4, offset = 0x4, fixed_abs, tag = 'smem constant byte address 0x4 - core index']
  #allocation1 [shape = 'u32[144,128]{1,0:T(1,128)}', space=vmem, size = 0x12000, scoped, tag = 'internal scratch']
  #allocation2 [shape = 'f32[16,32]{1,0:T(8,128)}', space=vmem, size = 0x2000, scoped, tag = 'scratch operand']
  %s0 = inlined_call_operand.hbm [shape: f32[2,8,32], index: 0, kind: input, shape index: {}]
  %s1 = inlined_call_operand.hbm [shape: f32[2,1,32], index: 1, kind: input, shape index: {}]
  %s2 = inlined_call_operand.hbm [shape: f32[2,1,32], index: 2, kind: input, shape index: {}]
  %s3 = inlined_call_operand.hbm [shape: bf16[2,2,32,8], index: 3, kind: input, shape index: {}]
  %s4 = inlined_call_operand.hbm [shape: f32[2,2,1,8], index: 4, kind: input, shape index: {}]
  %s5 = inlined_call_operand.hbm [shape: bf16[2,2,32,8], index: 5, kind: input, shape index: {}]
  %s6 = inlined_call_operand.hbm [shape: f32[2,2,1,8], index: 6, kind: input, shape index: {}]
  %s7 = inlined_call_operand.hbm [shape: bf16[2,2,32,32], index: 7, kind: input, shape index: {}]
  %s8 = inlined_call_operand.hbm [shape: f32[2,2,1,32], index: 8, kind: input, shape index: {}]
  %s9 = inlined_call_operand.hbm [shape: bf16[2,2,32,32], index: 9, kind: input, shape index: {}]
  %s10 = inlined_call_operand.hbm [shape: f32[2,1,32], index: 10, kind: input, shape index: {}]
  %s11 = inlined_call_operand.hbm [shape: f32[2,1,32], index: 11, kind: input, shape index: {}]
  %s12 = inlined_call_operand.hbm [shape: f32[2,1,32], index: 12, kind: input, shape index: {}]
  %s13 = inlined_call_operand.hbm [shape: bf16[2,32,128], index: 13, kind: input, shape index: {}]
  %s14 = inlined_call_operand.hbm [shape: f32[2,1,128], index: 14, kind: input, shape index: {}]
  %s15 = inlined_call_operand.hbm [shape: bf16[2,128,32], index: 15, kind: input, shape index: {}]
  %s16 = inlined_call_operand.hbm [shape: f32[2,1,32], index: 16, kind: input, shape index: {}]
  %s17 = inlined_call_operand.hbm [shape: f32[1,32], index: 17, kind: input, shape index: {}]
  %s18 = inlined_call_operand.hbm [shape: f32[1,32], index: 18, kind: input, shape index: {}]
  %s19 = inlined_call_operand.hbm [shape: f32[32,32], index: 19, kind: input, shape index: {}]
  %s20 = inlined_call_operand.hbm [shape: f32[1,32], index: 20, kind: input, shape index: {}]
  %s21 = inlined_call_operand.hbm [shape: f32[32,128], index: 21, kind: input, shape index: {}]
  %s22 = inlined_call_operand.hbm [shape: f32[1,128], index: 22, kind: input, shape index: {}]
  %s23 = inlined_call_operand.hbm [shape: f32[1,2,128], index: 23, kind: output, shape index: {}]
  %s24 = sld [smem:[#allocation0]]
  $region225: #{tpu_custom_call.1} parent=0
    _
  %s26 = ssub.s32 1, %s24
  %s27 = scalar_select 0, %s26, %s24
  $region1: #{tpu_custom_call.1} parent=0
    #allocation3 [shape = 'u8[8192]{0}', space=vmem, size = 0x2000, scoped, tag = 'input window, operand 0, single buffered']
    #allocation4 [shape = 's32[2]{0}', space=sflag, size = 0x8, scoped, tag = 'scoped memory for tpu_custom_call.1']
    #allocation5 [shape = 's32[2]{0}', space=sflag, size = 0x8, scoped, tag = 'scoped memory for tpu_custom_call.1']
    #allocation6 [shape = 'u8[1024]{0}', space=vmem, size = 0x400, scoped, tag = 'input window, operand 1']
    #allocation7 [shape = 's32[2]{0}', space=sflag, size = 0x8, scoped, tag = 'scoped memory for tpu_custom_call.1']
    #allocation8 [shape = 'u8[1024]{0}', space=vmem, size = 0x400, scoped, tag = 'input window, operand 2']
    #allocation9 [shape = 'u8[32768]{0}', space=vmem, size = 0x8000, scoped, tag = 'input window, operand 3']
    #allocation10 [shape = 's32[2]{0}', space=sflag, size = 0x8, scoped, tag = 'scoped memory for tpu_custom_call.1']
    #allocation11 [shape = 'u8[2048]{0}', space=vmem, size = 0x800, scoped, tag = 'input window, operand 4']
    #allocation12 [shape = 'u8[32768]{0}', space=vmem, size = 0x8000, scoped, tag = 'input window, operand 5']
    #allocation13 [shape = 's32[2]{0}', space=sflag, size = 0x8, scoped, tag = 'scoped memory for tpu_custom_call.1']
    #allocation14 [shape = 'u8[2048]{0}', space=vmem, size = 0x800, scoped, tag = 'input window, operand 6']
    #allocation15 [shape = 'u8[32768]{0}', space=vmem, size = 0x8000, scoped, tag = 'input window, operand 7']
    #allocation16 [shape = 's32[2]{0}', space=sflag, size = 0x8, scoped, tag = 'scoped memory for tpu_custom_call.1']
    #allocation17 [shape = 'u8[2048]{0}', space=vmem, size = 0x800, scoped, tag = 'input window, operand 8']
    #allocation18 [shape = 'u8[32768]{0}', space=vmem, size = 0x8000, scoped, tag = 'input window, operand 9']
    #allocation19 [shape = 's32[2]{0}', space=sflag, size = 0x8, scoped, tag = 'scoped memory for tpu_custom_call.1']
    #allocation20 [shape = 'u8[1024]{0}', space=vmem, size = 0x400, scoped, tag = 'input window, operand 10']
    #allocation21 [shape = 'u8[1024]{0}', space=vmem, size = 0x400, scoped, tag = 'input window, operand 11']
    #allocation22 [shape = 's32[2]{0}', space=sflag, size = 0x8, scoped, tag = 'scoped memory for tpu_custom_call.1']
    #allocation23 [shape = 'u8[1024]{0}', space=vmem, size = 0x400, scoped, tag = 'input window, operand 12']
    #allocation24 [shape = 'u8[16384]{0}', space=vmem, size = 0x4000, scoped, tag = 'input window, operand 13']
    #allocation25 [shape = 's32[2]{0}', space=sflag, size = 0x8, scoped, tag = 'scoped memory for tpu_custom_call.1']
    #allocation26 [shape = 'u8[1024]{0}', space=vmem, size = 0x400, scoped, tag = 'input window, operand 14']
    #allocation27 [shape = 'u8[65536]{0}', space=vmem, size = 0x10000, scoped, tag = 'input window, operand 15']
    #allocation28 [shape = 's32[2]{0}', space=sflag, size = 0x8, scoped, tag = 'scoped memory for tpu_custom_call.1']
    #allocation29 [shape = 'u8[1024]{0}', space=vmem, size = 0x400, scoped, tag = 'input window, operand 16']
    #allocation30 [shape = 'u8[512]{0}', space=vmem, size = 0x400, scoped, tag = 'input window, operand 17, single buffered']
    #allocation31 [shape = 's32[1]{0}', space=sflag, size = 0x4, scoped, tag = 'scoped memory for tpu_custom_call.1']
    #allocation32 [shape = 'u8[512]{0}', space=vmem, size = 0x400, scoped, tag = 'input window, operand 18, single buffered']
    #allocation33 [shape = 'u8[16384]{0}', space=vmem, size = 0x4000, scoped, tag = 'input window, operand 19, single buffered']
    #allocation34 [shape = 's32[1]{0}', space=sflag, size = 0x4, scoped, tag = 'scoped memory for tpu_custom_call.1']
    #allocation35 [shape = 'u8[512]{0}', space=vmem, size = 0x400, scoped, tag = 'input window, operand 20, single buffered']
    #allocation36 [shape = 'u8[16384]{0}', space=vmem, size = 0x4000, scoped, tag = 'input window, operand 21, single buffered']
    #allocation37 [shape = 's32[1]{0}', space=sflag, size = 0x4, scoped, tag = 'scoped memory for tpu_custom_call.1']
    #allocation38 [shape = 'u8[512]{0}', space=vmem, size = 0x400, scoped, tag = 'input window, operand 22, single buffered']
    #allocation39 [shape = 'u8[1024]{0}', space=vmem, size = 0x400, scoped, tag = 'output window, operand 0, single buffered']
    %28 = vsyncpa [#allocation4], 0
    %29 = vsyncpa [#allocation7], 0
    %s30 = scalar_lea.sflag [#allocation7], 1
    %31 = vsyncpa %s30, 0
    %32 = vsyncpa [#allocation10], 0
    %s33 = scalar_lea.sflag [#allocation10], 1
    %34 = vsyncpa %s33, 0
    %35 = vsyncpa [#allocation13], 0
    %s36 = scalar_lea.sflag [#allocation13], 1
    %37 = vsyncpa %s36, 0
    %38 = vsyncpa [#allocation16], 0
    %s39 = scalar_lea.sflag [#allocation16], 1
    %40 = vsyncpa %s39, 0
    %41 = vsyncpa [#allocation19], 0
    %s42 = scalar_lea.sflag [#allocation19], 1
    %43 = vsyncpa %s42, 0
    %44 = vsyncpa [#allocation22], 0
    %s45 = scalar_lea.sflag [#allocation22], 1
    %46 = vsyncpa %s45, 0
    %47 = vsyncpa [#allocation25], 0
    %s48 = scalar_lea.sflag [#allocation25], 1
    %49 = vsyncpa %s48, 0
    %50 = vsyncpa [#allocation28], 0
    %s51 = scalar_lea.sflag [#allocation28], 1
    %52 = vsyncpa %s51, 0
    %53 = vsyncpa [#allocation31], 0
    %54 = vsyncpa [#allocation34], 0
    %55 = vsyncpa [#allocation37], 0
    %56 = vsyncpa [#allocation5], 0
    loop: start=0, step=1, limit=4
    $region2: #{tpu_custom_call.1} parent=1 // loop_pre_header
      _
    $region3: #{tpu_custom_call.1} parent=1 // loop_header
      %s58 = sphi 0, %s62
      %p59 = scmp.ge.s32.totalorder %s58, 4
      %s65 = sphi 0, %s77
      %s66 = sphi 0, %s73
      %s67 = sphi 0, %s65
      %s68 = sphi 0, %s66
      %s69 = sphi 0, %s67
      %s70 = sphi 0, %s68
      %s80 = sphi 0, %s82
      %s83 = sphi 0, %s80
      %s84 = sphi 0, %s83
      %s100 = sphi 0, %s84
      %s106 = sphi 0, %s108
      %s109 = sphi 0, %s106
      %s110 = sphi 0, %s109
      %s126 = sphi 0, %s110
      %s132 = sphi 0, %s134
      %s135 = sphi 0, %s132
      %s136 = sphi 0, %s135
      %s152 = sphi 0, %s136
      %s158 = sphi 0, %s160
      %s161 = sphi 0, %s158
      %s162 = sphi 0, %s161
      %s178 = sphi 0, %s162
      %s184 = sphi 0, %s186
      %s187 = sphi 0, %s184
      %s188 = sphi 0, %s187
      %s204 = sphi 0, %s188
      %s210 = sphi 0, %s212
      %s213 = sphi 0, %s210
      %s214 = sphi 0, %s213
      %s230 = sphi 0, %s214
      %s236 = sphi 0, %s238
      %s239 = sphi 0, %s236
      %s240 = sphi 0, %s239
      %s256 = sphi 0, %s240
      %s262 = sphi 0, %s264
      %s265 = sphi 0, %s262
      %s266 = sphi 0, %s265
      %s282 = sphi 0, %s266
      %s288 = sphi 0, %s290
      %s291 = sphi 0, %s288
      %s292 = sphi 0, %s291
      %s308 = sphi 0, %s292
      %s314 = sphi 0, %s316
      %s317 = sphi 0, %s314
      %s318 = sphi 0, %s317
      %s334 = sphi 0, %s318
      %s340 = sphi 0, %s342
      %s343 = sphi 0, %s340
      %s344 = sphi 0, %s343
      %s360 = sphi 0, %s344
      %s366 = sphi 0, %s368
      %s369 = sphi 0, %s366
      %s370 = sphi 0, %s369
      %s386 = sphi 0, %s370
      %s392 = sphi 0, %s394
      %s395 = sphi 0, %s392
      %s396 = sphi 0, %s395
      %s412 = sphi 0, %s396
      %s418 = sphi 0, %s420
      %s421 = sphi 0, %s418
      %s422 = sphi 0, %s421
      %s438 = sphi 0, %s422
      %s444 = sphi 0, %s446
      %s447 = sphi 0, %s444
      %s448 = sphi 0, %s447
      %s464 = sphi 0, %s448
      %s470 = sphi 0, %s472
      %s473 = sphi 0, %s470
      %s474 = sphi 0, %s473
      %s490 = sphi 0, %s474
      %s496 = sphi 0, %s498
      %s499 = sphi 0, %s496
      %s500 = sphi 0, %s499
      %s516 = sphi 0, %s500
      %s520 = sphi 0, %s520
      %s522 = sphi 0, %s520
      %s523 = sphi 0, %s522
      %s537 = sphi 0, %s523
      %s541 = sphi 0, %s541
      %s543 = sphi 0, %s541
      %s544 = sphi 0, %s543
      %s558 = sphi 0, %s544
      %s562 = sphi 0, %s562
      %s564 = sphi 0, %s562
      %s565 = sphi 0, %s564
      %s579 = sphi 0, %s565
      %s583 = sphi 0, %s583
      %s585 = sphi 0, %s583
      %s586 = sphi 0, %s585
      %s600 = sphi 0, %s586
      %s604 = sphi 0, %s604
      %s606 = sphi 0, %s604
      %s607 = sphi 0, %s606
      %s621 = sphi 0, %s607
      %s625 = sphi 0, %s625
      %s627 = sphi 0, %s625
      %s628 = sphi 0, %s627
      %s642 = sphi 0, %s628
      %s648 = sphi 0, %s650
      %s651 = sphi 0, %s648
      %s652 = sphi 0, %s651
      %s668 = sphi 0, %s652
    $region4: #{tpu_custom_call.1} parent=1 // loop_header_branch
      %61 = sbr.rel (%p59) target = $region8
    $region5: #{tpu_custom_call.1} parent=1 // loop_body
      %s63 = ssub.s32 %s58, 1
      %s64 = ssub.s32 %s58, 2
      %s71 = sadd.s32 1, %s66
      %p72 = scmp.ge.s32.totalorder %s71, 2
      %s73 = scalar_select %p72, 0, %s71
      %s74 = sadd.s32 1, %s65
      %s75 = scalar_select %p72, %s74, %s65
      %p76 = scmp.ge.s32.totalorder %s75, 1
      %s77 = scalar_select %p76, 0, %s75
      %s78 = ssub.s32 %s65, %s77
      %p79 = scmp.eq.s32.totalorder %s78, 0
      %s81 = sadd.s32 %s80, 1
      %s82 = scalar_select %p79, %s80, %s81
      %p85 = pneg %p79
      %p86 = scmp.eq.s32.totalorder %s58, 1
      %p87 = por %p85, %p86
      %p88 = scmp.ne.s32.totalorder %s80, %s83
      %p89 = scmp.eq.s32.totalorder %s58, 0
      %p90 = por %p88, %p89
      %p91 = scmp.ne.s32.totalorder %s80, %s83
      %p92 = scmp.eq.s32.totalorder %s63, 1
      %p93 = por %p91, %p92
      %p94 = scmp.ne.s32.totalorder %s83, %s84
      %p95 = scmp.eq.s32.totalorder %s63, 0
      %p96 = por %p94, %p95
      %p97 = scmp.ne.s32.totalorder %s83, %s84
      %p98 = scmp.eq.s32.totalorder %s64, 1
      %p99 = por %p97, %p98
      %p101 = scmp.ne.s32.totalorder %s84, %s100
      %p102 = scmp.eq.s32.totalorder %s64, 0
      %p103 = por %p101, %p102
      %s104 = ssub.s32 %s66, %s73
      %p105 = scmp.eq.s32.totalorder %s104, 0
      %s107 = sadd.s32 %s106, 1
      %s108 = scalar_select %p105, %s106, %s107
      %p111 = pneg %p105
      %p112 = scmp.eq.s32.totalorder %s58, 1
      %p113 = por %p111, %p112
      %p114 = scmp.ne.s32.totalorder %s106, %s109
      %p115 = scmp.eq.s32.totalorder %s58, 0
      %p116 = por %p114, %p115
      %p117 = scmp.ne.s32.totalorder %s106, %s109
      %p118 = scmp.eq.s32.totalorder %s63, 1
      %p119 = por %p117, %p118
      %p120 = scmp.ne.s32.totalorder %s109, %s110
      %p121 = scmp.eq.s32.totalorder %s63, 0
      %p122 = por %p120, %p121
      %p123 = scmp.ne.s32.totalorder %s109, %s110
      %p124 = scmp.eq.s32.totalorder %s64, 1
      %p125 = por %p123, %p124
      %p127 = scmp.ne.s32.totalorder %s110, %s126
      %p128 = scmp.eq.s32.totalorder %s64, 0
      %p129 = por %p127, %p128
      %s130 = ssub.s32 %s66, %s73
      %p131 = scmp.eq.s32.totalorder %s130, 0
      %s133 = sadd.s32 %s132, 1
      %s134 = scalar_select %p131, %s132, %s133
      %p137 = pneg %p131
      %p138 = scmp.eq.s32.totalorder %s58, 1
      %p139 = por %p137, %p138
      %p140 = scmp.ne.s32.totalorder %s132, %s135
      %p141 = scmp.eq.s32.totalorder %s58, 0
      %p142 = por %p140, %p141
      %p143 = scmp.ne.s32.totalorder %s132, %s135
      %p144 = scmp.eq.s32.totalorder %s63, 1
      %p145 = por %p143, %p144
      %p146 = scmp.ne.s32.totalorder %s135, %s136
      %p147 = scmp.eq.s32.totalorder %s63, 0
      %p148 = por %p146, %p147
      %p149 = scmp.ne.s32.totalorder %s135, %s136
      %p150 = scmp.eq.s32.totalorder %s64, 1
      %p151 = por %p149, %p150
      %p153 = scmp.ne.s32.totalorder %s136, %s152
      %p154 = scmp.eq.s32.totalorder %s64, 0
      %p155 = por %p153, %p154
      %s156 = ssub.s32 %s66, %s73
      %p157 = scmp.eq.s32.totalorder %s156, 0
      %s159 = sadd.s32 %s158, 1
      %s160 = scalar_select %p157, %s158, %s159
      %p163 = pneg %p157
      %p164 = scmp.eq.s32.totalorder %s58, 1
      %p165 = por %p163, %p164
      %p166 = scmp.ne.s32.totalorder %s158, %s161
      %p167 = scmp.eq.s32.totalorder %s58, 0
      %p168 = por %p166, %p167
      %p169 = scmp.ne.s32.totalorder %s158, %s161
      %p170 = scmp.eq.s32.totalorder %s63, 1
      %p171 = por %p169, %p170
      %p172 = scmp.ne.s32.totalorder %s161, %s162
      %p173 = scmp.eq.s32.totalorder %s63, 0
      %p174 = por %p172, %p173
      %p175 = scmp.ne.s32.totalorder %s161, %s162
      %p176 = scmp.eq.s32.totalorder %s64, 1
      %p177 = por %p175, %p176
      %p179 = scmp.ne.s32.totalorder %s162, %s178
      %p180 = scmp.eq.s32.totalorder %s64, 0
      %p181 = por %p179, %p180
      %s182 = ssub.s32 %s66, %s73
      %p183 = scmp.eq.s32.totalorder %s182, 0
      %s185 = sadd.s32 %s184, 1
      %s186 = scalar_select %p183, %s184, %s185
      %p189 = pneg %p183
      %p190 = scmp.eq.s32.totalorder %s58, 1
      %p191 = por %p189, %p190
      %p192 = scmp.ne.s32.totalorder %s184, %s187
      %p193 = scmp.eq.s32.totalorder %s58, 0
      %p194 = por %p192, %p193
      %p195 = scmp.ne.s32.totalorder %s184, %s187
      %p196 = scmp.eq.s32.totalorder %s63, 1
      %p197 = por %p195, %p196
      %p198 = scmp.ne.s32.totalorder %s187, %s188
      %p199 = scmp.eq.s32.totalorder %s63, 0
      %p200 = por %p198, %p199
      %p201 = scmp.ne.s32.totalorder %s187, %s188
      %p202 = scmp.eq.s32.totalorder %s64, 1
      %p203 = por %p201, %p202
      %p205 = scmp.ne.s32.totalorder %s188, %s204
      %p206 = scmp.eq.s32.totalorder %s64, 0
      %p207 = por %p205, %p206
      %s208 = ssub.s32 %s66, %s73
      %p209 = scmp.eq.s32.totalorder %s208, 0
      %s211 = sadd.s32 %s210, 1
      %s212 = scalar_select %p209, %s210, %s211
      %p215 = pneg %p209
      %p216 = scmp.eq.s32.totalorder %s58, 1
      %p217 = por %p215, %p216
      %p218 = scmp.ne.s32.totalorder %s210, %s213
      %p219 = scmp.eq.s32.totalorder %s58, 0
      %p220 = por %p218, %p219
      %p221 = scmp.ne.s32.totalorder %s210, %s213
      %p222 = scmp.eq.s32.totalorder %s63, 1
      %p223 = por %p221, %p222
      %p224 = scmp.ne.s32.totalorder %s213, %s214
      %p225 = scmp.eq.s32.totalorder %s63, 0
      %p226 = por %p224, %p225
      %p227 = scmp.ne.s32.totalorder %s213, %s214
      %p228 = scmp.eq.s32.totalorder %s64, 1
      %p229 = por %p227, %p228
      %p231 = scmp.ne.s32.totalorder %s214, %s230
      %p232 = scmp.eq.s32.totalorder %s64, 0
      %p233 = por %p231, %p232
      %s234 = ssub.s32 %s66, %s73
      %p235 = scmp.eq.s32.totalorder %s234, 0
      %s237 = sadd.s32 %s236, 1
      %s238 = scalar_select %p235, %s236, %s237
      %p241 = pneg %p235
      %p242 = scmp.eq.s32.totalorder %s58, 1
      %p243 = por %p241, %p242
      %p244 = scmp.ne.s32.totalorder %s236, %s239
      %p245 = scmp.eq.s32.totalorder %s58, 0
      %p246 = por %p244, %p245
      %p247 = scmp.ne.s32.totalorder %s236, %s239
      %p248 = scmp.eq.s32.totalorder %s63, 1
      %p249 = por %p247, %p248
      %p250 = scmp.ne.s32.totalorder %s239, %s240
      %p251 = scmp.eq.s32.totalorder %s63, 0
      %p252 = por %p250, %p251
      %p253 = scmp.ne.s32.totalorder %s239, %s240
      %p254 = scmp.eq.s32.totalorder %s64, 1
      %p255 = por %p253, %p254
      %p257 = scmp.ne.s32.totalorder %s240, %s256
      %p258 = scmp.eq.s32.totalorder %s64, 0
      %p259 = por %p257, %p258
      %s260 = ssub.s32 %s66, %s73
      %p261 = scmp.eq.s32.totalorder %s260, 0
      %s263 = sadd.s32 %s262, 1
      %s264 = scalar_select %p261, %s262, %s263
      %p267 = pneg %p261
      %p268 = scmp.eq.s32.totalorder %s58, 1
      %p269 = por %p267, %p268
      %p270 = scmp.ne.s32.totalorder %s262, %s265
      %p271 = scmp.eq.s32.totalorder %s58, 0
      %p272 = por %p270, %p271
      %p273 = scmp.ne.s32.totalorder %s262, %s265
      %p274 = scmp.eq.s32.totalorder %s63, 1
      %p275 = por %p273, %p274
      %p276 = scmp.ne.s32.totalorder %s265, %s266
      %p277 = scmp.eq.s32.totalorder %s63, 0
      %p278 = por %p276, %p277
      %p279 = scmp.ne.s32.totalorder %s265, %s266
      %p280 = scmp.eq.s32.totalorder %s64, 1
      %p281 = por %p279, %p280
      %p283 = scmp.ne.s32.totalorder %s266, %s282
      %p284 = scmp.eq.s32.totalorder %s64, 0
      %p285 = por %p283, %p284
      %s286 = ssub.s32 %s66, %s73
      %p287 = scmp.eq.s32.totalorder %s286, 0
      %s289 = sadd.s32 %s288, 1
      %s290 = scalar_select %p287, %s288, %s289
      %p293 = pneg %p287
      %p294 = scmp.eq.s32.totalorder %s58, 1
      %p295 = por %p293, %p294
      %p296 = scmp.ne.s32.totalorder %s288, %s291
      %p297 = scmp.eq.s32.totalorder %s58, 0
      %p298 = por %p296, %p297
      %p299 = scmp.ne.s32.totalorder %s288, %s291
      %p300 = scmp.eq.s32.totalorder %s63, 1
      %p301 = por %p299, %p300
      %p302 = scmp.ne.s32.totalorder %s291, %s292
      %p303 = scmp.eq.s32.totalorder %s63, 0
      %p304 = por %p302, %p303
      %p305 = scmp.ne.s32.totalorder %s291, %s292
      %p306 = scmp.eq.s32.totalorder %s64, 1
      %p307 = por %p305, %p306
      %p309 = scmp.ne.s32.totalorder %s292, %s308
      %p310 = scmp.eq.s32.totalorder %s64, 0
      %p311 = por %p309, %p310
      %s312 = ssub.s32 %s66, %s73
      %p313 = scmp.eq.s32.totalorder %s312, 0
      %s315 = sadd.s32 %s314, 1
      %s316 = scalar_select %p313, %s314, %s315
      %p319 = pneg %p313
      %p320 = scmp.eq.s32.totalorder %s58, 1
      %p321 = por %p319, %p320
      %p322 = scmp.ne.s32.totalorder %s314, %s317
      %p323 = scmp.eq.s32.totalorder %s58, 0
      %p324 = por %p322, %p323
      %p325 = scmp.ne.s32.totalorder %s314, %s317
      %p326 = scmp.eq.s32.totalorder %s63, 1
      %p327 = por %p325, %p326
      %p328 = scmp.ne.s32.totalorder %s317, %s318
      %p329 = scmp.eq.s32.totalorder %s63, 0
      %p330 = por %p328, %p329
      %p331 = scmp.ne.s32.totalorder %s317, %s318
      %p332 = scmp.eq.s32.totalorder %s64, 1
      %p333 = por %p331, %p332
      %p335 = scmp.ne.s32.totalorder %s318, %s334
      %p336 = scmp.eq.s32.totalorder %s64, 0
      %p337 = por %p335, %p336
      %s338 = ssub.s32 %s66, %s73
      %p339 = scmp.eq.s32.totalorder %s338, 0
      %s341 = sadd.s32 %s340, 1
      %s342 = scalar_select %p339, %s340, %s341
      %p345 = pneg %p339
      %p346 = scmp.eq.s32.totalorder %s58, 1
      %p347 = por %p345, %p346
      %p348 = scmp.ne.s32.totalorder %s340, %s343
      %p349 = scmp.eq.s32.totalorder %s58, 0
      %p350 = por %p348, %p349
      %p351 = scmp.ne.s32.totalorder %s340, %s343
      %p352 = scmp.eq.s32.totalorder %s63, 1
      %p353 = por %p351, %p352
      %p354 = scmp.ne.s32.totalorder %s343, %s344
      %p355 = scmp.eq.s32.totalorder %s63, 0
      %p356 = por %p354, %p355
      %p357 = scmp.ne.s32.totalorder %s343, %s344
      %p358 = scmp.eq.s32.totalorder %s64, 1
      %p359 = por %p357, %p358
      %p361 = scmp.ne.s32.totalorder %s344, %s360
      %p362 = scmp.eq.s32.totalorder %s64, 0
      %p363 = por %p361, %p362
      %s364 = ssub.s32 %s66, %s73
      %p365 = scmp.eq.s32.totalorder %s364, 0
      %s367 = sadd.s32 %s366, 1
      %s368 = scalar_select %p365, %s366, %s367
      %p371 = pneg %p365
      %p372 = scmp.eq.s32.totalorder %s58, 1
      %p373 = por %p371, %p372
      %p374 = scmp.ne.s32.totalorder %s366, %s369
      %p375 = scmp.eq.s32.totalorder %s58, 0
      %p376 = por %p374, %p375
      %p377 = scmp.ne.s32.totalorder %s366, %s369
      %p378 = scmp.eq.s32.totalorder %s63, 1
      %p379 = por %p377, %p378
      %p380 = scmp.ne.s32.totalorder %s369, %s370
      %p381 = scmp.eq.s32.totalorder %s63, 0
      %p382 = por %p380, %p381
      %p383 = scmp.ne.s32.totalorder %s369, %s370
      %p384 = scmp.eq.s32.totalorder %s64, 1
      %p385 = por %p383, %p384
      %p387 = scmp.ne.s32.totalorder %s370, %s386
      %p388 = scmp.eq.s32.totalorder %s64, 0
      %p389 = por %p387, %p388
      %s390 = ssub.s32 %s66, %s73
      %p391 = scmp.eq.s32.totalorder %s390, 0
      %s393 = sadd.s32 %s392, 1
      %s394 = scalar_select %p391, %s392, %s393
      %p397 = pneg %p391
      %p398 = scmp.eq.s32.totalorder %s58, 1
      %p399 = por %p397, %p398
      %p400 = scmp.ne.s32.totalorder %s392, %s395
      %p401 = scmp.eq.s32.totalorder %s58, 0
      %p402 = por %p400, %p401
      %p403 = scmp.ne.s32.totalorder %s392, %s395
      %p404 = scmp.eq.s32.totalorder %s63, 1
      %p405 = por %p403, %p404
      %p406 = scmp.ne.s32.totalorder %s395, %s396
      %p407 = scmp.eq.s32.totalorder %s63, 0
      %p408 = por %p406, %p407
      %p409 = scmp.ne.s32.totalorder %s395, %s396
      %p410 = scmp.eq.s32.totalorder %s64, 1
      %p411 = por %p409, %p410
      %p413 = scmp.ne.s32.totalorder %s396, %s412
      %p414 = scmp.eq.s32.totalorder %s64, 0
      %p415 = por %p413, %p414
      %s416 = ssub.s32 %s66, %s73
      %p417 = scmp.eq.s32.totalorder %s416, 0
      %s419 = sadd.s32 %s418, 1
      %s420 = scalar_select %p417, %s418, %s419
      %p423 = pneg %p417
      %p424 = scmp.eq.s32.totalorder %s58, 1
      %p425 = por %p423, %p424
      %p426 = scmp.ne.s32.totalorder %s418, %s421
      %p427 = scmp.eq.s32.totalorder %s58, 0
      %p428 = por %p426, %p427
      %p429 = scmp.ne.s32.totalorder %s418, %s421
      %p430 = scmp.eq.s32.totalorder %s63, 1
      %p431 = por %p429, %p430
      %p432 = scmp.ne.s32.totalorder %s421, %s422
      %p433 = scmp.eq.s32.totalorder %s63, 0
      %p434 = por %p432, %p433
      %p435 = scmp.ne.s32.totalorder %s421, %s422
      %p436 = scmp.eq.s32.totalorder %s64, 1
      %p437 = por %p435, %p436
      %p439 = scmp.ne.s32.totalorder %s422, %s438
      %p440 = scmp.eq.s32.totalorder %s64, 0
      %p441 = por %p439, %p440
      %s442 = ssub.s32 %s66, %s73
      %p443 = scmp.eq.s32.totalorder %s442, 0
      %s445 = sadd.s32 %s444, 1
      %s446 = scalar_select %p443, %s444, %s445
      %p449 = pneg %p443
      %p450 = scmp.eq.s32.totalorder %s58, 1
      %p451 = por %p449, %p450
      %p452 = scmp.ne.s32.totalorder %s444, %s447
      %p453 = scmp.eq.s32.totalorder %s58, 0
      %p454 = por %p452, %p453
      %p455 = scmp.ne.s32.totalorder %s444, %s447
      %p456 = scmp.eq.s32.totalorder %s63, 1
      %p457 = por %p455, %p456
      %p458 = scmp.ne.s32.totalorder %s447, %s448
      %p459 = scmp.eq.s32.totalorder %s63, 0
      %p460 = por %p458, %p459
      %p461 = scmp.ne.s32.totalorder %s447, %s448
      %p462 = scmp.eq.s32.totalorder %s64, 1
      %p463 = por %p461, %p462
      %p465 = scmp.ne.s32.totalorder %s448, %s464
      %p466 = scmp.eq.s32.totalorder %s64, 0
      %p467 = por %p465, %p466
      %s468 = ssub.s32 %s66, %s73
      %p469 = scmp.eq.s32.totalorder %s468, 0
      %s471 = sadd.s32 %s470, 1
      %s472 = scalar_select %p469, %s470, %s471
      %p475 = pneg %p469
      %p476 = scmp.eq.s32.totalorder %s58, 1
      %p477 = por %p475, %p476
      %p478 = scmp.ne.s32.totalorder %s470, %s473
      %p479 = scmp.eq.s32.totalorder %s58, 0
      %p480 = por %p478, %p479
      %p481 = scmp.ne.s32.totalorder %s470, %s473
      %p482 = scmp.eq.s32.totalorder %s63, 1
      %p483 = por %p481, %p482
      %p484 = scmp.ne.s32.totalorder %s473, %s474
      %p485 = scmp.eq.s32.totalorder %s63, 0
      %p486 = por %p484, %p485
      %p487 = scmp.ne.s32.totalorder %s473, %s474
      %p488 = scmp.eq.s32.totalorder %s64, 1
      %p489 = por %p487, %p488
      %p491 = scmp.ne.s32.totalorder %s474, %s490
      %p492 = scmp.eq.s32.totalorder %s64, 0
      %p493 = por %p491, %p492
      %s494 = ssub.s32 %s66, %s73
      %p495 = scmp.eq.s32.totalorder %s494, 0
      %s497 = sadd.s32 %s496, 1
      %s498 = scalar_select %p495, %s496, %s497
      %p501 = pneg %p495
      %p502 = scmp.eq.s32.totalorder %s58, 1
      %p503 = por %p501, %p502
      %p504 = scmp.ne.s32.totalorder %s496, %s499
      %p505 = scmp.eq.s32.totalorder %s58, 0
      %p506 = por %p504, %p505
      %p507 = scmp.ne.s32.totalorder %s496, %s499
      %p508 = scmp.eq.s32.totalorder %s63, 1
      %p509 = por %p507, %p508
      %p510 = scmp.ne.s32.totalorder %s499, %s500
      %p511 = scmp.eq.s32.totalorder %s63, 0
      %p512 = por %p510, %p511
      %p513 = scmp.ne.s32.totalorder %s499, %s500
      %p514 = scmp.eq.s32.totalorder %s64, 1
      %p515 = por %p513, %p514
      %p517 = scmp.ne.s32.totalorder %s500, %s516
      %p518 = scmp.eq.s32.totalorder %s64, 0
      %p519 = por %p517, %p518
      %s521 = sadd.s32 %s520, 1
      %p524 = scmp.eq.s32.totalorder %s58, 1
      %p525 = scmp.ne.s32.totalorder %s520, %s522
      %p526 = scmp.eq.s32.totalorder %s58, 0
      %p527 = por %p525, %p526
      %p528 = scmp.ne.s32.totalorder %s520, %s522
      %p529 = scmp.eq.s32.totalorder %s63, 1
      %p530 = por %p528, %p529
      %p531 = scmp.ne.s32.totalorder %s522, %s523
      %p532 = scmp.eq.s32.totalorder %s63, 0
      %p533 = por %p531, %p532
      %p534 = scmp.ne.s32.totalorder %s522, %s523
      %p535 = scmp.eq.s32.totalorder %s64, 1
      %p536 = por %p534, %p535
      %p538 = scmp.ne.s32.totalorder %s523, %s537
      %p539 = scmp.eq.s32.totalorder %s64, 0
      %p540 = por %p538, %p539
      %s542 = sadd.s32 %s541, 1
      %p545 = scmp.eq.s32.totalorder %s58, 1
      %p546 = scmp.ne.s32.totalorder %s541, %s543
      %p547 = scmp.eq.s32.totalorder %s58, 0
      %p548 = por %p546, %p547
      %p549 = scmp.ne.s32.totalorder %s541, %s543
      %p550 = scmp.eq.s32.totalorder %s63, 1
      %p551 = por %p549, %p550
      %p552 = scmp.ne.s32.totalorder %s543, %s544
      %p553 = scmp.eq.s32.totalorder %s63, 0
      %p554 = por %p552, %p553
      %p555 = scmp.ne.s32.totalorder %s543, %s544
      %p556 = scmp.eq.s32.totalorder %s64, 1
      %p557 = por %p555, %p556
      %p559 = scmp.ne.s32.totalorder %s544, %s558
      %p560 = scmp.eq.s32.totalorder %s64, 0
      %p561 = por %p559, %p560
      %s563 = sadd.s32 %s562, 1
      %p566 = scmp.eq.s32.totalorder %s58, 1
      %p567 = scmp.ne.s32.totalorder %s562, %s564
      %p568 = scmp.eq.s32.totalorder %s58, 0
      %p569 = por %p567, %p568
      %p570 = scmp.ne.s32.totalorder %s562, %s564
      %p571 = scmp.eq.s32.totalorder %s63, 1
      %p572 = por %p570, %p571
      %p573 = scmp.ne.s32.totalorder %s564, %s565
      %p574 = scmp.eq.s32.totalorder %s63, 0
      %p575 = por %p573, %p574
      %p576 = scmp.ne.s32.totalorder %s564, %s565
      %p577 = scmp.eq.s32.totalorder %s64, 1
      %p578 = por %p576, %p577
      %p580 = scmp.ne.s32.totalorder %s565, %s579
      %p581 = scmp.eq.s32.totalorder %s64, 0
      %p582 = por %p580, %p581
      %s584 = sadd.s32 %s583, 1
      %p587 = scmp.eq.s32.totalorder %s58, 1
      %p588 = scmp.ne.s32.totalorder %s583, %s585
      %p589 = scmp.eq.s32.totalorder %s58, 0
      %p590 = por %p588, %p589
      %p591 = scmp.ne.s32.totalorder %s583, %s585
      %p592 = scmp.eq.s32.totalorder %s63, 1
      %p593 = por %p591, %p592
      %p594 = scmp.ne.s32.totalorder %s585, %s586
      %p595 = scmp.eq.s32.totalorder %s63, 0
      %p596 = por %p594, %p595
      %p597 = scmp.ne.s32.totalorder %s585, %s586
      %p598 = scmp.eq.s32.totalorder %s64, 1
      %p599 = por %p597, %p598
      %p601 = scmp.ne.s32.totalorder %s586, %s600
      %p602 = scmp.eq.s32.totalorder %s64, 0
      %p603 = por %p601, %p602
      %s605 = sadd.s32 %s604, 1
      %p608 = scmp.eq.s32.totalorder %s58, 1
      %p609 = scmp.ne.s32.totalorder %s604, %s606
      %p610 = scmp.eq.s32.totalorder %s58, 0
      %p611 = por %p609, %p610
      %p612 = scmp.ne.s32.totalorder %s604, %s606
      %p613 = scmp.eq.s32.totalorder %s63, 1
      %p614 = por %p612, %p613
      %p615 = scmp.ne.s32.totalorder %s606, %s607
      %p616 = scmp.eq.s32.totalorder %s63, 0
      %p617 = por %p615, %p616
      %p618 = scmp.ne.s32.totalorder %s606, %s607
      %p619 = scmp.eq.s32.totalorder %s64, 1
      %p620 = por %p618, %p619
      %p622 = scmp.ne.s32.totalorder %s607, %s621
      %p623 = scmp.eq.s32.totalorder %s64, 0
      %p624 = por %p622, %p623
      %s626 = sadd.s32 %s625, 1
      %p629 = scmp.eq.s32.totalorder %s58, 1
      %p630 = scmp.ne.s32.totalorder %s625, %s627
      %p631 = scmp.eq.s32.totalorder %s58, 0
      %p632 = por %p630, %p631
      %p633 = scmp.ne.s32.totalorder %s625, %s627
      %p634 = scmp.eq.s32.totalorder %s63, 1
      %p635 = por %p633, %p634
      %p636 = scmp.ne.s32.totalorder %s627, %s628
      %p637 = scmp.eq.s32.totalorder %s63, 0
      %p638 = por %p636, %p637
      %p639 = scmp.ne.s32.totalorder %s627, %s628
      %p640 = scmp.eq.s32.totalorder %s64, 1
      %p641 = por %p639, %p640
      %p643 = scmp.ne.s32.totalorder %s628, %s642
      %p644 = scmp.eq.s32.totalorder %s64, 0
      %p645 = por %p643, %p644
      %s646 = ssub.s32 %s65, %s77
      %p647 = scmp.eq.s32.totalorder %s646, 0
      %s649 = sadd.s32 %s648, 1
      %s650 = scalar_select %p647, %s648, %s649
      %p653 = pneg %p647
      %p654 = scmp.eq.s32.totalorder %s58, 1
      %p655 = por %p653, %p654
      %p656 = scmp.ne.s32.totalorder %s648, %s651
      %p657 = scmp.eq.s32.totalorder %s58, 0
      %p658 = por %p656, %p657
      %p659 = scmp.ne.s32.totalorder %s648, %s651
      %p660 = scmp.eq.s32.totalorder %s63, 1
      %p661 = por %p659, %p660
      %p662 = scmp.ne.s32.totalorder %s651, %s652
      %p663 = scmp.eq.s32.totalorder %s63, 0
      %p664 = por %p662, %p663
      %p665 = scmp.ne.s32.totalorder %s651, %s652
      %p666 = scmp.eq.s32.totalorder %s64, 1
      %p667 = por %p665, %p666
      %p669 = scmp.ne.s32.totalorder %s652, %s668
      %p670 = scmp.eq.s32.totalorder %s64, 0
      %p671 = por %p669, %p670
      %p672 = scmp.le.s32.totalorder 1, %s58
      %p673 = scmp.lt.s32.totalorder %s58, 3
      %p674 = pnand %p672, %p673
      %p675 = pneg %p674
      // Predicated region
      $region9: #{tpu_custom_call.1} parent=5 // pred_check
        _
      $region10: #{tpu_custom_call.1} parent=5 // pred_check_branch
        %677 = sbr.rel (%p674) target = $region12
      $region11: #{tpu_custom_call.1} parent=5 // pred_region
        %s678 = ssub.s32 %s58, 1
        // Predicated region
        $region13: #{tpu_custom_call.1} parent=11 // pred_check
          %p679 = pneg %p96
        $region14: #{tpu_custom_call.1} parent=11 // pred_check_branch
          %681 = sbr.rel (%p679) target = $region16
        $region15: #{tpu_custom_call.1} parent=11 // pred_region
          %s682 = smul.u32 2, %s67
          %s684 = ssub.s32 256, 256
          %685 = vsyncadd [#allocation4], %s684
          %s686 = smul.addr %s682, 128
          %s687 = scalar_lea.hbm %s0, %s686
          %s688 = sshll.u32 [#allocation3], 4
          %s689 = int_to_ptr.vmem [resolvable:$true] %s688
          %694 = dma.hbm_to_vmem [thread:$0]  %s687, 256, %s689, [#allocation4], 128, 128, 8
        $region16: #{tpu_custom_call.1} parent=11 // pred_fallthru
          _
        // Predicated region
        $region17: #{tpu_custom_call.1} parent=11 // pred_check
          %p695 = pneg %p533
        $region18: #{tpu_custom_call.1} parent=11 // pred_check_branch
          %697 = sbr.rel (%p695) target = $region20
        $region19: #{tpu_custom_call.1} parent=11 // pred_region
          %s699 = ssub.s32 16, 16
          %700 = vsyncadd [#allocation31], %s699
          %s702 = sshll.u32 [#allocation30], 4
          %s703 = int_to_ptr.vmem [resolvable:$true] %s702
          %705 = dma.hbm_to_vmem [thread:$0]  %s17, 16, %s703, [#allocation31]
        $region20: #{tpu_custom_call.1} parent=11 // pred_fallthru
          _
        // Predicated region
        $region21: #{tpu_custom_call.1} parent=11 // pred_check
          %p706 = pneg %p554
        $region22: #{tpu_custom_call.1} parent=11 // pred_check_branch
          %708 = sbr.rel (%p706) target = $region24
        $region23: #{tpu_custom_call.1} parent=11 // pred_region
          %s710 = ssub.s32 16, 16
          %711 = vsyncadd [#allocation31], %s710
          %s713 = sshll.u32 [#allocation32], 4
          %s714 = int_to_ptr.vmem [resolvable:$true] %s713
          %716 = dma.hbm_to_vmem [thread:$0]  %s18, 16, %s714, [#allocation31]
        $region24: #{tpu_custom_call.1} parent=11 // pred_fallthru
          _
        // Predicated region
        $region25: #{tpu_custom_call.1} parent=11 // pred_check
          %p717 = pneg %p575
        $region26: #{tpu_custom_call.1} parent=11 // pred_check_branch
          %719 = sbr.rel (%p717) target = $region28
        $region27: #{tpu_custom_call.1} parent=11 // pred_region
          %s721 = ssub.s32 512, 512
          %722 = vsyncadd [#allocation34], %s721
          %s723 = sshll.u32 [#allocation33], 4
          %s724 = int_to_ptr.vmem [resolvable:$true] %s723
          %729 = dma.hbm_to_vmem [thread:$0]  %s19, 512, %s724, [#allocation34], 128, 128, 8
        $region28: #{tpu_custom_call.1} parent=11 // pred_fallthru
          _
        // Predicated region
        $region29: #{tpu_custom_call.1} parent=11 // pred_check
          %p730 = pneg %p596
        $region30: #{tpu_custom_call.1} parent=11 // pred_check_branch
          %732 = sbr.rel (%p730) target = $region32
        $region31: #{tpu_custom_call.1} parent=11 // pred_region
          %s734 = ssub.s32 16, 16
          %735 = vsyncadd [#allocation34], %s734
          %s737 = sshll.u32 [#allocation35], 4
          %s738 = int_to_ptr.vmem [resolvable:$true] %s737
          %740 = dma.hbm_to_vmem [thread:$0]  %s20, 16, %s738, [#allocation34]
        $region32: #{tpu_custom_call.1} parent=11 // pred_fallthru
          _
        // Predicated region
        $region33: #{tpu_custom_call.1} parent=11 // pred_check
          %p741 = pneg %p617
        $region34: #{tpu_custom_call.1} parent=11 // pred_check_branch
          %743 = sbr.rel (%p741) target = $region36
        $region35: #{tpu_custom_call.1} parent=11 // pred_region
          %s745 = ssub.s32 512, 512
          %746 = vsyncadd [#allocation37], %s745
          %s747 = sshll.u32 [#allocation36], 4
          %s748 = int_to_ptr.vmem [resolvable:$true] %s747
          %753 = dma.hbm_to_vmem [thread:$0]  %s21, 512, %s748, [#allocation37], 128, 128, 8
        $region36: #{tpu_custom_call.1} parent=11 // pred_fallthru
          _
        // Predicated region
        $region37: #{tpu_custom_call.1} parent=11 // pred_check
          %p754 = pneg %p638
        $region38: #{tpu_custom_call.1} parent=11 // pred_check_branch
          %756 = sbr.rel (%p754) target = $region40
        $region39: #{tpu_custom_call.1} parent=11 // pred_region
          %s758 = ssub.s32 16, 16
          %759 = vsyncadd [#allocation37], %s758
          %s761 = sshll.u32 [#allocation38], 4
          %s762 = int_to_ptr.vmem [resolvable:$true] %s761
          %764 = dma.hbm_to_vmem [thread:$0]  %s22, 16, %s762, [#allocation37]
        $region40: #{tpu_custom_call.1} parent=11 // pred_fallthru
          _
      $region12: #{tpu_custom_call.1} parent=5 // pred_fallthru
        _
      %p765 = scmp.lt.s32.totalorder %s58, 2
      // Predicated region
      $region41: #{tpu_custom_call.1} parent=5 // pred_check
        %p766 = pneg %p765
      $region42: #{tpu_custom_call.1} parent=5 // pred_check_branch
        %768 = sbr.rel (%p766) target = $region44
      $region43: #{tpu_custom_call.1} parent=5 // pred_region
        // Predicated region
        $region45: #{tpu_custom_call.1} parent=43 // pred_check
          %p769 = pneg %p116
        $region46: #{tpu_custom_call.1} parent=43 // pred_check_branch
          %771 = sbr.rel (%p769) target = $region48
        $region47: #{tpu_custom_call.1} parent=43 // pred_region
          %s772 = sand.u32 %s58, 1
          %s773 = scalar_lea.sflag [#allocation7], %s772
          %s774 = sand.u32 %s106, 1
          %s775 = scalar_lea.vmem [#allocation6], %s774
          %s777 = ssub.s32 16, 16
          %778 = vsyncadd %s773, %s777
          %s779 = smul.addr %s66, 16
          %s780 = scalar_lea.hbm %s1, %s779
          %s782 = sshll.u32 %s775, 4
          %s783 = int_to_ptr.vmem [resolvable:$true] %s782
          %785 = dma.hbm_to_vmem [thread:$0]  %s780, 16, %s783, %s773
        $region48: #{tpu_custom_call.1} parent=43 // pred_fallthru
          _
        // Predicated region
        $region49: #{tpu_custom_call.1} parent=43 // pred_check
          %p786 = pneg %p142
        $region50: #{tpu_custom_call.1} parent=43 // pred_check_branch
          %788 = sbr.rel (%p786) target = $region52
        $region51: #{tpu_custom_call.1} parent=43 // pred_region
          %s789 = sand.u32 %s58, 1
          %s790 = scalar_lea.sflag [#allocation7], %s789
          %s791 = sand.u32 %s132, 1
          %s792 = scalar_lea.vmem [#allocation8], %s791
          %s794 = ssub.s32 16, 16
          %795 = vsyncadd %s790, %s794
          %s796 = smul.addr %s66, 16
          %s797 = scalar_lea.hbm %s2, %s796
          %s799 = sshll.u32 %s792, 4
          %s800 = int_to_ptr.vmem [resolvable:$true] %s799
          %802 = dma.hbm_to_vmem [thread:$0]  %s797, 16, %s800, %s790
        $region52: #{tpu_custom_call.1} parent=43 // pred_fallthru
          _
        // Predicated region
        $region53: #{tpu_custom_call.1} parent=43 // pred_check
          %p803 = pneg %p168
        $region54: #{tpu_custom_call.1} parent=43 // pred_check_branch
          %805 = sbr.rel (%p803) target = $region56
        $region55: #{tpu_custom_call.1} parent=43 // pred_region
          %s806 = sand.u32 %s58, 1
          %s807 = scalar_lea.sflag [#allocation10], %s806
          %s808 = sand.u32 %s158, 1
          %s809 = smul.addr %s808, 32
          %s810 = scalar_lea.vmem [#allocation9], %s809
          %s812 = ssub.s32 512, 512
          %813 = vsyncadd %s807, %s812
          %s814 = smul.addr %s66, 8
          %s815 = smul.addr %s814, 64
          %s816 = scalar_lea.hbm %s3, %s815
          %s817 = sshll.u32 %s810, 4
          %s818 = int_to_ptr.vmem [resolvable:$true] %s817
          %823 = dma.hbm_to_vmem [thread:$0]  %s816, 512, %s818, %s807, 64, 64, 4
        $region56: #{tpu_custom_call.1} parent=43 // pred_fallthru
          _
        // Predicated region
        $region57: #{tpu_custom_call.1} parent=43 // pred_check
          %p824 = pneg %p194
        $region58: #{tpu_custom_call.1} parent=43 // pred_check_branch
          %826 = sbr.rel (%p824) target = $region60
        $region59: #{tpu_custom_call.1} parent=43 // pred_region
          %s827 = sand.u32 %s58, 1
          %s828 = scalar_lea.sflag [#allocation10], %s827
          %s829 = sand.u32 %s184, 1
          %s830 = smul.addr %s829, 2
          %s831 = scalar_lea.vmem [#allocation11], %s830
          %s833 = ssub.s32 32, 32
          %834 = vsyncadd %s828, %s833
          %s835 = smul.addr %s66, 2
          %s836 = smul.addr %s835, 16
          %s837 = scalar_lea.hbm %s4, %s836
          %s838 = sshll.u32 %s831, 4
          %s839 = int_to_ptr.vmem [resolvable:$true] %s838
          %844 = dma.hbm_to_vmem [thread:$0]  %s837, 32, %s839, %s828, 16, 16, 1
        $region60: #{tpu_custom_call.1} parent=43 // pred_fallthru
          _
        // Predicated region
        $region61: #{tpu_custom_call.1} parent=43 // pred_check
          %p845 = pneg %p220
        $region62: #{tpu_custom_call.1} parent=43 // pred_check_branch
          %847 = sbr.rel (%p845) target = $region64
        $region63: #{tpu_custom_call.1} parent=43 // pred_region
          %s848 = sand.u32 %s58, 1
          %s849 = scalar_lea.sflag [#allocation13], %s848
          %s850 = sand.u32 %s210, 1
          %s851 = smul.addr %s850, 32
          %s852 = scalar_lea.vmem [#allocation12], %s851
          %s854 = ssub.s32 512, 512
          %855 = vsyncadd %s849, %s854
          %s856 = smul.addr %s66, 8
          %s857 = smul.addr %s856, 64
          %s858 = scalar_lea.hbm %s5, %s857
          %s859 = sshll.u32 %s852, 4
          %s860 = int_to_ptr.vmem [resolvable:$true] %s859
          %865 = dma.hbm_to_vmem [thread:$0]  %s858, 512, %s860, %s849, 64, 64, 4
        $region64: #{tpu_custom_call.1} parent=43 // pred_fallthru
          _
        // Predicated region
        $region65: #{tpu_custom_call.1} parent=43 // pred_check
          %p866 = pneg %p246
        $region66: #{tpu_custom_call.1} parent=43 // pred_check_branch
          %868 = sbr.rel (%p866) target = $region68
        $region67: #{tpu_custom_call.1} parent=43 // pred_region
          %s869 = sand.u32 %s58, 1
          %s870 = scalar_lea.sflag [#allocation13], %s869
          %s871 = sand.u32 %s236, 1
          %s872 = smul.addr %s871, 2
          %s873 = scalar_lea.vmem [#allocation14], %s872
          %s875 = ssub.s32 32, 32
          %876 = vsyncadd %s870, %s875
          %s877 = smul.addr %s66, 2
          %s878 = smul.addr %s877, 16
          %s879 = scalar_lea.hbm %s6, %s878
          %s880 = sshll.u32 %s873, 4
          %s881 = int_to_ptr.vmem [resolvable:$true] %s880
          %886 = dma.hbm_to_vmem [thread:$0]  %s879, 32, %s881, %s870, 16, 16, 1
        $region68: #{tpu_custom_call.1} parent=43 // pred_fallthru
          _
        // Predicated region
        $region69: #{tpu_custom_call.1} parent=43 // pred_check
          %p887 = pneg %p272
        $region70: #{tpu_custom_call.1} parent=43 // pred_check_branch
          %889 = sbr.rel (%p887) target = $region72
        $region71: #{tpu_custom_call.1} parent=43 // pred_region
          %s890 = sand.u32 %s58, 1
          %s891 = scalar_lea.sflag [#allocation16], %s890
          %s892 = sand.u32 %s262, 1
          %s893 = smul.addr %s892, 32
          %s894 = scalar_lea.vmem [#allocation15], %s893
          %s896 = ssub.s32 512, 512
          %897 = vsyncadd %s891, %s896
          %s898 = smul.addr %s66, 8
          %s899 = smul.addr %s898, 64
          %s900 = scalar_lea.hbm %s7, %s899
          %s901 = sshll.u32 %s894, 4
          %s902 = int_to_ptr.vmem [resolvable:$true] %s901
          %907 = dma.hbm_to_vmem [thread:$0]  %s900, 512, %s902, %s891, 64, 64, 4
        $region72: #{tpu_custom_call.1} parent=43 // pred_fallthru
          _
        // Predicated region
        $region73: #{tpu_custom_call.1} parent=43 // pred_check
          %p908 = pneg %p298
        $region74: #{tpu_custom_call.1} parent=43 // pred_check_branch
          %910 = sbr.rel (%p908) target = $region76
        $region75: #{tpu_custom_call.1} parent=43 // pred_region
          %s911 = sand.u32 %s58, 1
          %s912 = scalar_lea.sflag [#allocation16], %s911
          %s913 = sand.u32 %s288, 1
          %s914 = smul.addr %s913, 2
          %s915 = scalar_lea.vmem [#allocation17], %s914
          %s917 = ssub.s32 32, 32
          %918 = vsyncadd %s912, %s917
          %s919 = smul.addr %s66, 2
          %s920 = smul.addr %s919, 16
          %s921 = scalar_lea.hbm %s8, %s920
          %s922 = sshll.u32 %s915, 4
          %s923 = int_to_ptr.vmem [resolvable:$true] %s922
          %928 = dma.hbm_to_vmem [thread:$0]  %s921, 32, %s923, %s912, 16, 16, 1
        $region76: #{tpu_custom_call.1} parent=43 // pred_fallthru
          _
        // Predicated region
        $region77: #{tpu_custom_call.1} parent=43 // pred_check
          %p929 = pneg %p324
        $region78: #{tpu_custom_call.1} parent=43 // pred_check_branch
          %931 = sbr.rel (%p929) target = $region80
        $region79: #{tpu_custom_call.1} parent=43 // pred_region
          %s932 = sand.u32 %s58, 1
          %s933 = scalar_lea.sflag [#allocation19], %s932
          %s934 = sand.u32 %s314, 1
          %s935 = smul.addr %s934, 32
          %s936 = scalar_lea.vmem [#allocation18], %s935
          %s938 = ssub.s32 512, 512
          %939 = vsyncadd %s933, %s938
          %s940 = smul.addr %s66, 8
          %s941 = smul.addr %s940, 64
          %s942 = scalar_lea.hbm %s9, %s941
          %s943 = sshll.u32 %s936, 4
          %s944 = int_to_ptr.vmem [resolvable:$true] %s943
          %949 = dma.hbm_to_vmem [thread:$0]  %s942, 512, %s944, %s933, 64, 64, 4
        $region80: #{tpu_custom_call.1} parent=43 // pred_fallthru
          _
        // Predicated region
        $region81: #{tpu_custom_call.1} parent=43 // pred_check
          %p950 = pneg %p350
        $region82: #{tpu_custom_call.1} parent=43 // pred_check_branch
          %952 = sbr.rel (%p950) target = $region84
        $region83: #{tpu_custom_call.1} parent=43 // pred_region
          %s953 = sand.u32 %s58, 1
          %s954 = scalar_lea.sflag [#allocation19], %s953
          %s955 = sand.u32 %s340, 1
          %s956 = scalar_lea.vmem [#allocation20], %s955
          %s958 = ssub.s32 16, 16
          %959 = vsyncadd %s954, %s958
          %s960 = smul.addr %s66, 16
          %s961 = scalar_lea.hbm %s10, %s960
          %s963 = sshll.u32 %s956, 4
          %s964 = int_to_ptr.vmem [resolvable:$true] %s963
          %966 = dma.hbm_to_vmem [thread:$0]  %s961, 16, %s964, %s954
        $region84: #{tpu_custom_call.1} parent=43 // pred_fallthru
          _
        // Predicated region
        $region85: #{tpu_custom_call.1} parent=43 // pred_check
          %p967 = pneg %p376
        $region86: #{tpu_custom_call.1} parent=43 // pred_check_branch
          %969 = sbr.rel (%p967) target = $region88
        $region87: #{tpu_custom_call.1} parent=43 // pred_region
          %s970 = sand.u32 %s58, 1
          %s971 = scalar_lea.sflag [#allocation22], %s970
          %s972 = sand.u32 %s366, 1
          %s973 = scalar_lea.vmem [#allocation21], %s972
          %s975 = ssub.s32 16, 16
          %976 = vsyncadd %s971, %s975
          %s977 = smul.addr %s66, 16
          %s978 = scalar_lea.hbm %s11, %s977
          %s980 = sshll.u32 %s973, 4
          %s981 = int_to_ptr.vmem [resolvable:$true] %s980
          %983 = dma.hbm_to_vmem [thread:$0]  %s978, 16, %s981, %s971
        $region88: #{tpu_custom_call.1} parent=43 // pred_fallthru
          _
        // Predicated region
        $region89: #{tpu_custom_call.1} parent=43 // pred_check
          %p984 = pneg %p402
        $region90: #{tpu_custom_call.1} parent=43 // pred_check_branch
          %986 = sbr.rel (%p984) target = $region92
        $region91: #{tpu_custom_call.1} parent=43 // pred_region
          %s987 = sand.u32 %s58, 1
          %s988 = scalar_lea.sflag [#allocation22], %s987
          %s989 = sand.u32 %s392, 1
          %s990 = scalar_lea.vmem [#allocation23], %s989
          %s992 = ssub.s32 16, 16
          %993 = vsyncadd %s988, %s992
          %s994 = smul.addr %s66, 16
          %s995 = scalar_lea.hbm %s12, %s994
          %s997 = sshll.u32 %s990, 4
          %s998 = int_to_ptr.vmem [resolvable:$true] %s997
          %1000 = dma.hbm_to_vmem [thread:$0]  %s995, 16, %s998, %s988
        $region92: #{tpu_custom_call.1} parent=43 // pred_fallthru
          _
        // Predicated region
        $region93: #{tpu_custom_call.1} parent=43 // pred_check
          %p1001 = pneg %p428
        $region94: #{tpu_custom_call.1} parent=43 // pred_check_branch
          %1003 = sbr.rel (%p1001) target = $region96
        $region95: #{tpu_custom_call.1} parent=43 // pred_region
          %s1004 = sand.u32 %s58, 1
          %s1005 = scalar_lea.sflag [#allocation25], %s1004
          %s1006 = sand.u32 %s418, 1
          %s1007 = smul.addr %s1006, 16
          %s1008 = scalar_lea.vmem [#allocation24], %s1007
          %s1010 = ssub.s32 256, 256
          %1011 = vsyncadd %s1005, %s1010
          %s1012 = smul.addr %s66, 4
          %s1013 = smul.addr %s1012, 64
          %s1014 = scalar_lea.hbm %s13, %s1013
          %s1015 = sshll.u32 %s1008, 4
          %s1016 = int_to_ptr.vmem [resolvable:$true] %s1015
          %1021 = dma.hbm_to_vmem [thread:$0]  %s1014, 256, %s1016, %s1005, 64, 64, 4
        $region96: #{tpu_custom_call.1} parent=43 // pred_fallthru
          _
        // Predicated region
        $region97: #{tpu_custom_call.1} parent=43 // pred_check
          %p1022 = pneg %p454
        $region98: #{tpu_custom_call.1} parent=43 // pred_check_branch
          %1024 = sbr.rel (%p1022) target = $region100
        $region99: #{tpu_custom_call.1} parent=43 // pred_region
          %s1025 = sand.u32 %s58, 1
          %s1026 = scalar_lea.sflag [#allocation25], %s1025
          %s1027 = sand.u32 %s444, 1
          %s1028 = scalar_lea.vmem [#allocation26], %s1027
          %s1030 = ssub.s32 16, 16
          %1031 = vsyncadd %s1026, %s1030
          %s1032 = smul.addr %s66, 16
          %s1033 = scalar_lea.hbm %s14, %s1032
          %s1035 = sshll.u32 %s1028, 4
          %s1036 = int_to_ptr.vmem [resolvable:$true] %s1035
          %1038 = dma.hbm_to_vmem [thread:$0]  %s1033, 16, %s1036, %s1026
        $region100: #{tpu_custom_call.1} parent=43 // pred_fallthru
          _
        // Predicated region
        $region101: #{tpu_custom_call.1} parent=43 // pred_check
          %p1039 = pneg %p480
        $region102: #{tpu_custom_call.1} parent=43 // pred_check_branch
          %1041 = sbr.rel (%p1039) target = $region104
        $region103: #{tpu_custom_call.1} parent=43 // pred_region
          %s1042 = sand.u32 %s58, 1
          %s1043 = scalar_lea.sflag [#allocation28], %s1042
          %s1044 = sand.u32 %s470, 1
          %s1045 = smul.addr %s1044, 64
          %s1046 = scalar_lea.vmem [#allocation27], %s1045
          %s1048 = ssub.s32 1024, 1024
          %1049 = vsyncadd %s1043, %s1048
          %s1050 = smul.addr %s66, 16
          %s1051 = smul.addr %s1050, 64
          %s1052 = scalar_lea.hbm %s15, %s1051
          %s1053 = sshll.u32 %s1046, 4
          %s1054 = int_to_ptr.vmem [resolvable:$true] %s1053
          %1059 = dma.hbm_to_vmem [thread:$0]  %s1052, 1024, %s1054, %s1043, 64, 64, 4
        $region104: #{tpu_custom_call.1} parent=43 // pred_fallthru
          _
        // Predicated region
        $region105: #{tpu_custom_call.1} parent=43 // pred_check
          %p1060 = pneg %p506
        $region106: #{tpu_custom_call.1} parent=43 // pred_check_branch
          %1062 = sbr.rel (%p1060) target = $region108
        $region107: #{tpu_custom_call.1} parent=43 // pred_region
          %s1063 = sand.u32 %s58, 1
          %s1064 = scalar_lea.sflag [#allocation28], %s1063
          %s1065 = sand.u32 %s496, 1
          %s1066 = scalar_lea.vmem [#allocation29], %s1065
          %s1068 = ssub.s32 16, 16
          %1069 = vsyncadd %s1064, %s1068
          %s1070 = smul.addr %s66, 16
          %s1071 = scalar_lea.hbm %s16, %s1070
          %s1073 = sshll.u32 %s1066, 4
          %s1074 = int_to_ptr.vmem [resolvable:$true] %s1073
          %1076 = dma.hbm_to_vmem [thread:$0]  %s1071, 16, %s1074, %s1064
        $region108: #{tpu_custom_call.1} parent=43 // pred_fallthru
          _
      $region44: #{tpu_custom_call.1} parent=5 // pred_fallthru
        _
      %p1077 = scmp.le.s32.totalorder 1, %s58
      %p1078 = scmp.lt.s32.totalorder %s58, 3
      %p1079 = pnand %p1077, %p1078
      %p1080 = pneg %p1079
      // Predicated region
      $region109: #{tpu_custom_call.1} parent=5 // pred_check
        _
      $region110: #{tpu_custom_call.1} parent=5 // pred_check_branch
        %1082 = sbr.rel (%p1079) target = $region112
      $region111: #{tpu_custom_call.1} parent=5 // pred_region
        %s1083 = ssub.s32 %s58, 1
        // Predicated region
        $region113: #{tpu_custom_call.1} parent=111 // pred_check
          %p1084 = pneg %p96
        $region114: #{tpu_custom_call.1} parent=111 // pred_check_branch
          %1086 = sbr.rel (%p1084) target = $region116
        $region115: #{tpu_custom_call.1} parent=111 // pred_region
          %1087 = dma.done [#allocation4], 256
        $region116: #{tpu_custom_call.1} parent=111 // pred_fallthru
          _
        %s1088 = sand.u32 %s63, 1
        %s1089 = scalar_lea.sflag [#allocation7], %s1088
        %s1090 = sand.u32 %s109, 1
        %s1091 = scalar_lea.vmem [#allocation6], %s1090
        // Predicated region
        $region117: #{tpu_custom_call.1} parent=111 // pred_check
          %p1092 = pneg %p122
        $region118: #{tpu_custom_call.1} parent=111 // pred_check_branch
          %1094 = sbr.rel (%p1092) target = $region120
        $region119: #{tpu_custom_call.1} parent=111 // pred_region
          %1095 = dma.done %s1089, 16
        $region120: #{tpu_custom_call.1} parent=111 // pred_fallthru
          _
        %s1096 = sand.u32 %s63, 1
        %s1097 = scalar_lea.sflag [#allocation7], %s1096
        %s1098 = sand.u32 %s135, 1
        %s1099 = scalar_lea.vmem [#allocation8], %s1098
        // Predicated region
        $region121: #{tpu_custom_call.1} parent=111 // pred_check
          %p1100 = pneg %p148
        $region122: #{tpu_custom_call.1} parent=111 // pred_check_branch
          %1102 = sbr.rel (%p1100) target = $region124
        $region123: #{tpu_custom_call.1} parent=111 // pred_region
          %1103 = dma.done %s1097, 16
        $region124: #{tpu_custom_call.1} parent=111 // pred_fallthru
          _
        %s1104 = sand.u32 %s63, 1
        %s1105 = scalar_lea.sflag [#allocation10], %s1104
        %s1106 = sand.u32 %s161, 1
        %s1107 = smul.addr %s1106, 32
        %s1108 = scalar_lea.vmem [#allocation9], %s1107
        // Predicated region
        $region125: #{tpu_custom_call.1} parent=111 // pred_check
          %p1109 = pneg %p174
        $region126: #{tpu_custom_call.1} parent=111 // pred_check_branch
          %1111 = sbr.rel (%p1109) target = $region128
        $region127: #{tpu_custom_call.1} parent=111 // pred_region
          %1112 = dma.done %s1105, 512
        $region128: #{tpu_custom_call.1} parent=111 // pred_fallthru
          _
        %s1113 = sand.u32 %s63, 1
        %s1114 = scalar_lea.sflag [#allocation10], %s1113
        %s1115 = sand.u32 %s187, 1
        %s1116 = smul.addr %s1115, 2
        %s1117 = scalar_lea.vmem [#allocation11], %s1116
        // Predicated region
        $region129: #{tpu_custom_call.1} parent=111 // pred_check
          %p1118 = pneg %p200
        $region130: #{tpu_custom_call.1} parent=111 // pred_check_branch
          %1120 = sbr.rel (%p1118) target = $region132
        $region131: #{tpu_custom_call.1} parent=111 // pred_region
          %1121 = dma.done %s1114, 32
        $region132: #{tpu_custom_call.1} parent=111 // pred_fallthru
          _
        %s1122 = sand.u32 %s63, 1
        %s1123 = scalar_lea.sflag [#allocation13], %s1122
        %s1124 = sand.u32 %s213, 1
        %s1125 = smul.addr %s1124, 32
        %s1126 = scalar_lea.vmem [#allocation12], %s1125
        // Predicated region
        $region133: #{tpu_custom_call.1} parent=111 // pred_check
          %p1127 = pneg %p226
        $region134: #{tpu_custom_call.1} parent=111 // pred_check_branch
          %1129 = sbr.rel (%p1127) target = $region136
        $region135: #{tpu_custom_call.1} parent=111 // pred_region
          %1130 = dma.done %s1123, 512
        $region136: #{tpu_custom_call.1} parent=111 // pred_fallthru
          _
        %s1131 = sand.u32 %s63, 1
        %s1132 = scalar_lea.sflag [#allocation13], %s1131
        %s1133 = sand.u32 %s239, 1
        %s1134 = smul.addr %s1133, 2
        %s1135 = scalar_lea.vmem [#allocation14], %s1134
        // Predicated region
        $region137: #{tpu_custom_call.1} parent=111 // pred_check
          %p1136 = pneg %p252
        $region138: #{tpu_custom_call.1} parent=111 // pred_check_branch
          %1138 = sbr.rel (%p1136) target = $region140
        $region139: #{tpu_custom_call.1} parent=111 // pred_region
          %1139 = dma.done %s1132, 32
        $region140: #{tpu_custom_call.1} parent=111 // pred_fallthru
          _
        %s1140 = sand.u32 %s63, 1
        %s1141 = scalar_lea.sflag [#allocation16], %s1140
        %s1142 = sand.u32 %s265, 1
        %s1143 = smul.addr %s1142, 32
        %s1144 = scalar_lea.vmem [#allocation15], %s1143
        // Predicated region
        $region141: #{tpu_custom_call.1} parent=111 // pred_check
          %p1145 = pneg %p278
        $region142: #{tpu_custom_call.1} parent=111 // pred_check_branch
          %1147 = sbr.rel (%p1145) target = $region144
        $region143: #{tpu_custom_call.1} parent=111 // pred_region
          %1148 = dma.done %s1141, 512
        $region144: #{tpu_custom_call.1} parent=111 // pred_fallthru
          _
        %s1149 = sand.u32 %s63, 1
        %s1150 = scalar_lea.sflag [#allocation16], %s1149
        %s1151 = sand.u32 %s291, 1
        %s1152 = smul.addr %s1151, 2
        %s1153 = scalar_lea.vmem [#allocation17], %s1152
        // Predicated region
        $region145: #{tpu_custom_call.1} parent=111 // pred_check
          %p1154 = pneg %p304
        $region146: #{tpu_custom_call.1} parent=111 // pred_check_branch
          %1156 = sbr.rel (%p1154) target = $region148
        $region147: #{tpu_custom_call.1} parent=111 // pred_region
          %1157 = dma.done %s1150, 32
        $region148: #{tpu_custom_call.1} parent=111 // pred_fallthru
          _
        %s1158 = sand.u32 %s63, 1
        %s1159 = scalar_lea.sflag [#allocation19], %s1158
        %s1160 = sand.u32 %s317, 1
        %s1161 = smul.addr %s1160, 32
        %s1162 = scalar_lea.vmem [#allocation18], %s1161
        // Predicated region
        $region149: #{tpu_custom_call.1} parent=111 // pred_check
          %p1163 = pneg %p330
        $region150: #{tpu_custom_call.1} parent=111 // pred_check_branch
          %1165 = sbr.rel (%p1163) target = $region152
        $region151: #{tpu_custom_call.1} parent=111 // pred_region
          %1166 = dma.done %s1159, 512
        $region152: #{tpu_custom_call.1} parent=111 // pred_fallthru
          _
        %s1167 = sand.u32 %s63, 1
        %s1168 = scalar_lea.sflag [#allocation19], %s1167
        %s1169 = sand.u32 %s343, 1
        %s1170 = scalar_lea.vmem [#allocation20], %s1169
        // Predicated region
        $region153: #{tpu_custom_call.1} parent=111 // pred_check
          %p1171 = pneg %p356
        $region154: #{tpu_custom_call.1} parent=111 // pred_check_branch
          %1173 = sbr.rel (%p1171) target = $region156
        $region155: #{tpu_custom_call.1} parent=111 // pred_region
          %1174 = dma.done %s1168, 16
        $region156: #{tpu_custom_call.1} parent=111 // pred_fallthru
          _
        %s1175 = sand.u32 %s63, 1
        %s1176 = scalar_lea.sflag [#allocation22], %s1175
        %s1177 = sand.u32 %s369, 1
        %s1178 = scalar_lea.vmem [#allocation21], %s1177
        // Predicated region
        $region157: #{tpu_custom_call.1} parent=111 // pred_check
          %p1179 = pneg %p382
        $region158: #{tpu_custom_call.1} parent=111 // pred_check_branch
          %1181 = sbr.rel (%p1179) target = $region160
        $region159: #{tpu_custom_call.1} parent=111 // pred_region
          %1182 = dma.done %s1176, 16
        $region160: #{tpu_custom_call.1} parent=111 // pred_fallthru
          _
        %s1183 = sand.u32 %s63, 1
        %s1184 = scalar_lea.sflag [#allocation22], %s1183
        %s1185 = sand.u32 %s395, 1
        %s1186 = scalar_lea.vmem [#allocation23], %s1185
        // Predicated region
        $region161: #{tpu_custom_call.1} parent=111 // pred_check
          %p1187 = pneg %p408
        $region162: #{tpu_custom_call.1} parent=111 // pred_check_branch
          %1189 = sbr.rel (%p1187) target = $region164
        $region163: #{tpu_custom_call.1} parent=111 // pred_region
          %1190 = dma.done %s1184, 16
        $region164: #{tpu_custom_call.1} parent=111 // pred_fallthru
          _
        %s1191 = sand.u32 %s63, 1
        %s1192 = scalar_lea.sflag [#allocation25], %s1191
        %s1193 = sand.u32 %s421, 1
        %s1194 = smul.addr %s1193, 16
        %s1195 = scalar_lea.vmem [#allocation24], %s1194
        // Predicated region
        $region165: #{tpu_custom_call.1} parent=111 // pred_check
          %p1196 = pneg %p434
        $region166: #{tpu_custom_call.1} parent=111 // pred_check_branch
          %1198 = sbr.rel (%p1196) target = $region168
        $region167: #{tpu_custom_call.1} parent=111 // pred_region
          %1199 = dma.done %s1192, 256
        $region168: #{tpu_custom_call.1} parent=111 // pred_fallthru
          _
        %s1200 = sand.u32 %s63, 1
        %s1201 = scalar_lea.sflag [#allocation25], %s1200
        %s1202 = sand.u32 %s447, 1
        %s1203 = scalar_lea.vmem [#allocation26], %s1202
        // Predicated region
        $region169: #{tpu_custom_call.1} parent=111 // pred_check
          %p1204 = pneg %p460
        $region170: #{tpu_custom_call.1} parent=111 // pred_check_branch
          %1206 = sbr.rel (%p1204) target = $region172
        $region171: #{tpu_custom_call.1} parent=111 // pred_region
          %1207 = dma.done %s1201, 16
        $region172: #{tpu_custom_call.1} parent=111 // pred_fallthru
          _
        %s1208 = sand.u32 %s63, 1
        %s1209 = scalar_lea.sflag [#allocation28], %s1208
        %s1210 = sand.u32 %s473, 1
        %s1211 = smul.addr %s1210, 64
        %s1212 = scalar_lea.vmem [#allocation27], %s1211
        // Predicated region
        $region173: #{tpu_custom_call.1} parent=111 // pred_check
          %p1213 = pneg %p486
        $region174: #{tpu_custom_call.1} parent=111 // pred_check_branch
          %1215 = sbr.rel (%p1213) target = $region176
        $region175: #{tpu_custom_call.1} parent=111 // pred_region
          %1216 = dma.done %s1209, 1024
        $region176: #{tpu_custom_call.1} parent=111 // pred_fallthru
          _
        %s1217 = sand.u32 %s63, 1
        %s1218 = scalar_lea.sflag [#allocation28], %s1217
        %s1219 = sand.u32 %s499, 1
        %s1220 = scalar_lea.vmem [#allocation29], %s1219
        // Predicated region
        $region177: #{tpu_custom_call.1} parent=111 // pred_check
          %p1221 = pneg %p512
        $region178: #{tpu_custom_call.1} parent=111 // pred_check_branch
          %1223 = sbr.rel (%p1221) target = $region180
        $region179: #{tpu_custom_call.1} parent=111 // pred_region
          %1224 = dma.done %s1218, 16
        $region180: #{tpu_custom_call.1} parent=111 // pred_fallthru
          _
        // Predicated region
        $region181: #{tpu_custom_call.1} parent=111 // pred_check
          %p1225 = pneg %p533
        $region182: #{tpu_custom_call.1} parent=111 // pred_check_branch
          %1227 = sbr.rel (%p1225) target = $region184
        $region183: #{tpu_custom_call.1} parent=111 // pred_region
          %1228 = dma.done [#allocation31], 16
        $region184: #{tpu_custom_call.1} parent=111 // pred_fallthru
          _
        // Predicated region
        $region185: #{tpu_custom_call.1} parent=111 // pred_check
          %p1229 = pneg %p554
        $region186: #{tpu_custom_call.1} parent=111 // pred_check_branch
          %1231 = sbr.rel (%p1229) target = $region188
        $region187: #{tpu_custom_call.1} parent=111 // pred_region
          %1232 = dma.done [#allocation31], 16
        $region188: #{tpu_custom_call.1} parent=111 // pred_fallthru
          _
        // Predicated region
        $region189: #{tpu_custom_call.1} parent=111 // pred_check
          %p1233 = pneg %p575
        $region190: #{tpu_custom_call.1} parent=111 // pred_check_branch
          %1235 = sbr.rel (%p1233) target = $region192
        $region191: #{tpu_custom_call.1} parent=111 // pred_region
          %1236 = dma.done [#allocation34], 512
        $region192: #{tpu_custom_call.1} parent=111 // pred_fallthru
          _
        // Predicated region
        $region193: #{tpu_custom_call.1} parent=111 // pred_check
          %p1237 = pneg %p596
        $region194: #{tpu_custom_call.1} parent=111 // pred_check_branch
          %1239 = sbr.rel (%p1237) target = $region196
        $region195: #{tpu_custom_call.1} parent=111 // pred_region
          %1240 = dma.done [#allocation34], 16
        $region196: #{tpu_custom_call.1} parent=111 // pred_fallthru
          _
        // Predicated region
        $region197: #{tpu_custom_call.1} parent=111 // pred_check
          %p1241 = pneg %p617
        $region198: #{tpu_custom_call.1} parent=111 // pred_check_branch
          %1243 = sbr.rel (%p1241) target = $region200
        $region199: #{tpu_custom_call.1} parent=111 // pred_region
          %1244 = dma.done [#allocation37], 512
        $region200: #{tpu_custom_call.1} parent=111 // pred_fallthru
          _
        // Predicated region
        $region201: #{tpu_custom_call.1} parent=111 // pred_check
          %p1245 = pneg %p638
        $region202: #{tpu_custom_call.1} parent=111 // pred_check_branch
          %1247 = sbr.rel (%p1245) target = $region204
        $region203: #{tpu_custom_call.1} parent=111 // pred_region
          %1248 = dma.done [#allocation37], 16
        $region204: #{tpu_custom_call.1} parent=111 // pred_fallthru
          _
        %p1249 = pneg %p96
        %p1250 = pneg %p93
        %s1251 = sand.u32 %s63, 1
        %s1252 = scalar_lea.sflag [#allocation7], %s1251
        %s1253 = sand.u32 %s109, 1
        %s1254 = scalar_lea.vmem [#allocation6], %s1253
        %p1255 = pneg %p122
        %p1256 = pneg %p119
        %s1257 = sand.u32 %s63, 1
        %s1258 = scalar_lea.sflag [#allocation7], %s1257
        %s1259 = sand.u32 %s135, 1
        %s1260 = scalar_lea.vmem [#allocation8], %s1259
        %p1261 = pneg %p148
        %p1262 = pneg %p145
        %s1263 = sand.u32 %s63, 1
        %s1264 = scalar_lea.sflag [#allocation10], %s1263
        %s1265 = sand.u32 %s161, 1
        %s1266 = smul.addr %s1265, 32
        %s1267 = scalar_lea.vmem [#allocation9], %s1266
        %p1268 = pneg %p174
        %p1269 = pneg %p171
        %s1270 = sand.u32 %s63, 1
        %s1271 = scalar_lea.sflag [#allocation10], %s1270
        %s1272 = sand.u32 %s187, 1
        %s1273 = smul.addr %s1272, 2
        %s1274 = scalar_lea.vmem [#allocation11], %s1273
        %p1275 = pneg %p200
        %p1276 = pneg %p197
        %s1277 = sand.u32 %s63, 1
        %s1278 = scalar_lea.sflag [#allocation13], %s1277
        %s1279 = sand.u32 %s213, 1
        %s1280 = smul.addr %s1279, 32
        %s1281 = scalar_lea.vmem [#allocation12], %s1280
        %p1282 = pneg %p226
        %p1283 = pneg %p223
        %s1284 = sand.u32 %s63, 1
        %s1285 = scalar_lea.sflag [#allocation13], %s1284
        %s1286 = sand.u32 %s239, 1
        %s1287 = smul.addr %s1286, 2
        %s1288 = scalar_lea.vmem [#allocation14], %s1287
        %p1289 = pneg %p252
        %p1290 = pneg %p249
        %s1291 = sand.u32 %s63, 1
        %s1292 = scalar_lea.sflag [#allocation16], %s1291
        %s1293 = sand.u32 %s265, 1
        %s1294 = smul.addr %s1293, 32
        %s1295 = scalar_lea.vmem [#allocation15], %s1294
        %p1296 = pneg %p278
        %p1297 = pneg %p275
        %s1298 = sand.u32 %s63, 1
        %s1299 = scalar_lea.sflag [#allocation16], %s1298
        %s1300 = sand.u32 %s291, 1
        %s1301 = smul.addr %s1300, 2
        %s1302 = scalar_lea.vmem [#allocation17], %s1301
        %p1303 = pneg %p304
        %p1304 = pneg %p301
        %s1305 = sand.u32 %s63, 1
        %s1306 = scalar_lea.sflag [#allocation19], %s1305
        %s1307 = sand.u32 %s317, 1
        %s1308 = smul.addr %s1307, 32
        %s1309 = scalar_lea.vmem [#allocation18], %s1308
        %p1310 = pneg %p330
        %p1311 = pneg %p327
        %s1312 = sand.u32 %s63, 1
        %s1313 = scalar_lea.sflag [#allocation19], %s1312
        %s1314 = sand.u32 %s343, 1
        %s1315 = scalar_lea.vmem [#allocation20], %s1314
        %p1316 = pneg %p356
        %p1317 = pneg %p353
        %s1318 = sand.u32 %s63, 1
        %s1319 = scalar_lea.sflag [#allocation22], %s1318
        %s1320 = sand.u32 %s369, 1
        %s1321 = scalar_lea.vmem [#allocation21], %s1320
        %p1322 = pneg %p382
        %p1323 = pneg %p379
        %s1324 = sand.u32 %s63, 1
        %s1325 = scalar_lea.sflag [#allocation22], %s1324
        %s1326 = sand.u32 %s395, 1
        %s1327 = scalar_lea.vmem [#allocation23], %s1326
        %p1328 = pneg %p408
        %p1329 = pneg %p405
        %s1330 = sand.u32 %s63, 1
        %s1331 = scalar_lea.sflag [#allocation25], %s1330
        %s1332 = sand.u32 %s421, 1
        %s1333 = smul.addr %s1332, 16
        %s1334 = scalar_lea.vmem [#allocation24], %s1333
        %p1335 = pneg %p434
        %p1336 = pneg %p431
        %s1337 = sand.u32 %s63, 1
        %s1338 = scalar_lea.sflag [#allocation25], %s1337
        %s1339 = sand.u32 %s447, 1
        %s1340 = scalar_lea.vmem [#allocation26], %s1339
        %p1341 = pneg %p460
        %p1342 = pneg %p457
        %s1343 = sand.u32 %s63, 1
        %s1344 = scalar_lea.sflag [#allocation28], %s1343
        %s1345 = sand.u32 %s473, 1
        %s1346 = smul.addr %s1345, 64
        %s1347 = scalar_lea.vmem [#allocation27], %s1346
        %p1348 = pneg %p486
        %p1349 = pneg %p483
        %s1350 = sand.u32 %s63, 1
        %s1351 = scalar_lea.sflag [#allocation28], %s1350
        %s1352 = sand.u32 %s499, 1
        %s1353 = scalar_lea.vmem [#allocation29], %s1352
        %p1354 = pneg %p512
        %p1355 = pneg %p509
        %p1356 = pneg %p533
        %p1357 = pneg %p530
        %p1358 = pneg %p554
        %p1359 = pneg %p551
        %p1360 = pneg %p575
        %p1361 = pneg %p572
        %p1362 = pneg %p596
        %p1363 = pneg %p593
        %p1364 = pneg %p617
        %p1365 = pneg %p614
        %p1366 = pneg %p638
        %p1367 = pneg %p635
        %p1368 = pneg %p664
        %p1369 = pneg %p661
        %s1370 = smul.u32 2, %s67
        %p1372 = scmp.eq.s32.totalorder %s68, 0
        // Predicated region
        $region205: #{tpu_custom_call.1} parent=111 // pred_check
          %p1373 = pneg %p1372
        $region206: #{tpu_custom_call.1} parent=111 // pred_check_branch
          %1375 = sbr.rel (%p1373) target = $region208
        $region207: #{tpu_custom_call.1} parent=111 // pred_region
          %v1376 = vld [vmem:[#allocation3] sm:$0xff]
          %v1377 = vld [vmem:[#allocation3 + $0x8] sm:$0xff]
          %vm1378 = vcmask 261120
          %1379 = vst.msk [vmem:[#allocation2] sm:$0xff] %vm1378, %v1376
          %1380 = vst.msk [vmem:[#allocation2 + $0x8] sm:$0xff] %vm1378, %v1377
        $region208: #{tpu_custom_call.1} parent=111 // pred_fallthru
          _
        %v1381 = vld [vmem:[#allocation2] sm:$0xff]
        %v1382 = vld [vmem:[#allocation2 + $0x8] sm:$0xff]
        %v1383 = vld [vmem:[%s1091] sm:$0x1]
        %v1384 = vld [vmem:[%s1099] sm:$0x1]
        %vm1385 = vcmask 261120
        %v1386 = vsel %vm1385, %v1381, 0.0
        %1387 = vadd.xlane.f32.xlu0 %v1386
        %v1388 = vpop.xlane.xlu0 %1387
        %v1389 = vsel %vm1385, %v1382, 0.0
        %1390 = vadd.xlane.f32.xlu0 %v1389
        %v1391 = vpop.xlane.xlu0 %1390
        %v1392 = vrcp.pop 32.0
        %v1393 = vmul.f32 %v1388, %v1392
        %v1394 = vmul.f32 %v1391, %v1392
        %v1395 = vsub.f32 %v1381, %v1393
        %v1396 = vsub.f32 %v1382, %v1394
        %v1397 = vmul.f32 %v1395, %v1395
        %v1398 = vmul.f32 %v1396, %v1396
        %v1399 = vsel %vm1385, %v1397, 0.0
        %1400 = vadd.xlane.f32.xlu0 %v1399
        %v1401 = vpop.xlane.xlu0 %1400
        %v1402 = vsel %vm1385, %v1398, 0.0
        %1403 = vadd.xlane.f32.xlu0 %v1402
        %v1404 = vpop.xlane.xlu0 %1403
        %v1405 = vmul.f32 %v1401, %v1392
        %v1406 = vmul.f32 %v1404, %v1392
        %v1407 = vadd.f32 %v1405, 1e-05
        %v1408 = vadd.f32 %v1406, 1e-05
        %v1409 = vrsqrt.pop %v1407
        %v1410 = vrsqrt.pop %v1408
        %v1411 = vmul.f32 %v1395, %v1409
        %v1412 = vmul.f32 %v1396, %v1410
        %v1414 = vlaneseq
        %v1415 = vshrl.u32 %v1414, 7
        %v1416 = vsub.s32 0, %v1415
        %v1417 = vrot.slane %v1383, %v1416
        %v1419 = vmul.f32 %v1411, %v1417
        %v1420 = vmul.f32 %v1412, %v1417
        %v1422 = vlaneseq
        %v1423 = vshrl.u32 %v1422, 7
        %v1424 = vsub.s32 0, %v1423
        %v1425 = vrot.slane %v1384, %v1424
        %v1427 = vadd.f32 %v1419, %v1425
        %v1428 = vadd.f32 %v1420, %v1425
        %v1429 = vpack.c.bf16 %v1428, %v1427
        %v1430 = vld [vmem:[%s1108] sm:$0xf]
        %v1431 = vld [vmem:[%s1108 + $0x4] sm:$0xf]
        %v1432 = vld [vmem:[%s1108 + $0x8] sm:$0xf]
        %v1433 = vld [vmem:[%s1108 + $0xc] sm:$0xf]
        %v1434 = vld [vmem:[%s1117] sm:$0x1]
        %v1436 = vlaneseq
        %v1437 = vshrl.u32 %v1436, 7
        %v1438 = vsub.s32 0, %v1437
        %v1439 = vrot.slane %v1434, %v1438
        %v1445 = vunpack.c.l.b16 %v1430
        %v1446 = vunpack.c.l.b16 %v1431
        %v1447 = vunpack.c.l.b16 %v1432
        %v1448 = vunpack.c.l.b16 %v1433
        %v1449 = vpack.c.b16 %v1446, %v1445
        %v1450 = vpack.c.b16 %v1448, %v1447
        %v1454 = vsel %vm1385, %v1429, 0
        %1456 = vmatprep.subr.bf16.mxu0 0
        %1457 = vmatpush1.bf16.msra.mxu0 %v1449
        %1458 = vmatprep.subr.bf16.mxu0 0
        %1459 = vmatpush1.bf16.msra.mxu0 %v1450
        %1460 = vmatprep.subr.bf16.mxu0 0
        %1461 = vmatpush1.bf16.msra.mxu0 0
        %1462 = vmatprep.subr.bf16.mxu0 0
        %1463 = vmatpush1.bf16.msra.mxu0 0
        %1464 = vmatprep.subr.bf16.mxu0 0
        %1465 = vmatpush1.bf16.msra.mxu0 0
        %1466 = vmatprep.subr.bf16.mxu0 0
        %1467 = vmatpush1.bf16.msra.mxu0 0
        %1468 = vmatprep.subr.bf16.mxu0 0
        %1469 = vmatpush1.bf16.msra.mxu0 0
        %1470 = vmatprep.subr.bf16.mxu0 0
        %1471 = vmatpush1.bf16.msra.mxu0 0
        %1472 = vmatprep.subr.bf16.mxu0 0
        %1473 = vmatpush1.bf16.msra.mxu0 0
        %1474 = vmatprep.subr.bf16.mxu0 0
        %1475 = vmatpush1.bf16.msra.mxu0 0
        %1476 = vmatprep.subr.bf16.mxu0 0
        %1477 = vmatpush1.bf16.msra.mxu0 0
        %1478 = vmatprep.subr.bf16.mxu0 0
        %1479 = vmatpush1.bf16.msra.mxu0 0
        %1480 = vmatprep.subr.bf16.mxu0 0
        %1481 = vmatpush1.bf16.msra.mxu0 0
        %1482 = vmatprep.subr.bf16.mxu0 0
        %1483 = vmatpush1.bf16.msra.mxu0 0
        %1484 = vmatprep.subr.bf16.mxu0 0
        %1485 = vmatpush1.bf16.msra.mxu0 0
        %1486 = vmatprep.subr.bf16.mxu0 0
        %1487 = vmatpush1.bf16.msra.mxu0 0
        %1488 = vmatprep.mubr.bf16.mxu0 0
        %1489 = vmatmul.mubr.bf16.gmra.mrb[0].mxu0 %v1454
        %v1490 = vpop.f32.mrb[0].mxu0
        %v1491 = vadd.f32 %v1439, %v1490
        %v1492 = vpop.f32.mrb[0].mxu0
        %v1493 = vpop.f32.mrb[0].mxu0
        %v1494 = vadd.f32 %v1439, %v1493
        %v1495 = vpop.f32.mrb[0].mxu0
        %1496 = vdwg.mxu0
        %v1497 = vmul.f32 %v1491, 0.35355338
        %v1498 = vmul.f32 %v1494, 0.35355338
        %v1499 = vld [vmem:[%s1126] sm:$0xf]
        %v1500 = vld [vmem:[%s1126 + $0x4] sm:$0xf]
        %v1501 = vld [vmem:[%s1126 + $0x8] sm:$0xf]
        %v1502 = vld [vmem:[%s1126 + $0xc] sm:$0xf]
        %v1503 = vld [vmem:[%s1135] sm:$0x1]
        %v1505 = vlaneseq
        %v1506 = vshrl.u32 %v1505, 7
        %v1507 = vsub.s32 0, %v1506
        %v1508 = vrot.slane %v1503, %v1507
        %v1514 = vunpack.c.l.b16 %v1499
        %v1515 = vunpack.c.l.b16 %v1500
        %v1516 = vunpack.c.l.b16 %v1501
        %v1517 = vunpack.c.l.b16 %v1502
        %v1518 = vpack.c.b16 %v1515, %v1514
        %v1519 = vpack.c.b16 %v1517, %v1516
        %1522 = vmatprep.subr.bf16.mxu0 0
        %1523 = vmatpush1.bf16.msra.mxu0 %v1518
        %1524 = vmatprep.subr.bf16.mxu0 0
        %1525 = vmatpush1.bf16.msra.mxu0 %v1519
        %1526 = vmatprep.subr.bf16.mxu0 0
        %1527 = vmatpush1.bf16.msra.mxu0 0
        %1528 = vmatprep.subr.bf16.mxu0 0
        %1529 = vmatpush1.bf16.msra.mxu0 0
        %1530 = vmatprep.subr.bf16.mxu0 0
        %1531 = vmatpush1.bf16.msra.mxu0 0
        %1532 = vmatprep.subr.bf16.mxu0 0
        %1533 = vmatpush1.bf16.msra.mxu0 0
        %1534 = vmatprep.subr.bf16.mxu0 0
        %1535 = vmatpush1.bf16.msra.mxu0 0
        %1536 = vmatprep.subr.bf16.mxu0 0
        %1537 = vmatpush1.bf16.msra.mxu0 0
        %1538 = vmatprep.subr.bf16.mxu0 0
        %1539 = vmatpush1.bf16.msra.mxu0 0
        %1540 = vmatprep.subr.bf16.mxu0 0
        %1541 = vmatpush1.bf16.msra.mxu0 0
        %1542 = vmatprep.subr.bf16.mxu0 0
        %1543 = vmatpush1.bf16.msra.mxu0 0
        %1544 = vmatprep.subr.bf16.mxu0 0
        %1545 = vmatpush1.bf16.msra.mxu0 0
        %1546 = vmatprep.subr.bf16.mxu0 0
        %1547 = vmatpush1.bf16.msra.mxu0 0
        %1548 = vmatprep.subr.bf16.mxu0 0
        %1549 = vmatpush1.bf16.msra.mxu0 0
        %1550 = vmatprep.subr.bf16.mxu0 0
        %1551 = vmatpush1.bf16.msra.mxu0 0
        %1552 = vmatprep.subr.bf16.mxu0 0
        %1553 = vmatpush1.bf16.msra.mxu0 0
        %1554 = vmatprep.mubr.bf16.mxu0 0
        %1555 = vmatmul.mubr.bf16.gmra.mrb[0].mxu0 %v1454
        %v1556 = vpop.f32.mrb[0].mxu0
        %v1557 = vadd.f32 %v1508, %v1556
        %v1558 = vpop.f32.mrb[0].mxu0
        %v1559 = vpop.f32.mrb[0].mxu0
        %v1560 = vadd.f32 %v1508, %v1559
        %v1561 = vpop.f32.mrb[0].mxu0
        %1562 = vdwg.mxu0
        %v1563 = vld [vmem:[%s1144] sm:$0xf]
        %v1564 = vld [vmem:[%s1144 + $0x4] sm:$0xf]
        %v1565 = vld [vmem:[%s1144 + $0x8] sm:$0xf]
        %v1566 = vld [vmem:[%s1144 + $0xc] sm:$0xf]
        %v1567 = vld [vmem:[%s1153] sm:$0x1]
        %v1569 = vlaneseq
        %v1570 = vshrl.u32 %v1569, 7
        %v1571 = vsub.s32 0, %v1570
        %v1572 = vrot.slane %v1567, %v1571
        %v1578 = vunpack.c.l.b16 %v1563
        %v1579 = vunpack.c.l.b16 %v1564
        %v1580 = vunpack.c.l.b16 %v1565
        %v1581 = vunpack.c.l.b16 %v1566
        %v1582 = vpack.c.b16 %v1579, %v1578
        %v1583 = vpack.c.b16 %v1581, %v1580
        %1586 = vmatprep.subr.bf16.mxu0 0
        %1587 = vmatpush1.bf16.msra.mxu0 %v1582
        %1588 = vmatprep.subr.bf16.mxu0 0
        %1589 = vmatpush1.bf16.msra.mxu0 %v1583
        %1590 = vmatprep.subr.bf16.mxu0 0
        %1591 = vmatpush1.bf16.msra.mxu0 0
        %1592 = vmatprep.subr.bf16.mxu0 0
        %1593 = vmatpush1.bf16.msra.mxu0 0
        %1594 = vmatprep.subr.bf16.mxu0 0
        %1595 = vmatpush1.bf16.msra.mxu0 0
        %1596 = vmatprep.subr.bf16.mxu0 0
        %1597 = vmatpush1.bf16.msra.mxu0 0
        %1598 = vmatprep.subr.bf16.mxu0 0
        %1599 = vmatpush1.bf16.msra.mxu0 0
        %1600 = vmatprep.subr.bf16.mxu0 0
        %1601 = vmatpush1.bf16.msra.mxu0 0
        %1602 = vmatprep.subr.bf16.mxu0 0
        %1603 = vmatpush1.bf16.msra.mxu0 0
        %1604 = vmatprep.subr.bf16.mxu0 0
        %1605 = vmatpush1.bf16.msra.mxu0 0
        %1606 = vmatprep.subr.bf16.mxu0 0
        %1607 = vmatpush1.bf16.msra.mxu0 0
        %1608 = vmatprep.subr.bf16.mxu0 0
        %1609 = vmatpush1.bf16.msra.mxu0 0
        %1610 = vmatprep.subr.bf16.mxu0 0
        %1611 = vmatpush1.bf16.msra.mxu0 0
        %1612 = vmatprep.subr.bf16.mxu0 0
        %1613 = vmatpush1.bf16.msra.mxu0 0
        %1614 = vmatprep.subr.bf16.mxu0 0
        %1615 = vmatpush1.bf16.msra.mxu0 0
        %1616 = vmatprep.subr.bf16.mxu0 0
        %1617 = vmatpush1.bf16.msra.mxu0 0
        %1618 = vmatprep.mubr.bf16.mxu0 0
        %1619 = vmatmul.mubr.bf16.gmra.mrb[0].mxu0 %v1454
        %v1620 = vpop.f32.mrb[0].mxu0
        %v1621 = vadd.f32 %v1572, %v1620
        %v1622 = vpop.f32.mrb[0].mxu0
        %v1623 = vpop.f32.mrb[0].mxu0
        %v1624 = vadd.f32 %v1572, %v1623
        %v1625 = vpop.f32.mrb[0].mxu0
        %1626 = vdwg.mxu0
        %v1627 = vpack.c.bf16 %v1497, %v1497
        %v1628 = vpack.c.bf16 %v1498, %v1498
        %v1629 = vpack.c.bf16 %v1557, %v1557
        %v1630 = vpack.c.bf16 %v1560, %v1560
        %vm1631 = vcmask 64512
        %v1633 = vsel %vm1631, %v1627, 0
        %v1636 = vsel %vm1631, %v1629, 0
        %1638 = vmatprep.subr.bf16.mxu0 0
        %1639 = vmatpush1.bf16.xpose.msra.mxu0 %v1636
        %1640 = vmatprep.subr.bf16.mxu0 0
        %1641 = vmatpush1.bf16.xpose.msra.mxu0 0
        %1642 = vmatprep.subr.bf16.mxu0 0
        %1643 = vmatpush1.bf16.xpose.msra.mxu0 0
        %1644 = vmatprep.subr.bf16.mxu0 0
        %1645 = vmatpush1.bf16.xpose.msra.mxu0 0
        %1646 = vmatprep.subr.bf16.mxu0 0
        %1647 = vmatpush1.bf16.xpose.msra.mxu0 0
        %1648 = vmatprep.subr.bf16.mxu0 0
        %1649 = vmatpush1.bf16.xpose.msra.mxu0 0
        %1650 = vmatprep.subr.bf16.mxu0 0
        %1651 = vmatpush1.bf16.xpose.msra.mxu0 0
        %1652 = vmatprep.subr.bf16.mxu0 0
        %1653 = vmatpush1.bf16.xpose.msra.mxu0 0
        %1654 = vmatprep.subr.bf16.mxu0 0
        %1655 = vmatpush1.bf16.xpose.msra.mxu0 0
        %1656 = vmatprep.subr.bf16.mxu0 0
        %1657 = vmatpush1.bf16.xpose.msra.mxu0 0
        %1658 = vmatprep.subr.bf16.mxu0 0
        %1659 = vmatpush1.bf16.xpose.msra.mxu0 0
        %1660 = vmatprep.subr.bf16.mxu0 0
        %1661 = vmatpush1.bf16.xpose.msra.mxu0 0
        %1662 = vmatprep.subr.bf16.mxu0 0
        %1663 = vmatpush1.bf16.xpose.msra.mxu0 0
        %1664 = vmatprep.subr.bf16.mxu0 0
        %1665 = vmatpush1.bf16.xpose.msra.mxu0 0
        %1666 = vmatprep.subr.bf16.mxu0 0
        %1667 = vmatpush1.bf16.xpose.msra.mxu0 0
        %1668 = vmatprep.subr.bf16.mxu0 0
        %1669 = vmatpush1.bf16.xpose.msra.mxu0 0
        %1670 = vmatprep.mubr.bf16.mxu0 0
        %1671 = vmatmul.mubr.bf16.gmra.mrb[0].mxu0 %v1633
        %v1672 = vpop.f32.mrb[0].mxu0
        %v1673 = vadd.f32 0.0, %v1672
        %v1674 = vpop.f32.mrb[0].mxu0
        %v1675 = vpop.f32.mrb[0].mxu0
        %v1676 = vpop.f32.mrb[0].mxu0
        %1677 = vdwg.mxu0
        %v1679 = vsel %vm1631, %v1628, 0
        %v1682 = vsel %vm1631, %v1630, 0
        %1684 = vmatprep.subr.bf16.mxu0 0
        %1685 = vmatpush1.bf16.xpose.msra.mxu0 %v1682
        %1686 = vmatprep.subr.bf16.mxu0 0
        %1687 = vmatpush1.bf16.xpose.msra.mxu0 0
        %1688 = vmatprep.subr.bf16.mxu0 0
        %1689 = vmatpush1.bf16.xpose.msra.mxu0 0
        %1690 = vmatprep.subr.bf16.mxu0 0
        %1691 = vmatpush1.bf16.xpose.msra.mxu0 0
        %1692 = vmatprep.subr.bf16.mxu0 0
        %1693 = vmatpush1.bf16.xpose.msra.mxu0 0
        %1694 = vmatprep.subr.bf16.mxu0 0
        %1695 = vmatpush1.bf16.xpose.msra.mxu0 0
        %1696 = vmatprep.subr.bf16.mxu0 0
        %1697 = vmatpush1.bf16.xpose.msra.mxu0 0
        %1698 = vmatprep.subr.bf16.mxu0 0
        %1699 = vmatpush1.bf16.xpose.msra.mxu0 0
        %1700 = vmatprep.subr.bf16.mxu0 0
        %1701 = vmatpush1.bf16.xpose.msra.mxu0 0
        %1702 = vmatprep.subr.bf16.mxu0 0
        %1703 = vmatpush1.bf16.xpose.msra.mxu0 0
        %1704 = vmatprep.subr.bf16.mxu0 0
        %1705 = vmatpush1.bf16.xpose.msra.mxu0 0
        %1706 = vmatprep.subr.bf16.mxu0 0
        %1707 = vmatpush1.bf16.xpose.msra.mxu0 0
        %1708 = vmatprep.subr.bf16.mxu0 0
        %1709 = vmatpush1.bf16.xpose.msra.mxu0 0
        %1710 = vmatprep.subr.bf16.mxu0 0
        %1711 = vmatpush1.bf16.xpose.msra.mxu0 0
        %1712 = vmatprep.subr.bf16.mxu0 0
        %1713 = vmatpush1.bf16.xpose.msra.mxu0 0
        %1714 = vmatprep.subr.bf16.mxu0 0
        %1715 = vmatpush1.bf16.xpose.msra.mxu0 0
        %1716 = vmatprep.mubr.bf16.mxu0 0
        %1717 = vmatmul.mubr.bf16.gmra.mrb[0].mxu0 %v1679
        %v1718 = vpop.f32.mrb[0].mxu0
        %v1719 = vadd.f32 0.0, %v1718
        %v1720 = vpop.f32.mrb[0].mxu0
        %v1721 = vpop.f32.mrb[0].mxu0
        %v1722 = vpop.f32.mrb[0].mxu0
        %1723 = vdwg.mxu0
        %v1724 = vsel %vm1631, %v1673, -inf
        %1725 = vmax.xlane.f32.xlu0 %v1724
        %v1726 = vpop.xlane.xlu0 %1725
        %v1727 = vsel %vm1631, %v1719, -inf
        %1728 = vmax.xlane.f32.xlu0 %v1727
        %v1729 = vpop.xlane.xlu0 %1728
        %v1730 = vsub.f32 %v1673, %v1726
        %v1731 = vsub.f32 %v1719, %v1729
        %v1732 = vmul.f32 %v1730, 1.442695
        %v1733 = vpow.pop %v1732
        %v1734 = vmul.f32 %v1731, 1.442695
        %v1735 = vpow.pop %v1734
        %v1736 = vsel %vm1631, %v1733, 0.0
        %1737 = vadd.xlane.f32.xlu0 %v1736
        %v1738 = vpop.xlane.xlu0 %1737
        %v1739 = vsel %vm1631, %v1735, 0.0
        %1740 = vadd.xlane.f32.xlu0 %v1739
        %v1741 = vpop.xlane.xlu0 %1740
        %v1742 = vrcp.pop %v1738
        %v1743 = vrcp.pop %v1741
        %v1744 = vmul.f32 %v1733, %v1742
        %v1745 = vmul.f32 %v1735, %v1743
        %v1746 = vpack.c.bf16 %v1744, %v1744
        %v1747 = vpack.c.bf16 %v1745, %v1745
        %v1748 = vpack.c.bf16 %v1621, %v1621
        %v1749 = vpack.c.bf16 %v1624, %v1624
        %v1751 = vsel %vm1631, %v1746, 0
        %vm1753 = vcmask 1043456
        %v1755 = vsel %vm1753, %v1748, 0
        %1757 = vmatprep.subr.bf16.mxu0 0
        %1758 = vmatpush1.bf16.msra.mxu0 %v1755
        %1759 = vmatprep.subr.bf16.mxu0 0
        %1760 = vmatpush1.bf16.msra.mxu0 0
        %1761 = vmatprep.subr.bf16.mxu0 0
        %1762 = vmatpush1.bf16.msra.mxu0 0
        %1763 = vmatprep.subr.bf16.mxu0 0
        %1764 = vmatpush1.bf16.msra.mxu0 0
        %1765 = vmatprep.subr.bf16.mxu0 0
        %1766 = vmatpush1.bf16.msra.mxu0 0
        %1767 = vmatprep.subr.bf16.mxu0 0
        %1768 = vmatpush1.bf16.msra.mxu0 0
        %1769 = vmatprep.subr.bf16.mxu0 0
        %1770 = vmatpush1.bf16.msra.mxu0 0
        %1771 = vmatprep.subr.bf16.mxu0 0
        %1772 = vmatpush1.bf16.msra.mxu0 0
        %1773 = vmatprep.subr.bf16.mxu0 0
        %1774 = vmatpush1.bf16.msra.mxu0 0
        %1775 = vmatprep.subr.bf16.mxu0 0
        %1776 = vmatpush1.bf16.msra.mxu0 0
        %1777 = vmatprep.subr.bf16.mxu0 0
        %1778 = vmatpush1.bf16.msra.mxu0 0
        %1779 = vmatprep.subr.bf16.mxu0 0
        %1780 = vmatpush1.bf16.msra.mxu0 0
        %1781 = vmatprep.subr.bf16.mxu0 0
        %1782 = vmatpush1.bf16.msra.mxu0 0
        %1783 = vmatprep.subr.bf16.mxu0 0
        %1784 = vmatpush1.bf16.msra.mxu0 0
        %1785 = vmatprep.subr.bf16.mxu0 0
        %1786 = vmatpush1.bf16.msra.mxu0 0
        %1787 = vmatprep.subr.bf16.mxu0 0
        %1788 = vmatpush1.bf16.msra.mxu0 0
        %1789 = vmatprep.mubr.bf16.mxu0 0
        %1790 = vmatmul.mubr.bf16.gmra.mrb[0].mxu0 %v1751
        %v1791 = vpop.f32.mrb[0].mxu0
        %v1792 = vadd.f32 0.0, %v1791
        %v1793 = vpop.f32.mrb[0].mxu0
        %v1794 = vpop.f32.mrb[0].mxu0
        %v1795 = vpop.f32.mrb[0].mxu0
        %1796 = vdwg.mxu0
        %v1798 = vsel %vm1631, %v1747, 0
        %v1801 = vsel %vm1753, %v1749, 0
        %1803 = vmatprep.subr.bf16.mxu0 0
        %1804 = vmatpush1.bf16.msra.mxu0 %v1801
        %1805 = vmatprep.subr.bf16.mxu0 0
        %1806 = vmatpush1.bf16.msra.mxu0 0
        %1807 = vmatprep.subr.bf16.mxu0 0
        %1808 = vmatpush1.bf16.msra.mxu0 0
        %1809 = vmatprep.subr.bf16.mxu0 0
        %1810 = vmatpush1.bf16.msra.mxu0 0
        %1811 = vmatprep.subr.bf16.mxu0 0
        %1812 = vmatpush1.bf16.msra.mxu0 0
        %1813 = vmatprep.subr.bf16.mxu0 0
        %1814 = vmatpush1.bf16.msra.mxu0 0
        %1815 = vmatprep.subr.bf16.mxu0 0
        %1816 = vmatpush1.bf16.msra.mxu0 0
        %1817 = vmatprep.subr.bf16.mxu0 0
        %1818 = vmatpush1.bf16.msra.mxu0 0
        %1819 = vmatprep.subr.bf16.mxu0 0
        %1820 = vmatpush1.bf16.msra.mxu0 0
        %1821 = vmatprep.subr.bf16.mxu0 0
        %1822 = vmatpush1.bf16.msra.mxu0 0
        %1823 = vmatprep.subr.bf16.mxu0 0
        %1824 = vmatpush1.bf16.msra.mxu0 0
        %1825 = vmatprep.subr.bf16.mxu0 0
        %1826 = vmatpush1.bf16.msra.mxu0 0
        %1827 = vmatprep.subr.bf16.mxu0 0
        %1828 = vmatpush1.bf16.msra.mxu0 0
        %1829 = vmatprep.subr.bf16.mxu0 0
        %1830 = vmatpush1.bf16.msra.mxu0 0
        %1831 = vmatprep.subr.bf16.mxu0 0
        %1832 = vmatpush1.bf16.msra.mxu0 0
        %1833 = vmatprep.subr.bf16.mxu0 0
        %1834 = vmatpush1.bf16.msra.mxu0 0
        %1835 = vmatprep.mubr.bf16.mxu0 0
        %1836 = vmatmul.mubr.bf16.gmra.mrb[0].mxu0 %v1798
        %v1837 = vpop.f32.mrb[0].mxu0
        %v1838 = vadd.f32 0.0, %v1837
        %v1839 = vpop.f32.mrb[0].mxu0
        %v1840 = vpop.f32.mrb[0].mxu0
        %v1841 = vpop.f32.mrb[0].mxu0
        %1842 = vdwg.mxu0
        %v1843 = vpack.c.bf16 %v1838, %v1792
        %v1844 = vld [vmem:[%s1162] sm:$0xf]
        %v1845 = vld [vmem:[%s1162 + $0x4] sm:$0xf]
        %v1846 = vld [vmem:[%s1162 + $0x8] sm:$0xf]
        %v1847 = vld [vmem:[%s1162 + $0xc] sm:$0xf]
        %s1848 = scalar_lea.vmem %s1108, 16 [#allocation9]
        %v1849 = vld [vmem:[%s1848] sm:$0xf]
        %v1850 = vld [vmem:[%s1848 + $0x4] sm:$0xf]
        %v1851 = vld [vmem:[%s1848 + $0x8] sm:$0xf]
        %v1852 = vld [vmem:[%s1848 + $0xc] sm:$0xf]
        %s1853 = scalar_lea.vmem %s1117, 1 [#allocation11]
        %v1854 = vld [vmem:[%s1853] sm:$0x1]
        %v1856 = vlaneseq
        %v1857 = vshrl.u32 %v1856, 7
        %v1858 = vsub.s32 0, %v1857
        %v1859 = vrot.slane %v1854, %v1858
        %v1865 = vunpack.c.l.b16 %v1849
        %v1866 = vunpack.c.l.b16 %v1850
        %v1867 = vunpack.c.l.b16 %v1851
        %v1868 = vunpack.c.l.b16 %v1852
        %v1869 = vpack.c.b16 %v1866, %v1865
        %v1870 = vpack.c.b16 %v1868, %v1867
        %1873 = vmatprep.subr.bf16.mxu0 0
        %1874 = vmatpush1.bf16.msra.mxu0 %v1869
        %1875 = vmatprep.subr.bf16.mxu0 0
        %1876 = vmatpush1.bf16.msra.mxu0 %v1870
        %1877 = vmatprep.subr.bf16.mxu0 0
        %1878 = vmatpush1.bf16.msra.mxu0 0
        %1879 = vmatprep.subr.bf16.mxu0 0
        %1880 = vmatpush1.bf16.msra.mxu0 0
        %1881 = vmatprep.subr.bf16.mxu0 0
        %1882 = vmatpush1.bf16.msra.mxu0 0
        %1883 = vmatprep.subr.bf16.mxu0 0
        %1884 = vmatpush1.bf16.msra.mxu0 0
        %1885 = vmatprep.subr.bf16.mxu0 0
        %1886 = vmatpush1.bf16.msra.mxu0 0
        %1887 = vmatprep.subr.bf16.mxu0 0
        %1888 = vmatpush1.bf16.msra.mxu0 0
        %1889 = vmatprep.subr.bf16.mxu0 0
        %1890 = vmatpush1.bf16.msra.mxu0 0
        %1891 = vmatprep.subr.bf16.mxu0 0
        %1892 = vmatpush1.bf16.msra.mxu0 0
        %1893 = vmatprep.subr.bf16.mxu0 0
        %1894 = vmatpush1.bf16.msra.mxu0 0
        %1895 = vmatprep.subr.bf16.mxu0 0
        %1896 = vmatpush1.bf16.msra.mxu0 0
        %1897 = vmatprep.subr.bf16.mxu0 0
        %1898 = vmatpush1.bf16.msra.mxu0 0
        %1899 = vmatprep.subr.bf16.mxu0 0
        %1900 = vmatpush1.bf16.msra.mxu0 0
        %1901 = vmatprep.subr.bf16.mxu0 0
        %1902 = vmatpush1.bf16.msra.mxu0 0
        %1903 = vmatprep.subr.bf16.mxu0 0
        %1904 = vmatpush1.bf16.msra.mxu0 0
        %1905 = vmatprep.mubr.bf16.mxu0 0
        %1906 = vmatmul.mubr.bf16.gmra.mrb[0].mxu0 %v1454
        %v1907 = vpop.f32.mrb[0].mxu0
        %v1908 = vadd.f32 %v1859, %v1907
        %v1909 = vpop.f32.mrb[0].mxu0
        %v1910 = vpop.f32.mrb[0].mxu0
        %v1911 = vadd.f32 %v1859, %v1910
        %v1912 = vpop.f32.mrb[0].mxu0
        %1913 = vdwg.mxu0
        %v1914 = vmul.f32 %v1908, 0.35355338
        %v1915 = vmul.f32 %v1911, 0.35355338
        %s1916 = scalar_lea.vmem %s1126, 16 [#allocation12]
        %v1917 = vld [vmem:[%s1916] sm:$0xf]
        %v1918 = vld [vmem:[%s1916 + $0x4] sm:$0xf]
        %v1919 = vld [vmem:[%s1916 + $0x8] sm:$0xf]
        %v1920 = vld [vmem:[%s1916 + $0xc] sm:$0xf]
        %s1921 = scalar_lea.vmem %s1135, 1 [#allocation14]
        %v1922 = vld [vmem:[%s1921] sm:$0x1]
        %v1924 = vlaneseq
        %v1925 = vshrl.u32 %v1924, 7
        %v1926 = vsub.s32 0, %v1925
        %v1927 = vrot.slane %v1922, %v1926
        %v1933 = vunpack.c.l.b16 %v1917
        %v1934 = vunpack.c.l.b16 %v1918
        %v1935 = vunpack.c.l.b16 %v1919
        %v1936 = vunpack.c.l.b16 %v1920
        %v1937 = vpack.c.b16 %v1934, %v1933
        %v1938 = vpack.c.b16 %v1936, %v1935
        %1941 = vmatprep.subr.bf16.mxu0 0
        %1942 = vmatpush1.bf16.msra.mxu0 %v1937
        %1943 = vmatprep.subr.bf16.mxu0 0
        %1944 = vmatpush1.bf16.msra.mxu0 %v1938
        %1945 = vmatprep.subr.bf16.mxu0 0
        %1946 = vmatpush1.bf16.msra.mxu0 0
        %1947 = vmatprep.subr.bf16.mxu0 0
        %1948 = vmatpush1.bf16.msra.mxu0 0
        %1949 = vmatprep.subr.bf16.mxu0 0
        %1950 = vmatpush1.bf16.msra.mxu0 0
        %1951 = vmatprep.subr.bf16.mxu0 0
        %1952 = vmatpush1.bf16.msra.mxu0 0
        %1953 = vmatprep.subr.bf16.mxu0 0
        %1954 = vmatpush1.bf16.msra.mxu0 0
        %1955 = vmatprep.subr.bf16.mxu0 0
        %1956 = vmatpush1.bf16.msra.mxu0 0
        %1957 = vmatprep.subr.bf16.mxu0 0
        %1958 = vmatpush1.bf16.msra.mxu0 0
        %1959 = vmatprep.subr.bf16.mxu0 0
        %1960 = vmatpush1.bf16.msra.mxu0 0
        %1961 = vmatprep.subr.bf16.mxu0 0
        %1962 = vmatpush1.bf16.msra.mxu0 0
        %1963 = vmatprep.subr.bf16.mxu0 0
        %1964 = vmatpush1.bf16.msra.mxu0 0
        %1965 = vmatprep.subr.bf16.mxu0 0
        %1966 = vmatpush1.bf16.msra.mxu0 0
        %1967 = vmatprep.subr.bf16.mxu0 0
        %1968 = vmatpush1.bf16.msra.mxu0 0
        %1969 = vmatprep.subr.bf16.mxu0 0
        %1970 = vmatpush1.bf16.msra.mxu0 0
        %1971 = vmatprep.subr.bf16.mxu0 0
        %1972 = vmatpush1.bf16.msra.mxu0 0
        %1973 = vmatprep.mubr.bf16.mxu0 0
        %1974 = vmatmul.mubr.bf16.gmra.mrb[0].mxu0 %v1454
        %v1975 = vpop.f32.mrb[0].mxu0
        %v1976 = vadd.f32 %v1927, %v1975
        %v1977 = vpop.f32.mrb[0].mxu0
        %v1978 = vpop.f32.mrb[0].mxu0
        %v1979 = vadd.f32 %v1927, %v1978
        %v1980 = vpop.f32.mrb[0].mxu0
        %1981 = vdwg.mxu0
        %s1982 = scalar_lea.vmem %s1144, 16 [#allocation15]
        %v1983 = vld [vmem:[%s1982] sm:$0xf]
        %v1984 = vld [vmem:[%s1982 + $0x4] sm:$0xf]
        %v1985 = vld [vmem:[%s1982 + $0x8] sm:$0xf]
        %v1986 = vld [vmem:[%s1982 + $0xc] sm:$0xf]
        %s1987 = scalar_lea.vmem %s1153, 1 [#allocation17]
        %v1988 = vld [vmem:[%s1987] sm:$0x1]
        %v1990 = vlaneseq
        %v1991 = vshrl.u32 %v1990, 7
        %v1992 = vsub.s32 0, %v1991
        %v1993 = vrot.slane %v1988, %v1992
        %v1999 = vunpack.c.l.b16 %v1983
        %v2000 = vunpack.c.l.b16 %v1984
        %v2001 = vunpack.c.l.b16 %v1985
        %v2002 = vunpack.c.l.b16 %v1986
        %v2003 = vpack.c.b16 %v2000, %v1999
        %v2004 = vpack.c.b16 %v2002, %v2001
        %2007 = vmatprep.subr.bf16.mxu0 0
        %2008 = vmatpush1.bf16.msra.mxu0 %v2003
        %2009 = vmatprep.subr.bf16.mxu0 0
        %2010 = vmatpush1.bf16.msra.mxu0 %v2004
        %2011 = vmatprep.subr.bf16.mxu0 0
        %2012 = vmatpush1.bf16.msra.mxu0 0
        %2013 = vmatprep.subr.bf16.mxu0 0
        %2014 = vmatpush1.bf16.msra.mxu0 0
        %2015 = vmatprep.subr.bf16.mxu0 0
        %2016 = vmatpush1.bf16.msra.mxu0 0
        %2017 = vmatprep.subr.bf16.mxu0 0
        %2018 = vmatpush1.bf16.msra.mxu0 0
        %2019 = vmatprep.subr.bf16.mxu0 0
        %2020 = vmatpush1.bf16.msra.mxu0 0
        %2021 = vmatprep.subr.bf16.mxu0 0
        %2022 = vmatpush1.bf16.msra.mxu0 0
        %2023 = vmatprep.subr.bf16.mxu0 0
        %2024 = vmatpush1.bf16.msra.mxu0 0
        %2025 = vmatprep.subr.bf16.mxu0 0
        %2026 = vmatpush1.bf16.msra.mxu0 0
        %2027 = vmatprep.subr.bf16.mxu0 0
        %2028 = vmatpush1.bf16.msra.mxu0 0
        %2029 = vmatprep.subr.bf16.mxu0 0
        %2030 = vmatpush1.bf16.msra.mxu0 0
        %2031 = vmatprep.subr.bf16.mxu0 0
        %2032 = vmatpush1.bf16.msra.mxu0 0
        %2033 = vmatprep.subr.bf16.mxu0 0
        %2034 = vmatpush1.bf16.msra.mxu0 0
        %2035 = vmatprep.subr.bf16.mxu0 0
        %2036 = vmatpush1.bf16.msra.mxu0 0
        %2037 = vmatprep.subr.bf16.mxu0 0
        %2038 = vmatpush1.bf16.msra.mxu0 0
        %2039 = vmatprep.mubr.bf16.mxu0 0
        %2040 = vmatmul.mubr.bf16.gmra.mrb[0].mxu0 %v1454
        %v2041 = vpop.f32.mrb[0].mxu0
        %v2042 = vadd.f32 %v1993, %v2041
        %v2043 = vpop.f32.mrb[0].mxu0
        %v2044 = vpop.f32.mrb[0].mxu0
        %v2045 = vadd.f32 %v1993, %v2044
        %v2046 = vpop.f32.mrb[0].mxu0
        %2047 = vdwg.mxu0
        %v2048 = vpack.c.bf16 %v1914, %v1914
        %v2049 = vpack.c.bf16 %v1915, %v1915
        %v2050 = vpack.c.bf16 %v1976, %v1976
        %v2051 = vpack.c.bf16 %v1979, %v1979
        %v2053 = vsel %vm1631, %v2048, 0
        %v2056 = vsel %vm1631, %v2050, 0
        %2058 = vmatprep.subr.bf16.mxu0 0
        %2059 = vmatpush1.bf16.xpose.msra.mxu0 %v2056
        %2060 = vmatprep.subr.bf16.mxu0 0
        %2061 = vmatpush1.bf16.xpose.msra.mxu0 0
        %2062 = vmatprep.subr.bf16.mxu0 0
        %2063 = vmatpush1.bf16.xpose.msra.mxu0 0
        %2064 = vmatprep.subr.bf16.mxu0 0
        %2065 = vmatpush1.bf16.xpose.msra.mxu0 0
        %2066 = vmatprep.subr.bf16.mxu0 0
        %2067 = vmatpush1.bf16.xpose.msra.mxu0 0
        %2068 = vmatprep.subr.bf16.mxu0 0
        %2069 = vmatpush1.bf16.xpose.msra.mxu0 0
        %2070 = vmatprep.subr.bf16.mxu0 0
        %2071 = vmatpush1.bf16.xpose.msra.mxu0 0
        %2072 = vmatprep.subr.bf16.mxu0 0
        %2073 = vmatpush1.bf16.xpose.msra.mxu0 0
        %2074 = vmatprep.subr.bf16.mxu0 0
        %2075 = vmatpush1.bf16.xpose.msra.mxu0 0
        %2076 = vmatprep.subr.bf16.mxu0 0
        %2077 = vmatpush1.bf16.xpose.msra.mxu0 0
        %2078 = vmatprep.subr.bf16.mxu0 0
        %2079 = vmatpush1.bf16.xpose.msra.mxu0 0
        %2080 = vmatprep.subr.bf16.mxu0 0
        %2081 = vmatpush1.bf16.xpose.msra.mxu0 0
        %2082 = vmatprep.subr.bf16.mxu0 0
        %2083 = vmatpush1.bf16.xpose.msra.mxu0 0
        %2084 = vmatprep.subr.bf16.mxu0 0
        %2085 = vmatpush1.bf16.xpose.msra.mxu0 0
        %2086 = vmatprep.subr.bf16.mxu0 0
        %2087 = vmatpush1.bf16.xpose.msra.mxu0 0
        %2088 = vmatprep.subr.bf16.mxu0 0
        %2089 = vmatpush1.bf16.xpose.msra.mxu0 0
        %2090 = vmatprep.mubr.bf16.mxu0 0
        %2091 = vmatmul.mubr.bf16.gmra.mrb[0].mxu0 %v2053
        %v2092 = vpop.f32.mrb[0].mxu0
        %v2093 = vadd.f32 0.0, %v2092
        %v2094 = vpop.f32.mrb[0].mxu0
        %v2095 = vpop.f32.mrb[0].mxu0
        %v2096 = vpop.f32.mrb[0].mxu0
        %2097 = vdwg.mxu0
        %v2099 = vsel %vm1631, %v2049, 0
        %v2102 = vsel %vm1631, %v2051, 0
        %2104 = vmatprep.subr.bf16.mxu0 0
        %2105 = vmatpush1.bf16.xpose.msra.mxu0 %v2102
        %2106 = vmatprep.subr.bf16.mxu0 0
        %2107 = vmatpush1.bf16.xpose.msra.mxu0 0
        %2108 = vmatprep.subr.bf16.mxu0 0
        %2109 = vmatpush1.bf16.xpose.msra.mxu0 0
        %2110 = vmatprep.subr.bf16.mxu0 0
        %2111 = vmatpush1.bf16.xpose.msra.mxu0 0
        %2112 = vmatprep.subr.bf16.mxu0 0
        %2113 = vmatpush1.bf16.xpose.msra.mxu0 0
        %2114 = vmatprep.subr.bf16.mxu0 0
        %2115 = vmatpush1.bf16.xpose.msra.mxu0 0
        %2116 = vmatprep.subr.bf16.mxu0 0
        %2117 = vmatpush1.bf16.xpose.msra.mxu0 0
        %2118 = vmatprep.subr.bf16.mxu0 0
        %2119 = vmatpush1.bf16.xpose.msra.mxu0 0
        %2120 = vmatprep.subr.bf16.mxu0 0
        %2121 = vmatpush1.bf16.xpose.msra.mxu0 0
        %2122 = vmatprep.subr.bf16.mxu0 0
        %2123 = vmatpush1.bf16.xpose.msra.mxu0 0
        %2124 = vmatprep.subr.bf16.mxu0 0
        %2125 = vmatpush1.bf16.xpose.msra.mxu0 0
        %2126 = vmatprep.subr.bf16.mxu0 0
        %2127 = vmatpush1.bf16.xpose.msra.mxu0 0
        %2128 = vmatprep.subr.bf16.mxu0 0
        %2129 = vmatpush1.bf16.xpose.msra.mxu0 0
        %2130 = vmatprep.subr.bf16.mxu0 0
        %2131 = vmatpush1.bf16.xpose.msra.mxu0 0
        %2132 = vmatprep.subr.bf16.mxu0 0
        %2133 = vmatpush1.bf16.xpose.msra.mxu0 0
        %2134 = vmatprep.subr.bf16.mxu0 0
        %2135 = vmatpush1.bf16.xpose.msra.mxu0 0
        %2136 = vmatprep.mubr.bf16.mxu0 0
        %2137 = vmatmul.mubr.bf16.gmra.mrb[0].mxu0 %v2099
        %v2138 = vpop.f32.mrb[0].mxu0
        %v2139 = vadd.f32 0.0, %v2138
        %v2140 = vpop.f32.mrb[0].mxu0
        %v2141 = vpop.f32.mrb[0].mxu0
        %v2142 = vpop.f32.mrb[0].mxu0
        %2143 = vdwg.mxu0
        %v2144 = vsel %vm1631, %v2093, -inf
        %2145 = vmax.xlane.f32.xlu0 %v2144
        %v2146 = vpop.xlane.xlu0 %2145
        %v2147 = vsel %vm1631, %v2139, -inf
        %2148 = vmax.xlane.f32.xlu0 %v2147
        %v2149 = vpop.xlane.xlu0 %2148
        %v2150 = vsub.f32 %v2093, %v2146
        %v2151 = vsub.f32 %v2139, %v2149
        %v2152 = vmul.f32 %v2150, 1.442695
        %v2153 = vpow.pop %v2152
        %v2154 = vmul.f32 %v2151, 1.442695
        %v2155 = vpow.pop %v2154
        %v2156 = vsel %vm1631, %v2153, 0.0
        %2157 = vadd.xlane.f32.xlu0 %v2156
        %v2158 = vpop.xlane.xlu0 %2157
        %v2159 = vsel %vm1631, %v2155, 0.0
        %2160 = vadd.xlane.f32.xlu0 %v2159
        %v2161 = vpop.xlane.xlu0 %2160
        %v2162 = vrcp.pop %v2158
        %v2163 = vrcp.pop %v2161
        %v2164 = vmul.f32 %v2153, %v2162
        %v2165 = vmul.f32 %v2155, %v2163
        %v2166 = vpack.c.bf16 %v2164, %v2164
        %v2167 = vpack.c.bf16 %v2165, %v2165
        %v2168 = vpack.c.bf16 %v2042, %v2042
        %v2169 = vpack.c.bf16 %v2045, %v2045
        %v2171 = vsel %vm1631, %v2166, 0
        %v2174 = vsel %vm1753, %v2168, 0
        %2176 = vmatprep.subr.bf16.mxu0 0
        %2177 = vmatpush1.bf16.msra.mxu0 %v2174
        %2178 = vmatprep.subr.bf16.mxu0 0
        %2179 = vmatpush1.bf16.msra.mxu0 0
        %2180 = vmatprep.subr.bf16.mxu0 0
        %2181 = vmatpush1.bf16.msra.mxu0 0
        %2182 = vmatprep.subr.bf16.mxu0 0
        %2183 = vmatpush1.bf16.msra.mxu0 0
        %2184 = vmatprep.subr.bf16.mxu0 0
        %2185 = vmatpush1.bf16.msra.mxu0 0
        %2186 = vmatprep.subr.bf16.mxu0 0
        %2187 = vmatpush1.bf16.msra.mxu0 0
        %2188 = vmatprep.subr.bf16.mxu0 0
        %2189 = vmatpush1.bf16.msra.mxu0 0
        %2190 = vmatprep.subr.bf16.mxu0 0
        %2191 = vmatpush1.bf16.msra.mxu0 0
        %2192 = vmatprep.subr.bf16.mxu0 0
        %2193 = vmatpush1.bf16.msra.mxu0 0
        %2194 = vmatprep.subr.bf16.mxu0 0
        %2195 = vmatpush1.bf16.msra.mxu0 0
        %2196 = vmatprep.subr.bf16.mxu0 0
        %2197 = vmatpush1.bf16.msra.mxu0 0
        %2198 = vmatprep.subr.bf16.mxu0 0
        %2199 = vmatpush1.bf16.msra.mxu0 0
        %2200 = vmatprep.subr.bf16.mxu0 0
        %2201 = vmatpush1.bf16.msra.mxu0 0
        %2202 = vmatprep.subr.bf16.mxu0 0
        %2203 = vmatpush1.bf16.msra.mxu0 0
        %2204 = vmatprep.subr.bf16.mxu0 0
        %2205 = vmatpush1.bf16.msra.mxu0 0
        %2206 = vmatprep.subr.bf16.mxu0 0
        %2207 = vmatpush1.bf16.msra.mxu0 0
        %2208 = vmatprep.mubr.bf16.mxu0 0
        %2209 = vmatmul.mubr.bf16.gmra.mrb[0].mxu0 %v2171
        %v2210 = vpop.f32.mrb[0].mxu0
        %v2211 = vadd.f32 0.0, %v2210
        %v2212 = vpop.f32.mrb[0].mxu0
        %v2213 = vpop.f32.mrb[0].mxu0
        %v2214 = vpop.f32.mrb[0].mxu0
        %2215 = vdwg.mxu0
        %v2217 = vsel %vm1631, %v2167, 0
        %v2220 = vsel %vm1753, %v2169, 0
        %2222 = vmatprep.subr.bf16.mxu0 0
        %2223 = vmatpush1.bf16.msra.mxu0 %v2220
        %2224 = vmatprep.subr.bf16.mxu0 0
        %2225 = vmatpush1.bf16.msra.mxu0 0
        %2226 = vmatprep.subr.bf16.mxu0 0
        %2227 = vmatpush1.bf16.msra.mxu0 0
        %2228 = vmatprep.subr.bf16.mxu0 0
        %2229 = vmatpush1.bf16.msra.mxu0 0
        %2230 = vmatprep.subr.bf16.mxu0 0
        %2231 = vmatpush1.bf16.msra.mxu0 0
        %2232 = vmatprep.subr.bf16.mxu0 0
        %2233 = vmatpush1.bf16.msra.mxu0 0
        %2234 = vmatprep.subr.bf16.mxu0 0
        %2235 = vmatpush1.bf16.msra.mxu0 0
        %2236 = vmatprep.subr.bf16.mxu0 0
        %2237 = vmatpush1.bf16.msra.mxu0 0
        %2238 = vmatprep.subr.bf16.mxu0 0
        %2239 = vmatpush1.bf16.msra.mxu0 0
        %2240 = vmatprep.subr.bf16.mxu0 0
        %2241 = vmatpush1.bf16.msra.mxu0 0
        %2242 = vmatprep.subr.bf16.mxu0 0
        %2243 = vmatpush1.bf16.msra.mxu0 0
        %2244 = vmatprep.subr.bf16.mxu0 0
        %2245 = vmatpush1.bf16.msra.mxu0 0
        %2246 = vmatprep.subr.bf16.mxu0 0
        %2247 = vmatpush1.bf16.msra.mxu0 0
        %2248 = vmatprep.subr.bf16.mxu0 0
        %2249 = vmatpush1.bf16.msra.mxu0 0
        %2250 = vmatprep.subr.bf16.mxu0 0
        %2251 = vmatpush1.bf16.msra.mxu0 0
        %2252 = vmatprep.subr.bf16.mxu0 0
        %2253 = vmatpush1.bf16.msra.mxu0 0
        %2254 = vmatprep.mubr.bf16.mxu0 0
        %2255 = vmatmul.mubr.bf16.gmra.mrb[0].mxu0 %v2217
        %v2256 = vpop.f32.mrb[0].mxu0
        %v2257 = vadd.f32 0.0, %v2256
        %v2258 = vpop.f32.mrb[0].mxu0
        %v2259 = vpop.f32.mrb[0].mxu0
        %v2260 = vpop.f32.mrb[0].mxu0
        %2261 = vdwg.mxu0
        %v2262 = vpack.c.bf16 %v2257, %v2211
        %s2263 = scalar_lea.vmem %s1162, 16 [#allocation18]
        %v2264 = vld [vmem:[%s2263] sm:$0xf]
        %v2265 = vld [vmem:[%s2263 + $0x4] sm:$0xf]
        %v2266 = vld [vmem:[%s2263 + $0x8] sm:$0xf]
        %v2267 = vld [vmem:[%s2263 + $0xc] sm:$0xf]
        %v2272 = vunpack.c.l.b16 %v2264
        %v2273 = vunpack.c.l.b16 %v2265
        %v2274 = vunpack.c.l.b16 %v2266
        %v2275 = vunpack.c.l.b16 %v2267
        %v2276 = vpack.c.b16 %v2273, %v2272
        %v2277 = vpack.c.b16 %v2275, %v2274
        %v2281 = vsel %vm1385, %v2262, 0
        %2283 = vmatprep.subr.bf16.mxu0 0
        %2284 = vmatpush1.bf16.msra.mxu0 %v2276
        %2285 = vmatprep.subr.bf16.mxu0 0
        %2286 = vmatpush1.bf16.msra.mxu0 %v2277
        %2287 = vmatprep.subr.bf16.mxu0 0
        %2288 = vmatpush1.bf16.msra.mxu0 0
        %2289 = vmatprep.subr.bf16.mxu0 0
        %2290 = vmatpush1.bf16.msra.mxu0 0
        %2291 = vmatprep.subr.bf16.mxu0 0
        %2292 = vmatpush1.bf16.msra.mxu0 0
        %2293 = vmatprep.subr.bf16.mxu0 0
        %2294 = vmatpush1.bf16.msra.mxu0 0
        %2295 = vmatprep.subr.bf16.mxu0 0
        %2296 = vmatpush1.bf16.msra.mxu0 0
        %2297 = vmatprep.subr.bf16.mxu0 0
        %2298 = vmatpush1.bf16.msra.mxu0 0
        %2299 = vmatprep.subr.bf16.mxu0 0
        %2300 = vmatpush1.bf16.msra.mxu0 0
        %2301 = vmatprep.subr.bf16.mxu0 0
        %2302 = vmatpush1.bf16.msra.mxu0 0
        %2303 = vmatprep.subr.bf16.mxu0 0
        %2304 = vmatpush1.bf16.msra.mxu0 0
        %2305 = vmatprep.subr.bf16.mxu0 0
        %2306 = vmatpush1.bf16.msra.mxu0 0
        %2307 = vmatprep.subr.bf16.mxu0 0
        %2308 = vmatpush1.bf16.msra.mxu0 0
        %2309 = vmatprep.subr.bf16.mxu0 0
        %2310 = vmatpush1.bf16.msra.mxu0 0
        %2311 = vmatprep.subr.bf16.mxu0 0
        %2312 = vmatpush1.bf16.msra.mxu0 0
        %2313 = vmatprep.subr.bf16.mxu0 0
        %2314 = vmatpush1.bf16.msra.mxu0 0
        %2315 = vmatprep.mubr.bf16.mxu0 0
        %2316 = vmatmul.mubr.bf16.gmra.mrb[0].mxu0 %v2281
        %v2317 = vpop.f32.mrb[0].mxu0
        %v2318 = vadd.f32 0.0, %v2317
        %v2319 = vpop.f32.mrb[0].mxu0
        %v2320 = vpop.f32.mrb[0].mxu0
        %v2321 = vadd.f32 0.0, %v2320
        %v2322 = vpop.f32.mrb[0].mxu0
        %2323 = vdwg.mxu0
        %v2328 = vunpack.c.l.b16 %v1844
        %v2329 = vunpack.c.l.b16 %v1845
        %v2330 = vunpack.c.l.b16 %v1846
        %v2331 = vunpack.c.l.b16 %v1847
        %v2332 = vpack.c.b16 %v2329, %v2328
        %v2333 = vpack.c.b16 %v2331, %v2330
        %v2337 = vsel %vm1385, %v1843, 0
        %2339 = vmatprep.subr.bf16.mxu0 0
        %2340 = vmatpush1.bf16.msra.mxu0 %v2332
        %2341 = vmatprep.subr.bf16.mxu0 0
        %2342 = vmatpush1.bf16.msra.mxu0 %v2333
        %2343 = vmatprep.subr.bf16.mxu0 0
        %2344 = vmatpush1.bf16.msra.mxu0 0
        %2345 = vmatprep.subr.bf16.mxu0 0
        %2346 = vmatpush1.bf16.msra.mxu0 0
        %2347 = vmatprep.subr.bf16.mxu0 0
        %2348 = vmatpush1.bf16.msra.mxu0 0
        %2349 = vmatprep.subr.bf16.mxu0 0
        %2350 = vmatpush1.bf16.msra.mxu0 0
        %2351 = vmatprep.subr.bf16.mxu0 0
        %2352 = vmatpush1.bf16.msra.mxu0 0
        %2353 = vmatprep.subr.bf16.mxu0 0
        %2354 = vmatpush1.bf16.msra.mxu0 0
        %2355 = vmatprep.subr.bf16.mxu0 0
        %2356 = vmatpush1.bf16.msra.mxu0 0
        %2357 = vmatprep.subr.bf16.mxu0 0
        %2358 = vmatpush1.bf16.msra.mxu0 0
        %2359 = vmatprep.subr.bf16.mxu0 0
        %2360 = vmatpush1.bf16.msra.mxu0 0
        %2361 = vmatprep.subr.bf16.mxu0 0
        %2362 = vmatpush1.bf16.msra.mxu0 0
        %2363 = vmatprep.subr.bf16.mxu0 0
        %2364 = vmatpush1.bf16.msra.mxu0 0
        %2365 = vmatprep.subr.bf16.mxu0 0
        %2366 = vmatpush1.bf16.msra.mxu0 0
        %2367 = vmatprep.subr.bf16.mxu0 0
        %2368 = vmatpush1.bf16.msra.mxu0 0
        %2369 = vmatprep.subr.bf16.mxu0 0
        %2370 = vmatpush1.bf16.msra.mxu0 0
        %2371 = vmatprep.mubr.bf16.mxu0 0
        %2372 = vmatmul.mubr.bf16.gmra.mrb[0].mxu0 %v2337
        %v2373 = vpop.f32.mrb[0].mxu0
        %v2374 = vadd.f32 %v2318, %v2373
        %v2375 = vpop.f32.mrb[0].mxu0
        %v2376 = vpop.f32.mrb[0].mxu0
        %v2377 = vadd.f32 %v2321, %v2376
        %v2378 = vpop.f32.mrb[0].mxu0
        %2379 = vdwg.mxu0
        %v2380 = vadd.f32 %v1381, %v2374
        %v2381 = vadd.f32 %v1382, %v2377
        %v2382 = vld [vmem:[%s1170] sm:$0x1]
        %v2384 = vlaneseq
        %v2385 = vshrl.u32 %v2384, 7
        %v2386 = vsub.s32 0, %v2385
        %v2387 = vrot.slane %v2382, %v2386
        %v2389 = vadd.f32 %v2380, %v2387
        %v2390 = vadd.f32 %v2381, %v2387
        %v2391 = vld [vmem:[%s1178] sm:$0x1]
        %v2392 = vld [vmem:[%s1186] sm:$0x1]
        %v2393 = vsel %vm1385, %v2389, 0.0
        %2394 = vadd.xlane.f32.xlu0 %v2393
        %v2395 = vpop.xlane.xlu0 %2394
        %v2396 = vsel %vm1385, %v2390, 0.0
        %2397 = vadd.xlane.f32.xlu0 %v2396
        %v2398 = vpop.xlane.xlu0 %2397
        %v2399 = vmul.f32 %v2395, %v1392
        %v2400 = vmul.f32 %v2398, %v1392
        %v2401 = vsub.f32 %v2389, %v2399
        %v2402 = vsub.f32 %v2390, %v2400
        %v2403 = vmul.f32 %v2401, %v2401
        %v2404 = vmul.f32 %v2402, %v2402
        %v2405 = vsel %vm1385, %v2403, 0.0
        %2406 = vadd.xlane.f32.xlu0 %v2405
        %v2407 = vpop.xlane.xlu0 %2406
        %v2408 = vsel %vm1385, %v2404, 0.0
        %2409 = vadd.xlane.f32.xlu0 %v2408
        %v2410 = vpop.xlane.xlu0 %2409
        %v2411 = vmul.f32 %v2407, %v1392
        %v2412 = vmul.f32 %v2410, %v1392
        %v2413 = vadd.f32 %v2411, 1e-05
        %v2414 = vadd.f32 %v2412, 1e-05
        %v2415 = vrsqrt.pop %v2413
        %v2416 = vrsqrt.pop %v2414
        %v2417 = vmul.f32 %v2401, %v2415
        %v2418 = vmul.f32 %v2402, %v2416
        %v2420 = vlaneseq
        %v2421 = vshrl.u32 %v2420, 7
        %v2422 = vsub.s32 0, %v2421
        %v2423 = vrot.slane %v2391, %v2422
        %v2425 = vmul.f32 %v2417, %v2423
        %v2426 = vmul.f32 %v2418, %v2423
        %v2428 = vlaneseq
        %v2429 = vshrl.u32 %v2428, 7
        %v2430 = vsub.s32 0, %v2429
        %v2431 = vrot.slane %v2392, %v2430
        %v2433 = vadd.f32 %v2425, %v2431
        %v2434 = vadd.f32 %v2426, %v2431
        %v2435 = vpack.c.bf16 %v2434, %v2433
        %v2436 = vld [vmem:[%s1195] sm:$0xf]
        %v2437 = vld [vmem:[%s1195 + $0x4] sm:$0xf]
        %v2438 = vld [vmem:[%s1195 + $0x8] sm:$0xf]
        %v2439 = vld [vmem:[%s1195 + $0xc] sm:$0xf]
        %v2440 = vld [vmem:[%s1203] sm:$0x1]
        %v2442 = vlaneseq
        %v2443 = vshrl.u32 %v2442, 7
        %v2444 = vsub.s32 0, %v2443
        %v2445 = vrot.slane %v2440, %v2444
        %v2451 = vunpack.c.l.b16 %v2436
        %v2452 = vunpack.c.l.b16 %v2437
        %v2453 = vunpack.c.l.b16 %v2438
        %v2454 = vunpack.c.l.b16 %v2439
        %v2455 = vpack.c.b16 %v2452, %v2451
        %v2456 = vpack.c.b16 %v2454, %v2453
        %v2460 = vsel %vm1385, %v2435, 0
        %2462 = vmatprep.subr.bf16.mxu0 0
        %2463 = vmatpush1.bf16.msra.mxu0 %v2455
        %2464 = vmatprep.subr.bf16.mxu0 0
        %2465 = vmatpush1.bf16.msra.mxu0 %v2456
        %2466 = vmatprep.subr.bf16.mxu0 0
        %2467 = vmatpush1.bf16.msra.mxu0 0
        %2468 = vmatprep.subr.bf16.mxu0 0
        %2469 = vmatpush1.bf16.msra.mxu0 0
        %2470 = vmatprep.subr.bf16.mxu0 0
        %2471 = vmatpush1.bf16.msra.mxu0 0
        %2472 = vmatprep.subr.bf16.mxu0 0
        %2473 = vmatpush1.bf16.msra.mxu0 0
        %2474 = vmatprep.subr.bf16.mxu0 0
        %2475 = vmatpush1.bf16.msra.mxu0 0
        %2476 = vmatprep.subr.bf16.mxu0 0
        %2477 = vmatpush1.bf16.msra.mxu0 0
        %2478 = vmatprep.subr.bf16.mxu0 0
        %2479 = vmatpush1.bf16.msra.mxu0 0
        %2480 = vmatprep.subr.bf16.mxu0 0
        %2481 = vmatpush1.bf16.msra.mxu0 0
        %2482 = vmatprep.subr.bf16.mxu0 0
        %2483 = vmatpush1.bf16.msra.mxu0 0
        %2484 = vmatprep.subr.bf16.mxu0 0
        %2485 = vmatpush1.bf16.msra.mxu0 0
        %2486 = vmatprep.subr.bf16.mxu0 0
        %2487 = vmatpush1.bf16.msra.mxu0 0
        %2488 = vmatprep.subr.bf16.mxu0 0
        %2489 = vmatpush1.bf16.msra.mxu0 0
        %2490 = vmatprep.subr.bf16.mxu0 0
        %2491 = vmatpush1.bf16.msra.mxu0 0
        %2492 = vmatprep.subr.bf16.mxu0 0
        %2493 = vmatpush1.bf16.msra.mxu0 0
        %2494 = vmatprep.mubr.bf16.mxu0 0
        %2495 = vmatmul.mubr.bf16.gmra.mrb[0].mxu0 %v2460
        %v2496 = vpop.f32.mrb[0].mxu0
        %v2497 = vadd.f32 %v2445, %v2496
        %v2498 = vpop.f32.mrb[0].mxu0
        %v2499 = vpop.f32.mrb[0].mxu0
        %v2500 = vadd.f32 %v2445, %v2499
        %v2501 = vpop.f32.mrb[0].mxu0
        %2502 = vdwg.mxu0
        %v2503 = vxor.u32 %v2497, 2147483648
        %v2504 = vxor.u32 %v2500, 2147483648
        %v2505 = vmul.f32 %v2503, 1.442695
        %v2506 = vpow.pop %v2505
        %v2507 = vmul.f32 %v2504, 1.442695
        %v2508 = vpow.pop %v2507
        %v2509 = vadd.f32 %v2506, 1.0
        %v2510 = vadd.f32 %v2508, 1.0
        %v2511 = vrcp.pop %v2509
        %v2512 = vmul.f32 1.0, %v2511
        %v2513 = vrcp.pop %v2510
        %v2514 = vmul.f32 1.0, %v2513
        %v2515 = vmul.f32 %v2497, %v2512
        %v2516 = vmul.f32 %v2500, %v2514
        %v2517 = vpack.c.bf16 %v2516, %v2515
        %v2518 = vld [vmem:[%s1212] sm:$0xf]
        %v2519 = vld [vmem:[%s1212 + $0x4] sm:$0xf]
        %v2520 = vld [vmem:[%s1212 + $0x8] sm:$0xf]
        %v2521 = vld [vmem:[%s1212 + $0xc] sm:$0xf]
        %v2522 = vld [vmem:[%s1212 + $0x10] sm:$0xf]
        %v2523 = vld [vmem:[%s1212 + $0x14] sm:$0xf]
        %v2524 = vld [vmem:[%s1212 + $0x18] sm:$0xf]
        %v2525 = vld [vmem:[%s1212 + $0x1c] sm:$0xf]
        %v2526 = vld [vmem:[%s1212 + $0x20] sm:$0xf]
        %v2527 = vld [vmem:[%s1212 + $0x24] sm:$0xf]
        %v2528 = vld [vmem:[%s1212 + $0x28] sm:$0xf]
        %v2529 = vld [vmem:[%s1212 + $0x2c] sm:$0xf]
        %v2530 = vld [vmem:[%s1212 + $0x30] sm:$0xf]
        %v2531 = vld [vmem:[%s1212 + $0x34] sm:$0xf]
        %v2532 = vld [vmem:[%s1212 + $0x38] sm:$0xf]
        %v2533 = vld [vmem:[%s1212 + $0x3c] sm:$0xf]
        %v2550 = vunpack.c.l.b16 %v2518
        %v2551 = vunpack.c.l.b16 %v2519
        %v2552 = vunpack.c.l.b16 %v2520
        %v2553 = vunpack.c.l.b16 %v2521
        %v2554 = vunpack.c.l.b16 %v2522
        %v2555 = vunpack.c.l.b16 %v2523
        %v2556 = vunpack.c.l.b16 %v2524
        %v2557 = vunpack.c.l.b16 %v2525
        %v2558 = vunpack.c.l.b16 %v2526
        %v2559 = vunpack.c.l.b16 %v2527
        %v2560 = vunpack.c.l.b16 %v2528
        %v2561 = vunpack.c.l.b16 %v2529
        %v2562 = vunpack.c.l.b16 %v2530
        %v2563 = vunpack.c.l.b16 %v2531
        %v2564 = vunpack.c.l.b16 %v2532
        %v2565 = vunpack.c.l.b16 %v2533
        %v2566 = vpack.c.b16 %v2551, %v2550
        %v2567 = vpack.c.b16 %v2553, %v2552
        %v2568 = vpack.c.b16 %v2555, %v2554
        %v2569 = vpack.c.b16 %v2557, %v2556
        %v2570 = vpack.c.b16 %v2559, %v2558
        %v2571 = vpack.c.b16 %v2561, %v2560
        %v2572 = vpack.c.b16 %v2563, %v2562
        %v2573 = vpack.c.b16 %v2565, %v2564
        %2582 = vmatprep.subr.bf16.mxu0 0
        %2583 = vmatpush1.bf16.msra.mxu0 %v2566
        %2584 = vmatprep.subr.bf16.mxu0 0
        %2585 = vmatpush1.bf16.msra.mxu0 %v2567
        %2586 = vmatprep.subr.bf16.mxu0 0
        %2587 = vmatpush1.bf16.msra.mxu0 %v2568
        %2588 = vmatprep.subr.bf16.mxu0 0
        %2589 = vmatpush1.bf16.msra.mxu0 %v2569
        %2590 = vmatprep.subr.bf16.mxu0 0
        %2591 = vmatpush1.bf16.msra.mxu0 %v2570
        %2592 = vmatprep.subr.bf16.mxu0 0
        %2593 = vmatpush1.bf16.msra.mxu0 %v2571
        %2594 = vmatprep.subr.bf16.mxu0 0
        %2595 = vmatpush1.bf16.msra.mxu0 %v2572
        %2596 = vmatprep.subr.bf16.mxu0 0
        %2597 = vmatpush1.bf16.msra.mxu0 %v2573
        %2598 = vmatprep.subr.bf16.mxu0 0
        %2599 = vmatpush1.bf16.msra.mxu0 0
        %2600 = vmatprep.subr.bf16.mxu0 0
        %2601 = vmatpush1.bf16.msra.mxu0 0
        %2602 = vmatprep.subr.bf16.mxu0 0
        %2603 = vmatpush1.bf16.msra.mxu0 0
        %2604 = vmatprep.subr.bf16.mxu0 0
        %2605 = vmatpush1.bf16.msra.mxu0 0
        %2606 = vmatprep.subr.bf16.mxu0 0
        %2607 = vmatpush1.bf16.msra.mxu0 0
        %2608 = vmatprep.subr.bf16.mxu0 0
        %2609 = vmatpush1.bf16.msra.mxu0 0
        %2610 = vmatprep.subr.bf16.mxu0 0
        %2611 = vmatpush1.bf16.msra.mxu0 0
        %2612 = vmatprep.subr.bf16.mxu0 0
        %2613 = vmatpush1.bf16.msra.mxu0 0
        %2614 = vmatprep.mubr.bf16.mxu0 0
        %2615 = vmatmul.mubr.bf16.gmra.mrb[0].mxu0 %v2517
        %v2616 = vpop.f32.mrb[0].mxu0
        %v2617 = vadd.f32 0.0, %v2616
        %v2618 = vpop.f32.mrb[0].mxu0
        %v2619 = vpop.f32.mrb[0].mxu0
        %v2620 = vadd.f32 0.0, %v2619
        %v2621 = vpop.f32.mrb[0].mxu0
        %2622 = vdwg.mxu0
        %v2623 = vadd.f32 %v2389, %v2617
        %v2624 = vadd.f32 %v2390, %v2620
        %v2625 = vld [vmem:[%s1220] sm:$0x1]
        %v2627 = vlaneseq
        %v2628 = vshrl.u32 %v2627, 7
        %v2629 = vsub.s32 0, %v2628
        %v2630 = vrot.slane %v2625, %v2629
        %v2632 = vadd.f32 %v2623, %v2630
        %v2633 = vadd.f32 %v2624, %v2630
        %2634 = vst.msk [vmem:[#allocation2] sm:$0xff] %vm1385, %v2632
        %2635 = vst.msk [vmem:[#allocation2 + $0x8] sm:$0xff] %vm1385, %v2633
        %p2636 = scmp.eq.s32.totalorder %s68, 1
        // Predicated region
        $region209: #{tpu_custom_call.1} parent=111 // pred_check
          %p2637 = pneg %p2636
        $region210: #{tpu_custom_call.1} parent=111 // pred_check_branch
          %2639 = sbr.rel (%p2637) target = $region212
        $region211: #{tpu_custom_call.1} parent=111 // pred_region
          %v2640 = vld [vmem:[#allocation30] sm:$0x1]
          %v2641 = vld [vmem:[#allocation32] sm:$0x1]
          %v2642 = vsel %vm1385, %v2632, 0.0
          %2643 = vadd.xlane.f32.xlu0 %v2642
          %v2644 = vpop.xlane.xlu0 %2643
          %v2645 = vsel %vm1385, %v2633, 0.0
          %2646 = vadd.xlane.f32.xlu0 %v2645
          %v2647 = vpop.xlane.xlu0 %2646
          %v2648 = vmul.f32 %v2644, %v1392
          %v2649 = vmul.f32 %v2647, %v1392
          %v2650 = vsub.f32 %v2632, %v2648
          %v2651 = vsub.f32 %v2633, %v2649
          %v2652 = vmul.f32 %v2650, %v2650
          %v2653 = vmul.f32 %v2651, %v2651
          %v2654 = vsel %vm1385, %v2652, 0.0
          %2655 = vadd.xlane.f32.xlu0 %v2654
          %v2656 = vpop.xlane.xlu0 %2655
          %v2657 = vsel %vm1385, %v2653, 0.0
          %2658 = vadd.xlane.f32.xlu0 %v2657
          %v2659 = vpop.xlane.xlu0 %2658
          %v2660 = vmul.f32 %v2656, %v1392
          %v2661 = vmul.f32 %v2659, %v1392
          %v2662 = vadd.f32 %v2660, 1e-05
          %v2663 = vadd.f32 %v2661, 1e-05
          %v2664 = vrsqrt.pop %v2662
          %v2665 = vrsqrt.pop %v2663
          %v2666 = vmul.f32 %v2650, %v2664
          %v2667 = vmul.f32 %v2651, %v2665
          %v2669 = vlaneseq
          %v2670 = vshrl.u32 %v2669, 7
          %v2671 = vsub.s32 0, %v2670
          %v2672 = vrot.slane %v2640, %v2671
          %v2674 = vmul.f32 %v2666, %v2672
          %v2675 = vmul.f32 %v2667, %v2672
          %v2677 = vlaneseq
          %v2678 = vshrl.u32 %v2677, 7
          %v2679 = vsub.s32 0, %v2678
          %v2680 = vrot.slane %v2641, %v2679
          %v2682 = vadd.f32 %v2674, %v2680
          %v2683 = vadd.f32 %v2675, %v2680
          %v2684 = vsel %vm1385, %v2682, 0.0
          %v2685 = vrot.slane %v2684, 4
          %v2686 = vadd.f32 %v2684, %v2685
          %v2687 = vrot.slane %v2686, 2
          %v2688 = vadd.f32 %v2686, %v2687
          %v2689 = vrot.slane %v2688, 1
          %v2690 = vadd.f32 %v2688, %v2689
          %v2691 = vsel %vm1385, %v2683, 0.0
          %v2692 = vrot.slane %v2691, 4
          %v2693 = vadd.f32 %v2691, %v2692
          %v2694 = vrot.slane %v2693, 2
          %v2695 = vadd.f32 %v2693, %v2694
          %v2696 = vrot.slane %v2695, 1
          %v2697 = vadd.f32 %v2695, %v2696
          %v2698 = vrcp.pop 8.0
          %v2699 = vmul.f32 %v2690, %v2698
          %v2700 = vmul.f32 %v2697, %v2698
          %v2701 = vld [vmem:[#allocation33] sm:$0xff]
          %v2702 = vld [vmem:[#allocation33 + $0x8] sm:$0xff]
          %v2703 = vld [vmem:[#allocation33 + $0x10] sm:$0xff]
          %v2704 = vld [vmem:[#allocation33 + $0x18] sm:$0xff]
          %v2705 = vld [vmem:[#allocation35] sm:$0x1]
          %v2707 = vlaneseq
          %v2708 = vshrl.u32 %v2707, 7
          %v2709 = vsub.s32 0, %v2708
          %v2710 = vrot.slane %v2705, %v2709
          %vm2714 = vcmask 1041409
          %v2715 = vsel %vm2714, %v2700, %v2699
          %v2716 = vsel %vm1385, %v2715, 0
          %2718 = vmatprep.subr.mxu0 0.0
          %2719 = vmatpush1.msra.mxu0 %v2701
          %2720 = vmatprep.subr.mxu0 0.0
          %2721 = vmatpush1.msra.mxu0 %v2702
          %2722 = vmatprep.subr.mxu0 0.0
          %2723 = vmatpush1.msra.mxu0 %v2703
          %2724 = vmatprep.subr.mxu0 0.0
          %2725 = vmatpush1.msra.mxu0 %v2704
          %2726 = vmatprep.subr.mxu0 0.0
          %2727 = vmatpush1.msra.mxu0 0.0
          %2728 = vmatprep.subr.mxu0 0.0
          %2729 = vmatpush1.msra.mxu0 0.0
          %2730 = vmatprep.subr.mxu0 0.0
          %2731 = vmatpush1.msra.mxu0 0.0
          %2732 = vmatprep.subr.mxu0 0.0
          %2733 = vmatpush1.msra.mxu0 0.0
          %2734 = vmatprep.subr.mxu0 0.0
          %2735 = vmatpush1.msra.mxu0 0.0
          %2736 = vmatprep.subr.mxu0 0.0
          %2737 = vmatpush1.msra.mxu0 0.0
          %2738 = vmatprep.subr.mxu0 0.0
          %2739 = vmatpush1.msra.mxu0 0.0
          %2740 = vmatprep.subr.mxu0 0.0
          %2741 = vmatpush1.msra.mxu0 0.0
          %2742 = vmatprep.subr.mxu0 0.0
          %2743 = vmatpush1.msra.mxu0 0.0
          %2744 = vmatprep.subr.mxu0 0.0
          %2745 = vmatpush1.msra.mxu0 0.0
          %2746 = vmatprep.subr.mxu0 0.0
          %2747 = vmatpush1.msra.mxu0 0.0
          %2748 = vmatprep.subr.mxu0 0.0
          %2749 = vmatpush1.msra.mxu0 0.0
          %2750 = vmatprep.subr.mxu0 0.0
          %2751 = vmatpush1.msra.mxu0 0.0
          %2752 = vmatprep.subr.mxu0 0.0
          %2753 = vmatpush1.msra.mxu0 0.0
          %2754 = vmatprep.subr.mxu0 0.0
          %2755 = vmatpush1.msra.mxu0 0.0
          %2756 = vmatprep.subr.mxu0 0.0
          %2757 = vmatpush1.msra.mxu0 0.0
          %2758 = vmatprep.subr.mxu0 0.0
          %2759 = vmatpush1.msra.mxu0 0.0
          %2760 = vmatprep.subr.mxu0 0.0
          %2761 = vmatpush1.msra.mxu0 0.0
          %2762 = vmatprep.subr.mxu0 0.0
          %2763 = vmatpush1.msra.mxu0 0.0
          %2764 = vmatprep.subr.mxu0 0.0
          %2765 = vmatpush1.msra.mxu0 0.0
          %2766 = vmatprep.subr.mxu0 0.0
          %2767 = vmatpush1.msra.mxu0 0.0
          %2768 = vmatprep.subr.mxu0 0.0
          %2769 = vmatpush1.msra.mxu0 0.0
          %2770 = vmatprep.subr.mxu0 0.0
          %2771 = vmatpush1.msra.mxu0 0.0
          %2772 = vmatprep.subr.mxu0 0.0
          %2773 = vmatpush1.msra.mxu0 0.0
          %2774 = vmatprep.subr.mxu0 0.0
          %2775 = vmatpush1.msra.mxu0 0.0
          %2776 = vmatprep.subr.mxu0 0.0
          %2777 = vmatpush1.msra.mxu0 0.0
          %2778 = vmatprep.subr.mxu0 0.0
          %2779 = vmatpush1.msra.mxu0 0.0
          %2780 = vmatprep.subr.mxu0 0.0
          %2781 = vmatpush1.msra.mxu0 0.0
          %2782 = vmatprep.mubr.f32.mxu0 0.0
          %2783 = vmatmul.mubr.f32.gmra.mrb[0].mxu0 %v2716
          %v2784 = vpop.f32.mrb[0].mxu0
          %v2785 = vadd.f32 %v2710, %v2784
          %v2786 = vpop.f32.mrb[0].mxu0
          %2787 = vdwg.mxu0
          %v2788 = vxor.u32 %v2785, 2147483648
          %v2789 = vmul.f32 %v2788, 1.442695
          %v2790 = vpow.pop %v2789
          %v2791 = vadd.f32 %v2790, 1.0
          %v2792 = vrcp.pop %v2791
          %v2793 = vmul.f32 1.0, %v2792
          %v2794 = vmul.f32 %v2785, %v2793
          %v2795 = vld [vmem:[#allocation36] sm:$0xff]
          %v2796 = vld [vmem:[#allocation36 + $0x8] sm:$0xff]
          %v2797 = vld [vmem:[#allocation36 + $0x10] sm:$0xff]
          %v2798 = vld [vmem:[#allocation36 + $0x18] sm:$0xff]
          %v2799 = vld [vmem:[#allocation38] sm:$0x1]
          %v2801 = vlaneseq
          %v2802 = vshrl.u32 %v2801, 7
          %v2803 = vsub.s32 0, %v2802
          %v2804 = vrot.slane %v2799, %v2803
          %v2807 = vsel %vm1385, %v2794, 0
          %2809 = vmatprep.subr.mxu0 0.0
          %2810 = vmatpush1.msra.mxu0 %v2795
          %2811 = vmatprep.subr.mxu0 0.0
          %2812 = vmatpush1.msra.mxu0 %v2796
          %2813 = vmatprep.subr.mxu0 0.0
          %2814 = vmatpush1.msra.mxu0 %v2797
          %2815 = vmatprep.subr.mxu0 0.0
          %2816 = vmatpush1.msra.mxu0 %v2798
          %2817 = vmatprep.subr.mxu0 0.0
          %2818 = vmatpush1.msra.mxu0 0.0
          %2819 = vmatprep.subr.mxu0 0.0
          %2820 = vmatpush1.msra.mxu0 0.0
          %2821 = vmatprep.subr.mxu0 0.0
          %2822 = vmatpush1.msra.mxu0 0.0
          %2823 = vmatprep.subr.mxu0 0.0
          %2824 = vmatpush1.msra.mxu0 0.0
          %2825 = vmatprep.subr.mxu0 0.0
          %2826 = vmatpush1.msra.mxu0 0.0
          %2827 = vmatprep.subr.mxu0 0.0
          %2828 = vmatpush1.msra.mxu0 0.0
          %2829 = vmatprep.subr.mxu0 0.0
          %2830 = vmatpush1.msra.mxu0 0.0
          %2831 = vmatprep.subr.mxu0 0.0
          %2832 = vmatpush1.msra.mxu0 0.0
          %2833 = vmatprep.subr.mxu0 0.0
          %2834 = vmatpush1.msra.mxu0 0.0
          %2835 = vmatprep.subr.mxu0 0.0
          %2836 = vmatpush1.msra.mxu0 0.0
          %2837 = vmatprep.subr.mxu0 0.0
          %2838 = vmatpush1.msra.mxu0 0.0
          %2839 = vmatprep.subr.mxu0 0.0
          %2840 = vmatpush1.msra.mxu0 0.0
          %2841 = vmatprep.subr.mxu0 0.0
          %2842 = vmatpush1.msra.mxu0 0.0
          %2843 = vmatprep.subr.mxu0 0.0
          %2844 = vmatpush1.msra.mxu0 0.0
          %2845 = vmatprep.subr.mxu0 0.0
          %2846 = vmatpush1.msra.mxu0 0.0
          %2847 = vmatprep.subr.mxu0 0.0
          %2848 = vmatpush1.msra.mxu0 0.0
          %2849 = vmatprep.subr.mxu0 0.0
          %2850 = vmatpush1.msra.mxu0 0.0
          %2851 = vmatprep.subr.mxu0 0.0
          %2852 = vmatpush1.msra.mxu0 0.0
          %2853 = vmatprep.subr.mxu0 0.0
          %2854 = vmatpush1.msra.mxu0 0.0
          %2855 = vmatprep.subr.mxu0 0.0
          %2856 = vmatpush1.msra.mxu0 0.0
          %2857 = vmatprep.subr.mxu0 0.0
          %2858 = vmatpush1.msra.mxu0 0.0
          %2859 = vmatprep.subr.mxu0 0.0
          %2860 = vmatpush1.msra.mxu0 0.0
          %2861 = vmatprep.subr.mxu0 0.0
          %2862 = vmatpush1.msra.mxu0 0.0
          %2863 = vmatprep.subr.mxu0 0.0
          %2864 = vmatpush1.msra.mxu0 0.0
          %2865 = vmatprep.subr.mxu0 0.0
          %2866 = vmatpush1.msra.mxu0 0.0
          %2867 = vmatprep.subr.mxu0 0.0
          %2868 = vmatpush1.msra.mxu0 0.0
          %2869 = vmatprep.subr.mxu0 0.0
          %2870 = vmatpush1.msra.mxu0 0.0
          %2871 = vmatprep.subr.mxu0 0.0
          %2872 = vmatpush1.msra.mxu0 0.0
          %2873 = vmatprep.mubr.f32.mxu0 0.0
          %2874 = vmatmul.mubr.f32.gmra.mrb[0].mxu0 %v2807
          %v2875 = vpop.f32.mrb[0].mxu0
          %v2876 = vadd.f32 %v2804, %v2875
          %v2877 = vpop.f32.mrb[0].mxu0
          %2878 = vdwg.mxu0
          %2879 = vst [vmem:[#allocation39] sm:$0x3] %v2876
        $region212: #{tpu_custom_call.1} parent=111 // pred_fallthru
          _
        // Predicated region
        $region213: #{tpu_custom_call.1} parent=111 // pred_check
          %p2880 = pneg %p661
        $region214: #{tpu_custom_call.1} parent=111 // pred_check_branch
          %2882 = sbr.rel (%p2880) target = $region216
        $region215: #{tpu_custom_call.1} parent=111 // pred_region
          %s2884 = ssub.s32 32, 32
          %2885 = vsyncadd [#allocation5], %s2884
          %s2886 = smul.addr %s67, 32
          %s2887 = scalar_lea.hbm %s23, %s2886
          %s2889 = sshll.u32 [#allocation39], 4
          %s2890 = int_to_ptr.vmem [resolvable:$true] %s2889
          %2892 = dma.vmem_to_hbm [thread:$0]  %s2890, 32, %s2887, [#allocation5]
        $region216: #{tpu_custom_call.1} parent=111 // pred_fallthru
          _
        // Predicated region
        $region217: #{tpu_custom_call.1} parent=111 // pred_check
          %p2893 = pneg %p661
        $region218: #{tpu_custom_call.1} parent=111 // pred_check_branch
          %2895 = sbr.rel (%p2893) target = $region220
        $region219: #{tpu_custom_call.1} parent=111 // pred_region
          %2896 = dma.done [#allocation5], 32
        $region220: #{tpu_custom_call.1} parent=111 // pred_fallthru
          _
      $region112: #{tpu_custom_call.1} parent=5 // pred_fallthru
        _
      %p2897 = scmp.le.s32.totalorder 2, %s58
      // Predicated region
      $region221: #{tpu_custom_call.1} parent=5 // pred_check
        %p2898 = pneg %p2897
      $region222: #{tpu_custom_call.1} parent=5 // pred_check_branch
        %2900 = sbr.rel (%p2898) target = $region224
      $region223: #{tpu_custom_call.1} parent=5 // pred_region
        %s2901 = ssub.s32 %s58, 2
      $region224: #{tpu_custom_call.1} parent=5 // pred_fallthru
        _
    $region6: #{tpu_custom_call.1} parent=1 // loop_footer
      %s62 = sadd.s32 1, %s58
    $region7: #{tpu_custom_call.1} parent=1 // loop_footer_branch
      %57 = sbr.rel target = $region3
    $region8: #{tpu_custom_call.1} parent=1 // loop_exit
      _
    %2902 = vsyncpa [#allocation4], 1
    %s2903 = scalar_lea.sflag [#allocation4], 1
    %2904 = vsyncpa %s2903, 1
    %2905 = vsyncpa [#allocation7], 1
    %s2906 = scalar_lea.sflag [#allocation7], 1
    %2907 = vsyncpa %s2906, 1
    %2908 = vsyncpa [#allocation10], 1
    %s2909 = scalar_lea.sflag [#allocation10], 1
    %2910 = vsyncpa %s2909, 1
    %2911 = vsyncpa [#allocation13], 1
    %s2912 = scalar_lea.sflag [#allocation13], 1
    %2913 = vsyncpa %s2912, 1
    %2914 = vsyncpa [#allocation16], 1
    %s2915 = scalar_lea.sflag [#allocation16], 1
    %2916 = vsyncpa %s2915, 1
    %2917 = vsyncpa [#allocation19], 1
    %s2918 = scalar_lea.sflag [#allocation19], 1
    %2919 = vsyncpa %s2918, 1
    %2920 = vsyncpa [#allocation22], 1
    %s2921 = scalar_lea.sflag [#allocation22], 1
    %2922 = vsyncpa %s2921, 1
    %2923 = vsyncpa [#allocation25], 1
    %s2924 = scalar_lea.sflag [#allocation25], 1
    %2925 = vsyncpa %s2924, 1
    %2926 = vsyncpa [#allocation28], 1
    %s2927 = scalar_lea.sflag [#allocation28], 1
    %2928 = vsyncpa %s2927, 1
    %2929 = vsyncpa [#allocation31], 1
    %2930 = vsyncpa [#allocation34], 1
    %2931 = vsyncpa [#allocation37], 1
    %2932 = vsyncpa [#allocation5], 1
    %s2933 = scalar_lea.sflag [#allocation5], 1
    %2934 = vsyncpa %s2933, 1

</llo_original>
